<compile_context>
chip_gen: v7x
topology: tpu7x:2x2x1
jax: 0.10.0
libtpu: 0.0.40
codegen_flags: <defaults>
</compile_context>

<pallas_src>
import functools

import jax
import jax.numpy as jnp
from jax.experimental import pallas as pl
from jax.experimental.pallas import tpu as pltpu


VMEM_LIMIT = 48 * 1024 * 1024  # fits v5e/v6e (128 MiB) and v7x (64 MiB) VMEM
LEAKY_SLOPE = 0.1              # matches nn.LeakyReLU(negative_slope=0.1)


def _round_up(x, m):
    return (x + m - 1) // m * m


# ---------------------------------------------------------------------------
# Generic fused matmul kernel:  out = act(x @ w + b)
#   * bf16 operands, f32 accumulation directly into the resident output block.
# ---------------------------------------------------------------------------
def _mm_kernel(x_ref, w_ref, b_ref, o_ref, *, activation):
    k = pl.program_id(2)

    @pl.when(k == 0)
    def _():
        o_ref[...] = jnp.zeros_like(o_ref)

    o_ref[...] += jnp.dot(x_ref[...], w_ref[...],
                          preferred_element_type=jnp.float32)

    @pl.when(k == pl.num_programs(2) - 1)
    def _():
        y = o_ref[...] + b_ref[...]
        if activation == "leaky":
            y = jnp.where(y >= 0.0, y, LEAKY_SLOPE * y)
        elif activation == "sigmoid":
            y = jax.nn.sigmoid(y)
        o_ref[...] = y


def _pick_tk(K):
    if K <= 2048:
        return K                       # single K step, no padding
    for cand in (2048, 1792, 1536, 1280, 1152, 1024, 896, 768, 640, 576,
                 512, 384, 256, 128):
        if K % cand == 0:
            return cand
    return 512                          # fall back to padding


def _pick_tn(N):
    if N <= 512:
        return N                        # full N, no padding
    for cand in (512, 256, 128):
        if N % cand == 0:
            return cand
    return 256                          # pad N up to a multiple of 256


def fused_matmul(x, w, b, activation, *, tm=None, tn=None, tk=None):
    """act(x @ w + b);  x:(M,K)  w:(K,N) bf16  b:(N,) f32  ->  (M,N) f32."""
    M, K = x.shape
    N = w.shape[1]
    if tn is None:
        tn = _pick_tn(N)
    if tk is None:
        tk = _pick_tk(K)
    if tm is None:
        if N <= 64 and K <= 512:        # e.g. conv1: tiny weight tile -> big M tile
            tm = min(1024, _round_up(M, 8))
        else:
            tm = min(256, _round_up(M, 8))

    Mp, Kp, Np = _round_up(M, tm), _round_up(K, tk), _round_up(N, tn)

    xb = x.astype(jnp.bfloat16)
    xp = xb if (Mp, Kp) == (M, K) else jnp.pad(xb, ((0, Mp - M), (0, Kp - K)))
    wb = w.astype(jnp.bfloat16)
    wp = wb if (Kp, Np) == (K, N) else jnp.pad(wb, ((0, Kp - K), (0, Np - N)))
    bp = (b if Np == N else jnp.pad(b, (0, Np - N)))
    bp = bp.astype(jnp.float32).reshape(1, Np)

    out = pl.pallas_call(
        functools.partial(_mm_kernel, activation=activation),
        out_shape=jax.ShapeDtypeStruct((Mp, Np), jnp.float32),
        grid_spec=pltpu.PrefetchScalarGridSpec(
            num_scalar_prefetch=0,
            grid=(Mp // tm, Np // tn, Kp // tk),
            in_specs=[
                pl.BlockSpec((tm, tk), lambda i, j, k: (i, k)),
                pl.BlockSpec((tk, tn), lambda i, j, k: (k, j)),
                pl.BlockSpec((1, tn), lambda i, j, k: (0, j)),
            ],
            out_specs=pl.BlockSpec((tm, tn), lambda i, j, k: (i, j)),
        ),
        compiler_params=pltpu.CompilerParams(
            dimension_semantics=("parallel", "parallel", "arbitrary"),
            vmem_limit_bytes=VMEM_LIMIT),
    )(xp, wp, bp)
    return out[:M, :N]


# ---------------------------------------------------------------------------
# Direct 3x3 / stride-1 / pad-1 conv kernel (no HBM im2col).
# The padded NHWC image is flattened to (rows=(H+3)*(W+2), Cin); each of the 9
# taps is a shifted contiguous row-slice of that buffer feeding one MXU dot.
# The output keeps the padded width (W+2); garbage columns are sliced off in
# the wrapper.
# ---------------------------------------------------------------------------
def _conv3x3_kernel(x_ref, w_ref, b_ref, o_ref, *, h, wp):
    m2 = h * wp
    acc = jnp.zeros(o_ref.shape[1:], jnp.float32)        # (m2, tn)
    for t in range(9):
        di, dj = t // 3, t % 3
        s = di * wp + dj
        lhs = x_ref[0, s:s + m2, :]                       # (m2, Cin) bf16
        acc = acc + jnp.dot(lhs, w_ref[t],
                            preferred_element_type=jnp.float32)
    y = acc + b_ref[...]
    y = jnp.where(y >= 0.0, y, LEAKY_SLOPE * y)
    o_ref[0] = y


def conv3x3_s1(x, wmat, b):
    """x:(N,H,W,Cin) f32, wmat:(9,Cin,Cout) bf16, b:(Cout,) f32 -> (N,H,W,Cout)."""
    n, h, w, cin = x.shape
    cout = wmat.shape[-1]
    wp = w + 2
    m2 = h * wp
    f = (h + 3) * wp

    # Single pad (rows (1,2), cols (1,1)) + free reshape; cast to bf16 here so
    # the kernel streams half the bytes.
    xp = jnp.pad(x.astype(jnp.bfloat16), ((0, 0), (1, 2), (1, 1), (0, 0)))
    xp = xp.reshape(n, f, cin)

    tn = cout if cout <= 256 else 256
    if m2 * tn * 4 > 8 * 1024 * 1024:     # keep the output block <= 8 MiB
        tn = 128
    coutp = _round_up(cout, tn)
    wq = wmat if coutp == cout else jnp.pad(wmat, ((0, 0), (0, 0),
                                                   (0, coutp - cout)))
    bq = (b if coutp == cout else jnp.pad(b, (0, coutp - cout)))
    bq = bq.astype(jnp.float32).reshape(1, coutp)

    out = pl.pallas_call(
        functools.partial(_conv3x3_kernel, h=h, wp=wp),
        out_shape=jax.ShapeDtypeStruct((n, m2, coutp), jnp.float32),
        grid_spec=pltpu.PrefetchScalarGridSpec(
            num_scalar_prefetch=0,
            grid=(n, coutp // tn),
            in_specs=[
                pl.BlockSpec((1, f, cin), lambda bi, j: (bi, 0, 0)),
                pl.BlockSpec((9, cin, tn), lambda bi, j: (0, 0, j)),
                pl.BlockSpec((1, tn), lambda bi, j: (0, j)),
            ],
            out_specs=pl.BlockSpec((1, m2, tn), lambda bi, j: (bi, 0, j)),
        ),
        compiler_params=pltpu.CompilerParams(
            dimension_semantics=("parallel", "parallel"),
            vmem_limit_bytes=VMEM_LIMIT),
    )(xp, wq, bq)

    out = out.reshape(n, h, wp, coutp)[:, :, :w, :cout]
    return out


# ---------------------------------------------------------------------------
# MaxPool 2x2 / stride 2: raw NHWC blocks, window reduced inside the kernel.
# The wrapper reshape (N,H,W,C)->(N,Ho,2,Wo,2C) is a free dimension split.
# ---------------------------------------------------------------------------
def _maxpool_kernel(x_ref, o_ref):
    c = o_ref.shape[-1]
    x = x_ref[...]                                   # (1, TH, 2, Wo, 2C)
    v = jnp.maximum(x[:, :, 0, :, :], x[:, :, 1, :, :])   # vertical pair
    o_ref[...] = jnp.maximum(v[..., :c], v[..., c:])       # horizontal pair


def maxpool2x2(x):
    n, h, w, c = x.shape
    ho, wo = h // 2, w // 2
    xr = x.reshape(n, ho, 2, wo, 2 * c)              # free (no transpose)

    th = 1
    for cand in (32, 28, 16, 14, 8, 7, 4, 2, 1):
        if ho % cand == 0:
            th = cand
            break

    out = pl.pallas_call(
        _maxpool_kernel,
        out_shape=jax.ShapeDtypeStruct((n, ho, wo, c), jnp.float32),
        grid_spec=pltpu.PrefetchScalarGridSpec(
            num_scalar_prefetch=0,
            grid=(n, ho // th),
            in_specs=[pl.BlockSpec((1, th, 2, wo, 2 * c),
                                   lambda bi, i: (bi, i, 0, 0, 0))],
            out_specs=pl.BlockSpec((1, th, wo, c),
                                   lambda bi, i: (bi, i, 0, 0)),
        ),
        compiler_params=pltpu.CompilerParams(
            dimension_semantics=("parallel", "parallel"),
            vmem_limit_bytes=VMEM_LIMIT),
    )(xr)
    return out


# ---------------------------------------------------------------------------
# Strided convs (conv1 7x7/s2, conv22 3x3/s2): im2col + fused matmul.
# ---------------------------------------------------------------------------
def conv_im2col(x, wmat, b, *, k, stride, padding):
    n, h, wd, cin = x.shape
    cout = wmat.shape[1]
    xb = x.astype(jnp.bfloat16)
    xp = jnp.pad(xb, ((0, 0), (padding, padding), (padding, padding), (0, 0)))
    ho = (h + 2 * padding - k) // stride + 1
    wo = (wd + 2 * padding - k) // stride + 1
    cols = [xp[:, i:i + stride * ho:stride, j:j + stride * wo:stride, :]
            for i in range(k) for j in range(k)]
    cols = jnp.concatenate(cols, axis=-1).reshape(n * ho * wo, k * k * cin)
    y = fused_matmul(cols, wmat, b, "leaky")
    return y.reshape(n, ho, wo, cout)


def conv_layer(x, cfg, w, b):
    cin, cout, k, s, p = cfg
    if k == 1 and s == 1 and p == 0:
        n, h, wd, _ = x.shape                       # 1x1 conv: pure matmul
        y = fused_matmul(x.reshape(n * h * wd, cin), w, b, "leaky")
        return y.reshape(n, h, wd, cout)
    if k == 3 and s == 1 and p == 1:
        return conv3x3_s1(x, w, b)                  # direct conv kernel
    return conv_im2col(x, w, b, k=k, stride=s, padding=p)


# ---------------------------------------------------------------------------
# Darknet (YOLOv1 backbone) definition
# ---------------------------------------------------------------------------
CONV_CFG = [
    # (cin, cout, k, stride, pad)
    (3, 64, 7, 2, 3),       # conv1
    (64, 192, 3, 1, 1),     # conv2
    (192, 128, 1, 1, 0),    # conv3
    (128, 256, 3, 1, 1),    # conv4
    (256, 256, 1, 1, 0),    # conv5
    (256, 512, 3, 1, 1),    # conv6
    (512, 256, 1, 1, 0),    # conv7
    (256, 512, 3, 1, 1),    # conv8
    (512, 256, 1, 1, 0),    # conv9
    (256, 512, 3, 1, 1),    # conv10
    (512, 256, 1, 1, 0),    # conv11
    (256, 512, 3, 1, 1),    # conv12
    (512, 256, 1, 1, 0),    # conv13
    (256, 512, 3, 1, 1),    # conv14
    (512, 512, 1, 1, 0),    # conv15
    (512, 1024, 3, 1, 1),   # conv16
    (1024, 512, 1, 1, 0),   # conv17
    (512, 1024, 3, 1, 1),   # conv18
    (1024, 512, 1, 1, 0),   # conv19
    (512, 1024, 3, 1, 1),   # conv20
    (1024, 1024, 3, 1, 1),  # conv21
    (1024, 1024, 3, 2, 1),  # conv22
    (1024, 1024, 1, 1, 0),  # conv23
    (1024, 1024, 3, 1, 1),  # conv24
]
POOL_AFTER = {0, 1, 5, 15}  # maxpool after conv1, conv2, conv6, conv16


def init_params(key, image_size=448):
    """At image_size=448 this matches the PyTorch spec exactly
    (fc1: 7*7*1024 -> 4096). Smaller multiples of 64 shrink only fc1's
    in-features (used for the fast smoke test)."""
    assert image_size % 64 == 0
    convs = []
    for (cin, cout, k, _, _) in CONV_CFG:
        key, sub = jax.random.split(key)
        fan_in = k * k * cin
        w = jax.random.normal(sub, (k, k, cin, cout), jnp.float32)
        w = w * (2.0 / fan_in) ** 0.5
        b = jnp.full((cout,), 0.01, jnp.float32)
        if k == 3:
            cfg = [c for c in CONV_CFG if c[0] == cin and c[1] == cout and c[2] == k]
        # storage layout depends on which kernel consumes the weight
        stride_one_3x3 = (k == 3)
        # conv22 is 3x3 but strided -> flat im2col weight
        convs.append((w, b))
    # Re-pack weights into kernel-ready layouts (bf16).
    packed = []
    for (cin, cout, k, s, p), (w, b) in zip(CONV_CFG, convs):
        if k == 3 and s == 1:
            wq = w.reshape(9, cin, cout).astype(jnp.bfloat16)
        else:
            wq = w.reshape(k * k * cin, cout).astype(jnp.bfloat16)
        packed.append((wq, b))

    s_final = image_size // 64
    fc1_in = s_final * s_final * 1024
    key, k1, k2 = jax.random.split(key, 3)
    w1 = jax.random.normal(k1, (fc1_in, 4096), jnp.float32)
    w1 = (w1 * (1.0 / fc1_in) ** 0.5).astype(jnp.bfloat16)
    b1 = jnp.zeros((4096,), jnp.float32)
    w2 = jax.random.normal(k2, (4096, 7 * 7 * 30), jnp.float32)
    w2 = (w2 * (1.0 / 4096) ** 0.5).astype(jnp.bfloat16)
    b2 = jnp.zeros((7 * 7 * 30,), jnp.float32)
    return {"convs": packed, "fc1": (w1, b1), "fc2": (w2, b2)}


def darknet_forward(x_nchw, params):
    x = jnp.transpose(x_nchw, (0, 2, 3, 1)).astype(jnp.float32)  # NCHW -> NHWC
    for li, (cfg, (w, b)) in enumerate(zip(CONV_CFG, params["convs"])):
        x = conv_layer(x, cfg, w, b)
        if li in POOL_AFTER:
            x = maxpool2x2(x)
    n = x.shape[0]
    # match torch's x.view(N, -1) on NCHW data
    x = jnp.transpose(x, (0, 3, 1, 2)).reshape(n, -1)
    w1, b1 = params["fc1"]
    x = fused_matmul(x, w1, b1, "sigmoid")   # fc1 + sigmoid
    w2, b2 = params["fc2"]
    x = fused_matmul(x, w2, b2, "sigmoid")   # fc2 + sigmoid
    return x.reshape(n, 7, 7, 30)


if __name__ == "__main__":
    key = jax.random.PRNGKey(0)
    pkey, xkey = jax.random.split(key)
    # Small smoke-test resolution so the script (incl. interpret-mode checks)
    # finishes quickly; the spec resolution is 448 (=> fc1 in = 7*7*1024).
    IMG = 64
    params = init_params(pkey, image_size=IMG)
    x = jax.random.normal(xkey, (2, 3, IMG, IMG), jnp.float32)  # NCHW like torch
    out = darknet_forward(x, params)
    out = jax.block_until_ready(out)
    assert out.shape == (2, 7, 7, 30), out.shape
    assert bool(jnp.all(jnp.isfinite(out)))
    print("KERNEL_OK")
</pallas_src>

<mosaic_0001>
module attributes {stable_mosaic.version = 11 : i64} {
  func.func @_mm_kernel(%arg0: i32, %arg1: i32, %arg2: i32, %arg3: memref<1024x147xbf16, #tpu.memory_space<vmem>>, %arg4: memref<147x64xbf16, #tpu.memory_space<vmem>>, %arg5: memref<1x64xf32, #tpu.memory_space<vmem>>, %arg6: memref<1024x64xf32, #tpu.memory_space<vmem>>) attributes {dimension_semantics = [#tpu.dimension_semantics<parallel>, #tpu.dimension_semantics<parallel>, #tpu.dimension_semantics<arbitrary>], iteration_bounds = array<i64: 2, 1, 1>, scalar_prefetch = 0 : i64, scratch_operands = 0 : i64, tpu.core_type = #tpu.core_type<tc>, window_params = [{transform_indices = @transform_0, window_bounds = array<i64: 1024, 147>}, {transform_indices = @transform_1, window_bounds = array<i64: 147, 64>}, {transform_indices = @transform_2, window_bounds = array<i64: 1, 64>}, {transform_indices = @transform_3, window_bounds = array<i64: 1024, 64>}]} {
    %c0_i32 = arith.constant 0 : i32
    %0 = arith.cmpi eq, %arg2, %c0_i32 : i32
    %1 = arith.extui %0 : i1 to i32
    %c0_i32_0 = arith.constant 0 : i32
    %2 = arith.cmpi ne, %1, %c0_i32_0 : i32
    scf.if %2 {
      %cst_10 = arith.constant 0.000000e+00 : f32
      %12 = vector.broadcast %cst_10 : f32 to vector<1024x64xf32>
      %c0_11 = arith.constant 0 : index
      %c0_12 = arith.constant 0 : index
      %13 = vector.load %arg6[%c0_11, %c0_12] : memref<1024x64xf32, #tpu.memory_space<vmem>>, vector<1024x64xf32>
      tpu.vector_store %arg6[%c0_11, %c0_12], %12 {strides = array<i32>} : memref<1024x64xf32, #tpu.memory_space<vmem>>, vector<1024x64xf32>,
    } else {
    }
    %c0 = arith.constant 0 : index
    %c0_1 = arith.constant 0 : index
    %3 = vector.load %arg6[%c0, %c0_1] : memref<1024x64xf32, #tpu.memory_space<vmem>>, vector<1024x64xf32>
    %c0_2 = arith.constant 0 : index
    %c0_3 = arith.constant 0 : index
    %4 = vector.load %arg3[%c0_2, %c0_3] : memref<1024x147xbf16, #tpu.memory_space<vmem>>, vector<1024x147xbf16>
    %c0_4 = arith.constant 0 : index
    %c0_5 = arith.constant 0 : index
    %5 = vector.load %arg4[%c0_4, %c0_5] : memref<147x64xbf16, #tpu.memory_space<vmem>>, vector<147x64xbf16>
    %cst = arith.constant dense<0.000000e+00> : vector<1024x64xf32>
    %6 = tpu.matmul %4, %5, %cst {dimension_numbers = #tpu.dot_dimension_numbers<[1], [0], [0], [1], [0, 0, 1, 1], [], []>} : vector<1024x147xbf16>, vector<147x64xbf16>, vector<1024x64xf32> -> vector<1024x64xf32>
    %7 = arith.addf %3, %6 : vector<1024x64xf32>
    %c0_6 = arith.constant 0 : index
    %c0_7 = arith.constant 0 : index
    %8 = vector.load %arg6[%c0_6, %c0_7] : memref<1024x64xf32, #tpu.memory_space<vmem>>, vector<1024x64xf32>
    tpu.vector_store %arg6[%c0_6, %c0_7], %7 {strides = array<i32>} : memref<1024x64xf32, #tpu.memory_space<vmem>>, vector<1024x64xf32>,
    %c0_i32_8 = arith.constant 0 : i32
    %9 = arith.cmpi eq, %arg2, %c0_i32_8 : i32
    %10 = arith.extui %9 : i1 to i32
    %c0_i32_9 = arith.constant 0 : i32
    %11 = arith.cmpi ne, %10, %c0_i32_9 : i32
    scf.if %11 {
      %c0_10 = arith.constant 0 : index
      %c0_11 = arith.constant 0 : index
      %12 = vector.load %arg6[%c0_10, %c0_11] : memref<1024x64xf32, #tpu.memory_space<vmem>>, vector<1024x64xf32>
      %c0_12 = arith.constant 0 : index
      %c0_13 = arith.constant 0 : index
      %13 = vector.load %arg5[%c0_12, %c0_13] : memref<1x64xf32, #tpu.memory_space<vmem>>, vector<1x64xf32>
      %14 = vector.broadcast %13 : vector<1x64xf32> to vector<1024x64xf32>
      %15 = arith.addf %12, %14 : vector<1024x64xf32>
      %cst_14 = arith.constant 0.000000e+00 : f32
      %16 = vector.broadcast %cst_14 : f32 to vector<1024x64xf32>
      %17 = arith.cmpf oge, %15, %16 : vector<1024x64xf32>
      %cst_15 = arith.constant 1.000000e-01 : f32
      %18 = vector.broadcast %cst_15 : f32 to vector<1024x64xf32>
      %19 = arith.mulf %18, %15 : vector<1024x64xf32>
      %20 = arith.select %17, %15, %19 : vector<1024x64xi1>, vector<1024x64xf32>
      %c0_16 = arith.constant 0 : index
      %c0_17 = arith.constant 0 : index
      %21 = vector.load %arg6[%c0_16, %c0_17] : memref<1024x64xf32, #tpu.memory_space<vmem>>, vector<1024x64xf32>
      tpu.vector_store %arg6[%c0_16, %c0_17], %20 {strides = array<i32>} : memref<1024x64xf32, #tpu.memory_space<vmem>>, vector<1024x64xf32>,
    } else {
    }
    return
  }
  func.func @transform_0(%arg0: i32, %arg1: i32, %arg2: i32) -> (i32, i32) {
    %c0_i32 = arith.constant 0 : i32
    return %arg0, %arg2 : i32, i32
  }
  func.func @transform_1(%arg0: i32, %arg1: i32, %arg2: i32) -> (i32, i32) {
    %c0_i32 = arith.constant 0 : i32
    return %arg2, %arg1 : i32, i32
  }
  func.func @transform_2(%arg0: i32, %arg1: i32, %arg2: i32) -> (i32, i32) {
    %c0_i32 = arith.constant 0 : i32
    %c0_i32_0 = arith.constant 0 : i32
    return %c0_i32, %arg1 : i32, i32
  }
  func.func @transform_3(%arg0: i32, %arg1: i32, %arg2: i32) -> (i32, i32) {
    %c0_i32 = arith.constant 0 : i32
    return %arg0, %arg1 : i32, i32
  }
}

</mosaic_0001>

<llo_original>
// kernel: tpu_custom_call.1
$region0: #{tpu_custom_call.1}
  #allocation0 [shape = 'u32[]', space=smem, size = 0x4, offset = 0x4, fixed_abs, tag = 'smem constant byte address 0x4 - core index']
  #allocation1 [shape = 'u32[144,128]{1,0:T(1,128)}', space=vmem, size = 0x12000, scoped, tag = 'internal scratch']
  %s0 = inlined_call_operand.vmem [shape: bf16[2048,147], index: 0, kind: input, shape index: {}]
  %s1 = inlined_call_operand.vmem [shape: bf16[147,64], index: 1, kind: input, shape index: {}]
  %s2 = inlined_call_operand.vmem [shape: f32[1,64], index: 2, kind: input, shape index: {}]
  %s3 = inlined_call_operand.vmem [shape: f32[2048,64], index: 3, kind: output, shape index: {}]
  %s4 = sld [smem:[#allocation0]]
  $region53: #{tpu_custom_call.1} parent=0
    _
  %s6 = ssub.s32 1, %s4
  %s7 = scalar_select 0, %s6, %s4
  loop: start=0, step=1, limit=4
  $region2: #{tpu_custom_call.1} parent=0 // loop_pre_header
    _
  $region3: #{tpu_custom_call.1} parent=0 // loop_header
    %s9 = sphi 0, %s13
    %p10 = scmp.ge.s32.totalorder %s9, 4
    %s16 = sphi 0, %s35
    %s17 = sphi 0, %s31
    %s18 = sphi 0, %s27
    %s19 = sphi 0, %s16
    %s20 = sphi 0, %s17
    %s21 = sphi 0, %s18
    %s22 = sphi 0, %s19
    %s23 = sphi 0, %s20
    %s24 = sphi 0, %s21
    %s40 = sphi 0, %s42
    %s43 = sphi 0, %s40
    %s44 = sphi 0, %s43
    %s60 = sphi 0, %s44
    %s68 = sphi 0, %s70
    %s71 = sphi 0, %s68
    %s72 = sphi 0, %s71
    %s88 = sphi 0, %s72
    %s94 = sphi 0, %s96
    %s97 = sphi 0, %s94
    %s98 = sphi 0, %s97
    %s114 = sphi 0, %s98
    %s122 = sphi 0, %s124
    %s125 = sphi 0, %s122
    %s126 = sphi 0, %s125
    %s142 = sphi 0, %s126
  $region4: #{tpu_custom_call.1} parent=0 // loop_header_branch
    %12 = sbr.rel (%p10) target = $region8
  $region5: #{tpu_custom_call.1} parent=0 // loop_body
    %s14 = ssub.s32 %s9, 1
    %s15 = ssub.s32 %s9, 2
    %s25 = sadd.s32 1, %s18
    %p26 = scmp.ge.s32.totalorder %s25, 1
    %s27 = scalar_select %p26, 0, %s25
    %s28 = sadd.s32 1, %s17
    %s29 = scalar_select %p26, %s28, %s17
    %p30 = scmp.ge.s32.totalorder %s29, 1
    %s31 = scalar_select %p30, 0, %s29
    %s32 = sadd.s32 1, %s16
    %s33 = scalar_select %p30, %s32, %s16
    %p34 = scmp.ge.s32.totalorder %s33, 2
    %s35 = scalar_select %p34, 0, %s33
    %s36 = ssub.s32 %s16, %s35
    %s37 = ssub.s32 %s18, %s27
    %s38 = sor.u32 %s36, %s37
    %p39 = scmp.eq.s32.totalorder %s38, 0
    %s41 = sadd.s32 %s40, 1
    %s42 = scalar_select %p39, %s40, %s41
    %p45 = pneg %p39
    %p46 = scmp.eq.s32.totalorder %s9, 1
    %p47 = por %p45, %p46
    %p48 = scmp.ne.s32.totalorder %s40, %s43
    %p49 = scmp.eq.s32.totalorder %s9, 0
    %p50 = por %p48, %p49
    %p51 = scmp.ne.s32.totalorder %s40, %s43
    %p52 = scmp.eq.s32.totalorder %s14, 1
    %p53 = por %p51, %p52
    %p54 = scmp.ne.s32.totalorder %s43, %s44
    %p55 = scmp.eq.s32.totalorder %s14, 0
    %p56 = por %p54, %p55
    %p57 = scmp.ne.s32.totalorder %s43, %s44
    %p58 = scmp.eq.s32.totalorder %s15, 1
    %p59 = por %p57, %p58
    %p61 = scmp.ne.s32.totalorder %s44, %s60
    %p62 = scmp.eq.s32.totalorder %s15, 0
    %p63 = por %p61, %p62
    %s64 = ssub.s32 %s18, %s27
    %s65 = ssub.s32 %s17, %s31
    %s66 = sor.u32 %s64, %s65
    %p67 = scmp.eq.s32.totalorder %s66, 0
    %s69 = sadd.s32 %s68, 1
    %s70 = scalar_select %p67, %s68, %s69
    %p73 = pneg %p67
    %p74 = scmp.eq.s32.totalorder %s9, 1
    %p75 = por %p73, %p74
    %p76 = scmp.ne.s32.totalorder %s68, %s71
    %p77 = scmp.eq.s32.totalorder %s9, 0
    %p78 = por %p76, %p77
    %p79 = scmp.ne.s32.totalorder %s68, %s71
    %p80 = scmp.eq.s32.totalorder %s14, 1
    %p81 = por %p79, %p80
    %p82 = scmp.ne.s32.totalorder %s71, %s72
    %p83 = scmp.eq.s32.totalorder %s14, 0
    %p84 = por %p82, %p83
    %p85 = scmp.ne.s32.totalorder %s71, %s72
    %p86 = scmp.eq.s32.totalorder %s15, 1
    %p87 = por %p85, %p86
    %p89 = scmp.ne.s32.totalorder %s72, %s88
    %p90 = scmp.eq.s32.totalorder %s15, 0
    %p91 = por %p89, %p90
    %s92 = ssub.s32 %s17, %s31
    %p93 = scmp.eq.s32.totalorder %s92, 0
    %s95 = sadd.s32 %s94, 1
    %s96 = scalar_select %p93, %s94, %s95
    %p99 = pneg %p93
    %p100 = scmp.eq.s32.totalorder %s9, 1
    %p101 = por %p99, %p100
    %p102 = scmp.ne.s32.totalorder %s94, %s97
    %p103 = scmp.eq.s32.totalorder %s9, 0
    %p104 = por %p102, %p103
    %p105 = scmp.ne.s32.totalorder %s94, %s97
    %p106 = scmp.eq.s32.totalorder %s14, 1
    %p107 = por %p105, %p106
    %p108 = scmp.ne.s32.totalorder %s97, %s98
    %p109 = scmp.eq.s32.totalorder %s14, 0
    %p110 = por %p108, %p109
    %p111 = scmp.ne.s32.totalorder %s97, %s98
    %p112 = scmp.eq.s32.totalorder %s15, 1
    %p113 = por %p111, %p112
    %p115 = scmp.ne.s32.totalorder %s98, %s114
    %p116 = scmp.eq.s32.totalorder %s15, 0
    %p117 = por %p115, %p116
    %s118 = ssub.s32 %s16, %s35
    %s119 = ssub.s32 %s17, %s31
    %s120 = sor.u32 %s118, %s119
    %p121 = scmp.eq.s32.totalorder %s120, 0
    %s123 = sadd.s32 %s122, 1
    %s124 = scalar_select %p121, %s122, %s123
    %p127 = pneg %p121
    %p128 = scmp.eq.s32.totalorder %s9, 1
    %p129 = por %p127, %p128
    %p130 = scmp.ne.s32.totalorder %s122, %s125
    %p131 = scmp.eq.s32.totalorder %s9, 0
    %p132 = por %p130, %p131
    %p133 = scmp.ne.s32.totalorder %s122, %s125
    %p134 = scmp.eq.s32.totalorder %s14, 1
    %p135 = por %p133, %p134
    %p136 = scmp.ne.s32.totalorder %s125, %s126
    %p137 = scmp.eq.s32.totalorder %s14, 0
    %p138 = por %p136, %p137
    %p139 = scmp.ne.s32.totalorder %s125, %s126
    %p140 = scmp.eq.s32.totalorder %s15, 1
    %p141 = por %p139, %p140
    %p143 = scmp.ne.s32.totalorder %s126, %s142
    %p144 = scmp.eq.s32.totalorder %s15, 0
    %p145 = por %p143, %p144
    %p146 = scmp.le.s32.totalorder 1, %s9
    %p147 = scmp.lt.s32.totalorder %s9, 3
    %p148 = pnand %p146, %p147
    %p149 = pneg %p148
    // Predicated region
    $region9: #{tpu_custom_call.1} parent=5 // pred_check
      _
    $region10: #{tpu_custom_call.1} parent=5 // pred_check_branch
      %151 = sbr.rel (%p148) target = $region12
    $region11: #{tpu_custom_call.1} parent=5 // pred_region
      %s152 = ssub.s32 %s9, 1
      // Predicated region
      $region13: #{tpu_custom_call.1} parent=11 // pred_check
        %p153 = pneg %p84
      $region14: #{tpu_custom_call.1} parent=11 // pred_check_branch
        %155 = sbr.rel (%p153) target = $region16
      $region15: #{tpu_custom_call.1} parent=11 // pred_region
        %s156 = smul.u32 19, %s21
        %p157 = scmp.lt.s32.totalorder %s156, 18
        %s158 = scalar_select %p157, %s156, 18
        %p159 = scmp.lt.s32.totalorder %s20, 0
        %s160 = scalar_select %p159, %s20, 0
        %s161 = sadd.s32 %s160, %s158
        %s162 = smul.addr %s161, 4
        %s163 = scalar_lea.vmem %s1, %s162
        %s164 = smul.u32 19, %s21
      $region16: #{tpu_custom_call.1} parent=11 // pred_fallthru
        _
      // Predicated region
      $region17: #{tpu_custom_call.1} parent=11 // pred_check
        %p165 = pneg %p110
      $region18: #{tpu_custom_call.1} parent=11 // pred_check_branch
        %167 = sbr.rel (%p165) target = $region20
      $region19: #{tpu_custom_call.1} parent=11 // pred_region
        %p168 = scmp.lt.s32.totalorder %s20, 0
        %s169 = scalar_select %p168, %s20, 0
        %s170 = scalar_lea.vmem %s2, %s169
      $region20: #{tpu_custom_call.1} parent=11 // pred_fallthru
        _
    $region12: #{tpu_custom_call.1} parent=5 // pred_fallthru
      _
    %p171 = scmp.lt.s32.totalorder %s9, 2
    // Predicated region
    $region21: #{tpu_custom_call.1} parent=5 // pred_check
      %p172 = pneg %p171
    $region22: #{tpu_custom_call.1} parent=5 // pred_check_branch
      %174 = sbr.rel (%p172) target = $region24
    $region23: #{tpu_custom_call.1} parent=5 // pred_region
      // Predicated region
      $region25: #{tpu_custom_call.1} parent=23 // pred_check
        %p175 = pneg %p50
      $region26: #{tpu_custom_call.1} parent=23 // pred_check_branch
        %177 = sbr.rel (%p175) target = $region28
      $region27: #{tpu_custom_call.1} parent=23 // pred_region
        %s178 = smul.u32 128, %s16
        %s179 = smul.u32 2, %s18
        %p180 = scmp.lt.s32.totalorder %s178, 255
        %s181 = scalar_select %p180, %s178, 255
        %p182 = scmp.lt.s32.totalorder %s179, 1
        %s183 = scalar_select %p182, %s179, 1
        %s184 = smul.addr %s181, 2
        %s185 = sadd.s32 %s183, %s184
        %s186 = smul.addr %s185, 4
        %s187 = scalar_lea.vmem %s0, %s186
        %s188 = smul.u32 128, %s16
        %s189 = smul.u32 2, %s18
      $region28: #{tpu_custom_call.1} parent=23 // pred_fallthru
        _
    $region24: #{tpu_custom_call.1} parent=5 // pred_fallthru
      _
    %p190 = scmp.le.s32.totalorder 1, %s9
    %p191 = scmp.lt.s32.totalorder %s9, 3
    %p192 = pnand %p190, %p191
    %p193 = pneg %p192
    // Predicated region
    $region29: #{tpu_custom_call.1} parent=5 // pred_check
      _
    $region30: #{tpu_custom_call.1} parent=5 // pred_check_branch
      %195 = sbr.rel (%p192) target = $region32
    $region31: #{tpu_custom_call.1} parent=5 // pred_region
      %s196 = ssub.s32 %s9, 1
      %s197 = smul.u32 128, %s19
      %s198 = smul.u32 2, %s21
      %p199 = scmp.lt.s32.totalorder %s197, 255
      %s200 = scalar_select %p199, %s197, 255
      %p201 = scmp.lt.s32.totalorder %s198, 1
      %s202 = scalar_select %p201, %s198, 1
      %s203 = smul.addr %s200, 2
      %s204 = sadd.s32 %s202, %s203
      %s205 = smul.addr %s204, 4
      %s206 = scalar_lea.vmem %s0, %s205
      %p207 = pneg %p56
      %p208 = pneg %p53
      %s209 = smul.u32 19, %s21
      %p210 = scmp.lt.s32.totalorder %s209, 18
      %s211 = scalar_select %p210, %s209, 18
      %p212 = scmp.lt.s32.totalorder %s20, 0
      %s213 = scalar_select %p212, %s20, 0
      %s214 = sadd.s32 %s213, %s211
      %s215 = smul.addr %s214, 4
      %s216 = scalar_lea.vmem %s1, %s215
      %p217 = pneg %p84
      %p218 = pneg %p81
      %p219 = scmp.lt.s32.totalorder %s20, 0
      %s220 = scalar_select %p219, %s20, 0
      %s221 = scalar_lea.vmem %s2, %s220
      %p222 = pneg %p110
      %p223 = pneg %p107
      %p224 = pneg %p138
      %p225 = pneg %p135
      %s226 = smul.u32 128, %s19
      %p227 = scmp.lt.s32.totalorder %s226, 255
      %s228 = scalar_select %p227, %s226, 255
      %p229 = scmp.lt.s32.totalorder %s20, 0
      %s230 = scalar_select %p229, %s20, 0
      %s231 = sadd.s32 %s230, %s228
      %s232 = smul.addr %s231, 8
      %s233 = scalar_lea.vmem %s3, %s232
      %s234 = smul.u32 128, %s19
      %s235 = smul.u32 2, %s21
      %p236 = scmp.lt.s32.totalorder %s234, 255
      %s237 = scalar_select %p236, %s234, 255
      %p238 = scmp.lt.s32.totalorder %s235, 1
      %s239 = scalar_select %p238, %s235, 1
      %s240 = smul.addr %s237, 2
      %s241 = sadd.s32 %s239, %s240
      %s242 = smul.addr %s241, 4
      %s243 = scalar_lea.vmem %s0, %s242
      %s244 = smul.u32 128, %s19
      %s245 = smul.u32 2, %s21
      %s246 = smul.u32 19, %s21
      %p247 = scmp.lt.s32.totalorder %s246, 18
      %s248 = scalar_select %p247, %s246, 18
      %p249 = scmp.lt.s32.totalorder %s20, 0
      %s250 = scalar_select %p249, %s20, 0
      %s251 = sadd.s32 %s250, %s248
      %s252 = smul.addr %s251, 4
      %s253 = scalar_lea.vmem %s1, %s252
      %s254 = smul.u32 19, %s21
      %p255 = scmp.lt.s32.totalorder %s20, 0
      %s256 = scalar_select %p255, %s20, 0
      %s257 = scalar_lea.vmem %s2, %s256
      %s258 = smul.u32 128, %s19
      %p259 = scmp.lt.s32.totalorder %s258, 255
      %s260 = scalar_select %p259, %s258, 255
      %p261 = scmp.lt.s32.totalorder %s20, 0
      %s262 = scalar_select %p261, %s20, 0
      %s263 = sadd.s32 %s262, %s260
      %s264 = smul.addr %s263, 8
      %s265 = scalar_lea.vmem %s3, %s264
      %s266 = smul.u32 128, %s19
      %p268 = scmp.eq.s32.totalorder %s21, 0
      // Predicated region
      $region33: #{tpu_custom_call.1} parent=31 // pred_check
        %p269 = pneg %p268
      $region34: #{tpu_custom_call.1} parent=31 // pred_check_branch
        %271 = sbr.rel (%p269) target = $region36
      $region35: #{tpu_custom_call.1} parent=31 // pred_region
        %vm272 = vcmask 523264
        %273 = vst.msk [vmem:[%s265] sm:$0xff] %vm272, 0.0
        %274 = vst.msk [vmem:[%s265 + $0x8] sm:$0xff] %vm272, 0.0
        %275 = vst.msk [vmem:[%s265 + $0x10] sm:$0xff] %vm272, 0.0
        %276 = vst.msk [vmem:[%s265 + $0x18] sm:$0xff] %vm272, 0.0
        %277 = vst.msk [vmem:[%s265 + $0x20] sm:$0xff] %vm272, 0.0
        %278 = vst.msk [vmem:[%s265 + $0x28] sm:$0xff] %vm272, 0.0
        %279 = vst.msk [vmem:[%s265 + $0x30] sm:$0xff] %vm272, 0.0
        %280 = vst.msk [vmem:[%s265 + $0x38] sm:$0xff] %vm272, 0.0
        %281 = vst.msk [vmem:[%s265 + $0x40] sm:$0xff] %vm272, 0.0
        %282 = vst.msk [vmem:[%s265 + $0x48] sm:$0xff] %vm272, 0.0
        %283 = vst.msk [vmem:[%s265 + $0x50] sm:$0xff] %vm272, 0.0
        %284 = vst.msk [vmem:[%s265 + $0x58] sm:$0xff] %vm272, 0.0
        %285 = vst.msk [vmem:[%s265 + $0x60] sm:$0xff] %vm272, 0.0
        %286 = vst.msk [vmem:[%s265 + $0x68] sm:$0xff] %vm272, 0.0
        %287 = vst.msk [vmem:[%s265 + $0x70] sm:$0xff] %vm272, 0.0
        %288 = vst.msk [vmem:[%s265 + $0x78] sm:$0xff] %vm272, 0.0
        %289 = vst.msk [vmem:[%s265 + $0x80] sm:$0xff] %vm272, 0.0
        %290 = vst.msk [vmem:[%s265 + $0x88] sm:$0xff] %vm272, 0.0
        %291 = vst.msk [vmem:[%s265 + $0x90] sm:$0xff] %vm272, 0.0
        %292 = vst.msk [vmem:[%s265 + $0x98] sm:$0xff] %vm272, 0.0
        %293 = vst.msk [vmem:[%s265 + $0xa0] sm:$0xff] %vm272, 0.0
        %294 = vst.msk [vmem:[%s265 + $0xa8] sm:$0xff] %vm272, 0.0
        %295 = vst.msk [vmem:[%s265 + $0xb0] sm:$0xff] %vm272, 0.0
        %296 = vst.msk [vmem:[%s265 + $0xb8] sm:$0xff] %vm272, 0.0
        %297 = vst.msk [vmem:[%s265 + $0xc0] sm:$0xff] %vm272, 0.0
        %298 = vst.msk [vmem:[%s265 + $0xc8] sm:$0xff] %vm272, 0.0
        %299 = vst.msk [vmem:[%s265 + $0xd0] sm:$0xff] %vm272, 0.0
        %300 = vst.msk [vmem:[%s265 + $0xd8] sm:$0xff] %vm272, 0.0
        %301 = vst.msk [vmem:[%s265 + $0xe0] sm:$0xff] %vm272, 0.0
        %302 = vst.msk [vmem:[%s265 + $0xe8] sm:$0xff] %vm272, 0.0
        %303 = vst.msk [vmem:[%s265 + $0xf0] sm:$0xff] %vm272, 0.0
        %304 = vst.msk [vmem:[%s265 + $0xf8] sm:$0xff] %vm272, 0.0
        %305 = vst.msk [vmem:[%s265 + $0x100] sm:$0xff] %vm272, 0.0
        %306 = vst.msk [vmem:[%s265 + $0x108] sm:$0xff] %vm272, 0.0
        %307 = vst.msk [vmem:[%s265 + $0x110] sm:$0xff] %vm272, 0.0
        %308 = vst.msk [vmem:[%s265 + $0x118] sm:$0xff] %vm272, 0.0
        %309 = vst.msk [vmem:[%s265 + $0x120] sm:$0xff] %vm272, 0.0
        %310 = vst.msk [vmem:[%s265 + $0x128] sm:$0xff] %vm272, 0.0
        %311 = vst.msk [vmem:[%s265 + $0x130] sm:$0xff] %vm272, 0.0
        %312 = vst.msk [vmem:[%s265 + $0x138] sm:$0xff] %vm272, 0.0
        %313 = vst.msk [vmem:[%s265 + $0x140] sm:$0xff] %vm272, 0.0
        %314 = vst.msk [vmem:[%s265 + $0x148] sm:$0xff] %vm272, 0.0
        %315 = vst.msk [vmem:[%s265 + $0x150] sm:$0xff] %vm272, 0.0
        %316 = vst.msk [vmem:[%s265 + $0x158] sm:$0xff] %vm272, 0.0
        %317 = vst.msk [vmem:[%s265 + $0x160] sm:$0xff] %vm272, 0.0
        %318 = vst.msk [vmem:[%s265 + $0x168] sm:$0xff] %vm272, 0.0
        %319 = vst.msk [vmem:[%s265 + $0x170] sm:$0xff] %vm272, 0.0
        %320 = vst.msk [vmem:[%s265 + $0x178] sm:$0xff] %vm272, 0.0
        %321 = vst.msk [vmem:[%s265 + $0x180] sm:$0xff] %vm272, 0.0
        %322 = vst.msk [vmem:[%s265 + $0x188] sm:$0xff] %vm272, 0.0
        %323 = vst.msk [vmem:[%s265 + $0x190] sm:$0xff] %vm272, 0.0
        %324 = vst.msk [vmem:[%s265 + $0x198] sm:$0xff] %vm272, 0.0
        %325 = vst.msk [vmem:[%s265 + $0x1a0] sm:$0xff] %vm272, 0.0
        %326 = vst.msk [vmem:[%s265 + $0x1a8] sm:$0xff] %vm272, 0.0
        %327 = vst.msk [vmem:[%s265 + $0x1b0] sm:$0xff] %vm272, 0.0
        %328 = vst.msk [vmem:[%s265 + $0x1b8] sm:$0xff] %vm272, 0.0
        %329 = vst.msk [vmem:[%s265 + $0x1c0] sm:$0xff] %vm272, 0.0
        %330 = vst.msk [vmem:[%s265 + $0x1c8] sm:$0xff] %vm272, 0.0
        %331 = vst.msk [vmem:[%s265 + $0x1d0] sm:$0xff] %vm272, 0.0
        %332 = vst.msk [vmem:[%s265 + $0x1d8] sm:$0xff] %vm272, 0.0
        %333 = vst.msk [vmem:[%s265 + $0x1e0] sm:$0xff] %vm272, 0.0
        %334 = vst.msk [vmem:[%s265 + $0x1e8] sm:$0xff] %vm272, 0.0
        %335 = vst.msk [vmem:[%s265 + $0x1f0] sm:$0xff] %vm272, 0.0
        %336 = vst.msk [vmem:[%s265 + $0x1f8] sm:$0xff] %vm272, 0.0
        %337 = vst.msk [vmem:[%s265 + $0x200] sm:$0xff] %vm272, 0.0
        %338 = vst.msk [vmem:[%s265 + $0x208] sm:$0xff] %vm272, 0.0
        %339 = vst.msk [vmem:[%s265 + $0x210] sm:$0xff] %vm272, 0.0
        %340 = vst.msk [vmem:[%s265 + $0x218] sm:$0xff] %vm272, 0.0
        %341 = vst.msk [vmem:[%s265 + $0x220] sm:$0xff] %vm272, 0.0
        %342 = vst.msk [vmem:[%s265 + $0x228] sm:$0xff] %vm272, 0.0
        %343 = vst.msk [vmem:[%s265 + $0x230] sm:$0xff] %vm272, 0.0
        %344 = vst.msk [vmem:[%s265 + $0x238] sm:$0xff] %vm272, 0.0
        %345 = vst.msk [vmem:[%s265 + $0x240] sm:$0xff] %vm272, 0.0
        %346 = vst.msk [vmem:[%s265 + $0x248] sm:$0xff] %vm272, 0.0
        %347 = vst.msk [vmem:[%s265 + $0x250] sm:$0xff] %vm272, 0.0
        %348 = vst.msk [vmem:[%s265 + $0x258] sm:$0xff] %vm272, 0.0
        %349 = vst.msk [vmem:[%s265 + $0x260] sm:$0xff] %vm272, 0.0
        %350 = vst.msk [vmem:[%s265 + $0x268] sm:$0xff] %vm272, 0.0
        %351 = vst.msk [vmem:[%s265 + $0x270] sm:$0xff] %vm272, 0.0
        %352 = vst.msk [vmem:[%s265 + $0x278] sm:$0xff] %vm272, 0.0
        %353 = vst.msk [vmem:[%s265 + $0x280] sm:$0xff] %vm272, 0.0
        %354 = vst.msk [vmem:[%s265 + $0x288] sm:$0xff] %vm272, 0.0
        %355 = vst.msk [vmem:[%s265 + $0x290] sm:$0xff] %vm272, 0.0
        %356 = vst.msk [vmem:[%s265 + $0x298] sm:$0xff] %vm272, 0.0
        %357 = vst.msk [vmem:[%s265 + $0x2a0] sm:$0xff] %vm272, 0.0
        %358 = vst.msk [vmem:[%s265 + $0x2a8] sm:$0xff] %vm272, 0.0
        %359 = vst.msk [vmem:[%s265 + $0x2b0] sm:$0xff] %vm272, 0.0
        %360 = vst.msk [vmem:[%s265 + $0x2b8] sm:$0xff] %vm272, 0.0
        %361 = vst.msk [vmem:[%s265 + $0x2c0] sm:$0xff] %vm272, 0.0
        %362 = vst.msk [vmem:[%s265 + $0x2c8] sm:$0xff] %vm272, 0.0
        %363 = vst.msk [vmem:[%s265 + $0x2d0] sm:$0xff] %vm272, 0.0
        %364 = vst.msk [vmem:[%s265 + $0x2d8] sm:$0xff] %vm272, 0.0
        %365 = vst.msk [vmem:[%s265 + $0x2e0] sm:$0xff] %vm272, 0.0
        %366 = vst.msk [vmem:[%s265 + $0x2e8] sm:$0xff] %vm272, 0.0
        %367 = vst.msk [vmem:[%s265 + $0x2f0] sm:$0xff] %vm272, 0.0
        %368 = vst.msk [vmem:[%s265 + $0x2f8] sm:$0xff] %vm272, 0.0
        %369 = vst.msk [vmem:[%s265 + $0x300] sm:$0xff] %vm272, 0.0
        %370 = vst.msk [vmem:[%s265 + $0x308] sm:$0xff] %vm272, 0.0
        %371 = vst.msk [vmem:[%s265 + $0x310] sm:$0xff] %vm272, 0.0
        %372 = vst.msk [vmem:[%s265 + $0x318] sm:$0xff] %vm272, 0.0
        %373 = vst.msk [vmem:[%s265 + $0x320] sm:$0xff] %vm272, 0.0
        %374 = vst.msk [vmem:[%s265 + $0x328] sm:$0xff] %vm272, 0.0
        %375 = vst.msk [vmem:[%s265 + $0x330] sm:$0xff] %vm272, 0.0
        %376 = vst.msk [vmem:[%s265 + $0x338] sm:$0xff] %vm272, 0.0
        %377 = vst.msk [vmem:[%s265 + $0x340] sm:$0xff] %vm272, 0.0
        %378 = vst.msk [vmem:[%s265 + $0x348] sm:$0xff] %vm272, 0.0
        %379 = vst.msk [vmem:[%s265 + $0x350] sm:$0xff] %vm272, 0.0
        %380 = vst.msk [vmem:[%s265 + $0x358] sm:$0xff] %vm272, 0.0
        %381 = vst.msk [vmem:[%s265 + $0x360] sm:$0xff] %vm272, 0.0
        %382 = vst.msk [vmem:[%s265 + $0x368] sm:$0xff] %vm272, 0.0
        %383 = vst.msk [vmem:[%s265 + $0x370] sm:$0xff] %vm272, 0.0
        %384 = vst.msk [vmem:[%s265 + $0x378] sm:$0xff] %vm272, 0.0
        %385 = vst.msk [vmem:[%s265 + $0x380] sm:$0xff] %vm272, 0.0
        %386 = vst.msk [vmem:[%s265 + $0x388] sm:$0xff] %vm272, 0.0
        %387 = vst.msk [vmem:[%s265 + $0x390] sm:$0xff] %vm272, 0.0
        %388 = vst.msk [vmem:[%s265 + $0x398] sm:$0xff] %vm272, 0.0
        %389 = vst.msk [vmem:[%s265 + $0x3a0] sm:$0xff] %vm272, 0.0
        %390 = vst.msk [vmem:[%s265 + $0x3a8] sm:$0xff] %vm272, 0.0
        %391 = vst.msk [vmem:[%s265 + $0x3b0] sm:$0xff] %vm272, 0.0
        %392 = vst.msk [vmem:[%s265 + $0x3b8] sm:$0xff] %vm272, 0.0
        %393 = vst.msk [vmem:[%s265 + $0x3c0] sm:$0xff] %vm272, 0.0
        %394 = vst.msk [vmem:[%s265 + $0x3c8] sm:$0xff] %vm272, 0.0
        %395 = vst.msk [vmem:[%s265 + $0x3d0] sm:$0xff] %vm272, 0.0
        %396 = vst.msk [vmem:[%s265 + $0x3d8] sm:$0xff] %vm272, 0.0
        %397 = vst.msk [vmem:[%s265 + $0x3e0] sm:$0xff] %vm272, 0.0
        %398 = vst.msk [vmem:[%s265 + $0x3e8] sm:$0xff] %vm272, 0.0
        %399 = vst.msk [vmem:[%s265 + $0x3f0] sm:$0xff] %vm272, 0.0
        %400 = vst.msk [vmem:[%s265 + $0x3f8] sm:$0xff] %vm272, 0.0
      $region36: #{tpu_custom_call.1} parent=31 // pred_fallthru
        _
      %v401 = vld [vmem:[%s265] sm:$0xff]
      %v402 = vld [vmem:[%s265 + $0x8] sm:$0xff]
      %v403 = vld [vmem:[%s265 + $0x10] sm:$0xff]
      %v404 = vld [vmem:[%s265 + $0x18] sm:$0xff]
      %v405 = vld [vmem:[%s265 + $0x20] sm:$0xff]
      %v406 = vld [vmem:[%s265 + $0x28] sm:$0xff]
      %v407 = vld [vmem:[%s265 + $0x30] sm:$0xff]
      %v408 = vld [vmem:[%s265 + $0x38] sm:$0xff]
      %v409 = vld [vmem:[%s265 + $0x40] sm:$0xff]
      %v410 = vld [vmem:[%s265 + $0x48] sm:$0xff]
      %v411 = vld [vmem:[%s265 + $0x50] sm:$0xff]
      %v412 = vld [vmem:[%s265 + $0x58] sm:$0xff]
      %v413 = vld [vmem:[%s265 + $0x60] sm:$0xff]
      %v414 = vld [vmem:[%s265 + $0x68] sm:$0xff]
      %v415 = vld [vmem:[%s265 + $0x70] sm:$0xff]
      %v416 = vld [vmem:[%s265 + $0x78] sm:$0xff]
      %v417 = vld [vmem:[%s265 + $0x80] sm:$0xff]
      %v418 = vld [vmem:[%s265 + $0x88] sm:$0xff]
      %v419 = vld [vmem:[%s265 + $0x90] sm:$0xff]
      %v420 = vld [vmem:[%s265 + $0x98] sm:$0xff]
      %v421 = vld [vmem:[%s265 + $0xa0] sm:$0xff]
      %v422 = vld [vmem:[%s265 + $0xa8] sm:$0xff]
      %v423 = vld [vmem:[%s265 + $0xb0] sm:$0xff]
      %v424 = vld [vmem:[%s265 + $0xb8] sm:$0xff]
      %v425 = vld [vmem:[%s265 + $0xc0] sm:$0xff]
      %v426 = vld [vmem:[%s265 + $0xc8] sm:$0xff]
      %v427 = vld [vmem:[%s265 + $0xd0] sm:$0xff]
      %v428 = vld [vmem:[%s265 + $0xd8] sm:$0xff]
      %v429 = vld [vmem:[%s265 + $0xe0] sm:$0xff]
      %v430 = vld [vmem:[%s265 + $0xe8] sm:$0xff]
      %v431 = vld [vmem:[%s265 + $0xf0] sm:$0xff]
      %v432 = vld [vmem:[%s265 + $0xf8] sm:$0xff]
      %v433 = vld [vmem:[%s265 + $0x100] sm:$0xff]
      %v434 = vld [vmem:[%s265 + $0x108] sm:$0xff]
      %v435 = vld [vmem:[%s265 + $0x110] sm:$0xff]
      %v436 = vld [vmem:[%s265 + $0x118] sm:$0xff]
      %v437 = vld [vmem:[%s265 + $0x120] sm:$0xff]
      %v438 = vld [vmem:[%s265 + $0x128] sm:$0xff]
      %v439 = vld [vmem:[%s265 + $0x130] sm:$0xff]
      %v440 = vld [vmem:[%s265 + $0x138] sm:$0xff]
      %v441 = vld [vmem:[%s265 + $0x140] sm:$0xff]
      %v442 = vld [vmem:[%s265 + $0x148] sm:$0xff]
      %v443 = vld [vmem:[%s265 + $0x150] sm:$0xff]
      %v444 = vld [vmem:[%s265 + $0x158] sm:$0xff]
      %v445 = vld [vmem:[%s265 + $0x160] sm:$0xff]
      %v446 = vld [vmem:[%s265 + $0x168] sm:$0xff]
      %v447 = vld [vmem:[%s265 + $0x170] sm:$0xff]
      %v448 = vld [vmem:[%s265 + $0x178] sm:$0xff]
      %v449 = vld [vmem:[%s265 + $0x180] sm:$0xff]
      %v450 = vld [vmem:[%s265 + $0x188] sm:$0xff]
      %v451 = vld [vmem:[%s265 + $0x190] sm:$0xff]
      %v452 = vld [vmem:[%s265 + $0x198] sm:$0xff]
      %v453 = vld [vmem:[%s265 + $0x1a0] sm:$0xff]
      %v454 = vld [vmem:[%s265 + $0x1a8] sm:$0xff]
      %v455 = vld [vmem:[%s265 + $0x1b0] sm:$0xff]
      %v456 = vld [vmem:[%s265 + $0x1b8] sm:$0xff]
      %v457 = vld [vmem:[%s265 + $0x1c0] sm:$0xff]
      %v458 = vld [vmem:[%s265 + $0x1c8] sm:$0xff]
      %v459 = vld [vmem:[%s265 + $0x1d0] sm:$0xff]
      %v460 = vld [vmem:[%s265 + $0x1d8] sm:$0xff]
      %v461 = vld [vmem:[%s265 + $0x1e0] sm:$0xff]
      %v462 = vld [vmem:[%s265 + $0x1e8] sm:$0xff]
      %v463 = vld [vmem:[%s265 + $0x1f0] sm:$0xff]
      %v464 = vld [vmem:[%s265 + $0x1f8] sm:$0xff]
      %v465 = vld [vmem:[%s265 + $0x200] sm:$0xff]
      %v466 = vld [vmem:[%s265 + $0x208] sm:$0xff]
      %v467 = vld [vmem:[%s265 + $0x210] sm:$0xff]
      %v468 = vld [vmem:[%s265 + $0x218] sm:$0xff]
      %v469 = vld [vmem:[%s265 + $0x220] sm:$0xff]
      %v470 = vld [vmem:[%s265 + $0x228] sm:$0xff]
      %v471 = vld [vmem:[%s265 + $0x230] sm:$0xff]
      %v472 = vld [vmem:[%s265 + $0x238] sm:$0xff]
      %v473 = vld [vmem:[%s265 + $0x240] sm:$0xff]
      %v474 = vld [vmem:[%s265 + $0x248] sm:$0xff]
      %v475 = vld [vmem:[%s265 + $0x250] sm:$0xff]
      %v476 = vld [vmem:[%s265 + $0x258] sm:$0xff]
      %v477 = vld [vmem:[%s265 + $0x260] sm:$0xff]
      %v478 = vld [vmem:[%s265 + $0x268] sm:$0xff]
      %v479 = vld [vmem:[%s265 + $0x270] sm:$0xff]
      %v480 = vld [vmem:[%s265 + $0x278] sm:$0xff]
      %v481 = vld [vmem:[%s265 + $0x280] sm:$0xff]
      %v482 = vld [vmem:[%s265 + $0x288] sm:$0xff]
      %v483 = vld [vmem:[%s265 + $0x290] sm:$0xff]
      %v484 = vld [vmem:[%s265 + $0x298] sm:$0xff]
      %v485 = vld [vmem:[%s265 + $0x2a0] sm:$0xff]
      %v486 = vld [vmem:[%s265 + $0x2a8] sm:$0xff]
      %v487 = vld [vmem:[%s265 + $0x2b0] sm:$0xff]
      %v488 = vld [vmem:[%s265 + $0x2b8] sm:$0xff]
      %v489 = vld [vmem:[%s265 + $0x2c0] sm:$0xff]
      %v490 = vld [vmem:[%s265 + $0x2c8] sm:$0xff]
      %v491 = vld [vmem:[%s265 + $0x2d0] sm:$0xff]
      %v492 = vld [vmem:[%s265 + $0x2d8] sm:$0xff]
      %v493 = vld [vmem:[%s265 + $0x2e0] sm:$0xff]
      %v494 = vld [vmem:[%s265 + $0x2e8] sm:$0xff]
      %v495 = vld [vmem:[%s265 + $0x2f0] sm:$0xff]
      %v496 = vld [vmem:[%s265 + $0x2f8] sm:$0xff]
      %v497 = vld [vmem:[%s265 + $0x300] sm:$0xff]
      %v498 = vld [vmem:[%s265 + $0x308] sm:$0xff]
      %v499 = vld [vmem:[%s265 + $0x310] sm:$0xff]
      %v500 = vld [vmem:[%s265 + $0x318] sm:$0xff]
      %v501 = vld [vmem:[%s265 + $0x320] sm:$0xff]
      %v502 = vld [vmem:[%s265 + $0x328] sm:$0xff]
      %v503 = vld [vmem:[%s265 + $0x330] sm:$0xff]
      %v504 = vld [vmem:[%s265 + $0x338] sm:$0xff]
      %v505 = vld [vmem:[%s265 + $0x340] sm:$0xff]
      %v506 = vld [vmem:[%s265 + $0x348] sm:$0xff]
      %v507 = vld [vmem:[%s265 + $0x350] sm:$0xff]
      %v508 = vld [vmem:[%s265 + $0x358] sm:$0xff]
      %v509 = vld [vmem:[%s265 + $0x360] sm:$0xff]
      %v510 = vld [vmem:[%s265 + $0x368] sm:$0xff]
      %v511 = vld [vmem:[%s265 + $0x370] sm:$0xff]
      %v512 = vld [vmem:[%s265 + $0x378] sm:$0xff]
      %v513 = vld [vmem:[%s265 + $0x380] sm:$0xff]
      %v514 = vld [vmem:[%s265 + $0x388] sm:$0xff]
      %v515 = vld [vmem:[%s265 + $0x390] sm:$0xff]
      %v516 = vld [vmem:[%s265 + $0x398] sm:$0xff]
      %v517 = vld [vmem:[%s265 + $0x3a0] sm:$0xff]
      %v518 = vld [vmem:[%s265 + $0x3a8] sm:$0xff]
      %v519 = vld [vmem:[%s265 + $0x3b0] sm:$0xff]
      %v520 = vld [vmem:[%s265 + $0x3b8] sm:$0xff]
      %v521 = vld [vmem:[%s265 + $0x3c0] sm:$0xff]
      %v522 = vld [vmem:[%s265 + $0x3c8] sm:$0xff]
      %v523 = vld [vmem:[%s265 + $0x3d0] sm:$0xff]
      %v524 = vld [vmem:[%s265 + $0x3d8] sm:$0xff]
      %v525 = vld [vmem:[%s265 + $0x3e0] sm:$0xff]
      %v526 = vld [vmem:[%s265 + $0x3e8] sm:$0xff]
      %v527 = vld [vmem:[%s265 + $0x3f0] sm:$0xff]
      %v528 = vld [vmem:[%s265 + $0x3f8] sm:$0xff]
      %v529 = vld [vmem:[%s243] sm:$0xff]
      %v530 = vld [vmem:[%s243 + $0x8] sm:$0xff]
      %v531 = vld [vmem:[%s243 + $0x10] sm:$0xff]
      %v532 = vld [vmem:[%s243 + $0x18] sm:$0xff]
      %v533 = vld [vmem:[%s243 + $0x20] sm:$0xff]
      %v534 = vld [vmem:[%s243 + $0x28] sm:$0xff]
      %v535 = vld [vmem:[%s243 + $0x30] sm:$0xff]
      %v536 = vld [vmem:[%s243 + $0x38] sm:$0xff]
      %v537 = vld [vmem:[%s243 + $0x40] sm:$0xff]
      %v538 = vld [vmem:[%s243 + $0x48] sm:$0xff]
      %v539 = vld [vmem:[%s243 + $0x50] sm:$0xff]
      %v540 = vld [vmem:[%s243 + $0x58] sm:$0xff]
      %v541 = vld [vmem:[%s243 + $0x60] sm:$0xff]
      %v542 = vld [vmem:[%s243 + $0x68] sm:$0xff]
      %v543 = vld [vmem:[%s243 + $0x70] sm:$0xff]
      %v544 = vld [vmem:[%s243 + $0x78] sm:$0xff]
      %v545 = vld [vmem:[%s243 + $0x80] sm:$0xff]
      %v546 = vld [vmem:[%s243 + $0x88] sm:$0xff]
      %v547 = vld [vmem:[%s243 + $0x90] sm:$0xff]
      %v548 = vld [vmem:[%s243 + $0x98] sm:$0xff]
      %v549 = vld [vmem:[%s243 + $0xa0] sm:$0xff]
      %v550 = vld [vmem:[%s243 + $0xa8] sm:$0xff]
      %v551 = vld [vmem:[%s243 + $0xb0] sm:$0xff]
      %v552 = vld [vmem:[%s243 + $0xb8] sm:$0xff]
      %v553 = vld [vmem:[%s243 + $0xc0] sm:$0xff]
      %v554 = vld [vmem:[%s243 + $0xc8] sm:$0xff]
      %v555 = vld [vmem:[%s243 + $0xd0] sm:$0xff]
      %v556 = vld [vmem:[%s243 + $0xd8] sm:$0xff]
      %v557 = vld [vmem:[%s243 + $0xe0] sm:$0xff]
      %v558 = vld [vmem:[%s243 + $0xe8] sm:$0xff]
      %v559 = vld [vmem:[%s243 + $0xf0] sm:$0xff]
      %v560 = vld [vmem:[%s243 + $0xf8] sm:$0xff]
      %v561 = vld [vmem:[%s243 + $0x100] sm:$0xff]
      %v562 = vld [vmem:[%s243 + $0x108] sm:$0xff]
      %v563 = vld [vmem:[%s243 + $0x110] sm:$0xff]
      %v564 = vld [vmem:[%s243 + $0x118] sm:$0xff]
      %v565 = vld [vmem:[%s243 + $0x120] sm:$0xff]
      %v566 = vld [vmem:[%s243 + $0x128] sm:$0xff]
      %v567 = vld [vmem:[%s243 + $0x130] sm:$0xff]
      %v568 = vld [vmem:[%s243 + $0x138] sm:$0xff]
      %v569 = vld [vmem:[%s243 + $0x140] sm:$0xff]
      %v570 = vld [vmem:[%s243 + $0x148] sm:$0xff]
      %v571 = vld [vmem:[%s243 + $0x150] sm:$0xff]
      %v572 = vld [vmem:[%s243 + $0x158] sm:$0xff]
      %v573 = vld [vmem:[%s243 + $0x160] sm:$0xff]
      %v574 = vld [vmem:[%s243 + $0x168] sm:$0xff]
      %v575 = vld [vmem:[%s243 + $0x170] sm:$0xff]
      %v576 = vld [vmem:[%s243 + $0x178] sm:$0xff]
      %v577 = vld [vmem:[%s243 + $0x180] sm:$0xff]
      %v578 = vld [vmem:[%s243 + $0x188] sm:$0xff]
      %v579 = vld [vmem:[%s243 + $0x190] sm:$0xff]
      %v580 = vld [vmem:[%s243 + $0x198] sm:$0xff]
      %v581 = vld [vmem:[%s243 + $0x1a0] sm:$0xff]
      %v582 = vld [vmem:[%s243 + $0x1a8] sm:$0xff]
      %v583 = vld [vmem:[%s243 + $0x1b0] sm:$0xff]
      %v584 = vld [vmem:[%s243 + $0x1b8] sm:$0xff]
      %v585 = vld [vmem:[%s243 + $0x1c0] sm:$0xff]
      %v586 = vld [vmem:[%s243 + $0x1c8] sm:$0xff]
      %v587 = vld [vmem:[%s243 + $0x1d0] sm:$0xff]
      %v588 = vld [vmem:[%s243 + $0x1d8] sm:$0xff]
      %v589 = vld [vmem:[%s243 + $0x1e0] sm:$0xff]
      %v590 = vld [vmem:[%s243 + $0x1e8] sm:$0xff]
      %v591 = vld [vmem:[%s243 + $0x1f0] sm:$0xff]
      %v592 = vld [vmem:[%s243 + $0x1f8] sm:$0xff]
      %v593 = vld [vmem:[%s243 + $0x200] sm:$0xff]
      %v594 = vld [vmem:[%s243 + $0x208] sm:$0xff]
      %v595 = vld [vmem:[%s243 + $0x210] sm:$0xff]
      %v596 = vld [vmem:[%s243 + $0x218] sm:$0xff]
      %v597 = vld [vmem:[%s243 + $0x220] sm:$0xff]
      %v598 = vld [vmem:[%s243 + $0x228] sm:$0xff]
      %v599 = vld [vmem:[%s243 + $0x230] sm:$0xff]
      %v600 = vld [vmem:[%s243 + $0x238] sm:$0xff]
      %v601 = vld [vmem:[%s243 + $0x240] sm:$0xff]
      %v602 = vld [vmem:[%s243 + $0x248] sm:$0xff]
      %v603 = vld [vmem:[%s243 + $0x250] sm:$0xff]
      %v604 = vld [vmem:[%s243 + $0x258] sm:$0xff]
      %v605 = vld [vmem:[%s243 + $0x260] sm:$0xff]
      %v606 = vld [vmem:[%s243 + $0x268] sm:$0xff]
      %v607 = vld [vmem:[%s243 + $0x270] sm:$0xff]
      %v608 = vld [vmem:[%s243 + $0x278] sm:$0xff]
      %v609 = vld [vmem:[%s243 + $0x280] sm:$0xff]
      %v610 = vld [vmem:[%s243 + $0x288] sm:$0xff]
      %v611 = vld [vmem:[%s243 + $0x290] sm:$0xff]
      %v612 = vld [vmem:[%s243 + $0x298] sm:$0xff]
      %v613 = vld [vmem:[%s243 + $0x2a0] sm:$0xff]
      %v614 = vld [vmem:[%s243 + $0x2a8] sm:$0xff]
      %v615 = vld [vmem:[%s243 + $0x2b0] sm:$0xff]
      %v616 = vld [vmem:[%s243 + $0x2b8] sm:$0xff]
      %v617 = vld [vmem:[%s243 + $0x2c0] sm:$0xff]
      %v618 = vld [vmem:[%s243 + $0x2c8] sm:$0xff]
      %v619 = vld [vmem:[%s243 + $0x2d0] sm:$0xff]
      %v620 = vld [vmem:[%s243 + $0x2d8] sm:$0xff]
      %v621 = vld [vmem:[%s243 + $0x2e0] sm:$0xff]
      %v622 = vld [vmem:[%s243 + $0x2e8] sm:$0xff]
      %v623 = vld [vmem:[%s243 + $0x2f0] sm:$0xff]
      %v624 = vld [vmem:[%s243 + $0x2f8] sm:$0xff]
      %v625 = vld [vmem:[%s243 + $0x300] sm:$0xff]
      %v626 = vld [vmem:[%s243 + $0x308] sm:$0xff]
      %v627 = vld [vmem:[%s243 + $0x310] sm:$0xff]
      %v628 = vld [vmem:[%s243 + $0x318] sm:$0xff]
      %v629 = vld [vmem:[%s243 + $0x320] sm:$0xff]
      %v630 = vld [vmem:[%s243 + $0x328] sm:$0xff]
      %v631 = vld [vmem:[%s243 + $0x330] sm:$0xff]
      %v632 = vld [vmem:[%s243 + $0x338] sm:$0xff]
      %v633 = vld [vmem:[%s243 + $0x340] sm:$0xff]
      %v634 = vld [vmem:[%s243 + $0x348] sm:$0xff]
      %v635 = vld [vmem:[%s243 + $0x350] sm:$0xff]
      %v636 = vld [vmem:[%s243 + $0x358] sm:$0xff]
      %v637 = vld [vmem:[%s243 + $0x360] sm:$0xff]
      %v638 = vld [vmem:[%s243 + $0x368] sm:$0xff]
      %v639 = vld [vmem:[%s243 + $0x370] sm:$0xff]
      %v640 = vld [vmem:[%s243 + $0x378] sm:$0xff]
      %v641 = vld [vmem:[%s243 + $0x380] sm:$0xff]
      %v642 = vld [vmem:[%s243 + $0x388] sm:$0xff]
      %v643 = vld [vmem:[%s243 + $0x390] sm:$0xff]
      %v644 = vld [vmem:[%s243 + $0x398] sm:$0xff]
      %v645 = vld [vmem:[%s243 + $0x3a0] sm:$0xff]
      %v646 = vld [vmem:[%s243 + $0x3a8] sm:$0xff]
      %v647 = vld [vmem:[%s243 + $0x3b0] sm:$0xff]
      %v648 = vld [vmem:[%s243 + $0x3b8] sm:$0xff]
      %v649 = vld [vmem:[%s243 + $0x3c0] sm:$0xff]
      %v650 = vld [vmem:[%s243 + $0x3c8] sm:$0xff]
      %v651 = vld [vmem:[%s243 + $0x3d0] sm:$0xff]
      %v652 = vld [vmem:[%s243 + $0x3d8] sm:$0xff]
      %v653 = vld [vmem:[%s243 + $0x3e0] sm:$0xff]
      %v654 = vld [vmem:[%s243 + $0x3e8] sm:$0xff]
      %v655 = vld [vmem:[%s243 + $0x3f0] sm:$0xff]
      %v656 = vld [vmem:[%s243 + $0x3f8] sm:$0xff]
      %v657 = vld [vmem:[%s253] sm:$0xf]
      %v658 = vld [vmem:[%s253 + $0x4] sm:$0xf]
      %v659 = vld [vmem:[%s253 + $0x8] sm:$0xf]
      %v660 = vld [vmem:[%s253 + $0xc] sm:$0xf]
      %v661 = vld [vmem:[%s253 + $0x10] sm:$0xf]
      %v662 = vld [vmem:[%s253 + $0x14] sm:$0xf]
      %v663 = vld [vmem:[%s253 + $0x18] sm:$0xf]
      %v664 = vld [vmem:[%s253 + $0x1c] sm:$0xf]
      %v665 = vld [vmem:[%s253 + $0x20] sm:$0xf]
      %v666 = vld [vmem:[%s253 + $0x24] sm:$0xf]
      %v667 = vld [vmem:[%s253 + $0x28] sm:$0xf]
      %v668 = vld [vmem:[%s253 + $0x2c] sm:$0xf]
      %v669 = vld [vmem:[%s253 + $0x30] sm:$0xf]
      %v670 = vld [vmem:[%s253 + $0x34] sm:$0xf]
      %v671 = vld [vmem:[%s253 + $0x38] sm:$0xf]
      %v672 = vld [vmem:[%s253 + $0x3c] sm:$0xf]
      %v673 = vld [vmem:[%s253 + $0x40] sm:$0xf]
      %v674 = vld [vmem:[%s253 + $0x44] sm:$0xf]
      %v675 = vld [vmem:[%s253 + $0x48] sm:$0x3]
      %v804 = vunpack.c.l.b16 %v529
      %v805 = vunpack.c.h.b16 %v529
      %v806 = vunpack.c.l.b16 %v530
      %v807 = vunpack.c.h.b16 %v530
      %v808 = vunpack.c.l.b16 %v531
      %v809 = vunpack.c.h.b16 %v531
      %v810 = vunpack.c.l.b16 %v532
      %v811 = vunpack.c.h.b16 %v532
      %v812 = vunpack.c.l.b16 %v533
      %v813 = vunpack.c.h.b16 %v533
      %v814 = vunpack.c.l.b16 %v534
      %v815 = vunpack.c.h.b16 %v534
      %v816 = vunpack.c.l.b16 %v535
      %v817 = vunpack.c.h.b16 %v535
      %v818 = vunpack.c.l.b16 %v536
      %v819 = vunpack.c.h.b16 %v536
      %v820 = vunpack.c.l.b16 %v537
      %v821 = vunpack.c.h.b16 %v537
      %v822 = vunpack.c.l.b16 %v538
      %v823 = vunpack.c.h.b16 %v538
      %v824 = vunpack.c.l.b16 %v539
      %v825 = vunpack.c.h.b16 %v539
      %v826 = vunpack.c.l.b16 %v540
      %v827 = vunpack.c.h.b16 %v540
      %v828 = vunpack.c.l.b16 %v541
      %v829 = vunpack.c.h.b16 %v541
      %v830 = vunpack.c.l.b16 %v542
      %v831 = vunpack.c.h.b16 %v542
      %v832 = vunpack.c.l.b16 %v543
      %v833 = vunpack.c.h.b16 %v543
      %v834 = vunpack.c.l.b16 %v544
      %v835 = vunpack.c.h.b16 %v544
      %v836 = vunpack.c.l.b16 %v545
      %v837 = vunpack.c.h.b16 %v545
      %v838 = vunpack.c.l.b16 %v546
      %v839 = vunpack.c.h.b16 %v546
      %v840 = vunpack.c.l.b16 %v547
      %v841 = vunpack.c.h.b16 %v547
      %v842 = vunpack.c.l.b16 %v548
      %v843 = vunpack.c.h.b16 %v548
      %v844 = vunpack.c.l.b16 %v549
      %v845 = vunpack.c.h.b16 %v549
      %v846 = vunpack.c.l.b16 %v550
      %v847 = vunpack.c.h.b16 %v550
      %v848 = vunpack.c.l.b16 %v551
      %v849 = vunpack.c.h.b16 %v551
      %v850 = vunpack.c.l.b16 %v552
      %v851 = vunpack.c.h.b16 %v552
      %v852 = vunpack.c.l.b16 %v553
      %v853 = vunpack.c.h.b16 %v553
      %v854 = vunpack.c.l.b16 %v554
      %v855 = vunpack.c.h.b16 %v554
      %v856 = vunpack.c.l.b16 %v555
      %v857 = vunpack.c.h.b16 %v555
      %v858 = vunpack.c.l.b16 %v556
      %v859 = vunpack.c.h.b16 %v556
      %v860 = vunpack.c.l.b16 %v557
      %v861 = vunpack.c.h.b16 %v557
      %v862 = vunpack.c.l.b16 %v558
      %v863 = vunpack.c.h.b16 %v558
      %v864 = vunpack.c.l.b16 %v559
      %v865 = vunpack.c.h.b16 %v559
      %v866 = vunpack.c.l.b16 %v560
      %v867 = vunpack.c.h.b16 %v560
      %v868 = vunpack.c.l.b16 %v561
      %v869 = vunpack.c.h.b16 %v561
      %v870 = vunpack.c.l.b16 %v562
      %v871 = vunpack.c.h.b16 %v562
      %v872 = vunpack.c.l.b16 %v563
      %v873 = vunpack.c.h.b16 %v563
      %v874 = vunpack.c.l.b16 %v564
      %v875 = vunpack.c.h.b16 %v564
      %v876 = vunpack.c.l.b16 %v565
      %v877 = vunpack.c.h.b16 %v565
      %v878 = vunpack.c.l.b16 %v566
      %v879 = vunpack.c.h.b16 %v566
      %v880 = vunpack.c.l.b16 %v567
      %v881 = vunpack.c.h.b16 %v567
      %v882 = vunpack.c.l.b16 %v568
      %v883 = vunpack.c.h.b16 %v568
      %v884 = vunpack.c.l.b16 %v569
      %v885 = vunpack.c.h.b16 %v569
      %v886 = vunpack.c.l.b16 %v570
      %v887 = vunpack.c.h.b16 %v570
      %v888 = vunpack.c.l.b16 %v571
      %v889 = vunpack.c.h.b16 %v571
      %v890 = vunpack.c.l.b16 %v572
      %v891 = vunpack.c.h.b16 %v572
      %v892 = vunpack.c.l.b16 %v573
      %v893 = vunpack.c.h.b16 %v573
      %v894 = vunpack.c.l.b16 %v574
      %v895 = vunpack.c.h.b16 %v574
      %v896 = vunpack.c.l.b16 %v575
      %v897 = vunpack.c.h.b16 %v575
      %v898 = vunpack.c.l.b16 %v576
      %v899 = vunpack.c.h.b16 %v576
      %v900 = vunpack.c.l.b16 %v577
      %v901 = vunpack.c.h.b16 %v577
      %v902 = vunpack.c.l.b16 %v578
      %v903 = vunpack.c.h.b16 %v578
      %v904 = vunpack.c.l.b16 %v579
      %v905 = vunpack.c.h.b16 %v579
      %v906 = vunpack.c.l.b16 %v580
      %v907 = vunpack.c.h.b16 %v580
      %v908 = vunpack.c.l.b16 %v581
      %v909 = vunpack.c.h.b16 %v581
      %v910 = vunpack.c.l.b16 %v582
      %v911 = vunpack.c.h.b16 %v582
      %v912 = vunpack.c.l.b16 %v583
      %v913 = vunpack.c.h.b16 %v583
      %v914 = vunpack.c.l.b16 %v584
      %v915 = vunpack.c.h.b16 %v584
      %v916 = vunpack.c.l.b16 %v585
      %v917 = vunpack.c.h.b16 %v585
      %v918 = vunpack.c.l.b16 %v586
      %v919 = vunpack.c.h.b16 %v586
      %v920 = vunpack.c.l.b16 %v587
      %v921 = vunpack.c.h.b16 %v587
      %v922 = vunpack.c.l.b16 %v588
      %v923 = vunpack.c.h.b16 %v588
      %v924 = vunpack.c.l.b16 %v589
      %v925 = vunpack.c.h.b16 %v589
      %v926 = vunpack.c.l.b16 %v590
      %v927 = vunpack.c.h.b16 %v590
      %v928 = vunpack.c.l.b16 %v591
      %v929 = vunpack.c.h.b16 %v591
      %v930 = vunpack.c.l.b16 %v592
      %v931 = vunpack.c.h.b16 %v592
      %v932 = vunpack.c.l.b16 %v593
      %v933 = vunpack.c.h.b16 %v593
      %v934 = vunpack.c.l.b16 %v594
      %v935 = vunpack.c.h.b16 %v594
      %v936 = vunpack.c.l.b16 %v595
      %v937 = vunpack.c.h.b16 %v595
      %v938 = vunpack.c.l.b16 %v596
      %v939 = vunpack.c.h.b16 %v596
      %v940 = vunpack.c.l.b16 %v597
      %v941 = vunpack.c.h.b16 %v597
      %v942 = vunpack.c.l.b16 %v598
      %v943 = vunpack.c.h.b16 %v598
      %v944 = vunpack.c.l.b16 %v599
      %v945 = vunpack.c.h.b16 %v599
      %v946 = vunpack.c.l.b16 %v600
      %v947 = vunpack.c.h.b16 %v600
      %v948 = vunpack.c.l.b16 %v601
      %v949 = vunpack.c.h.b16 %v601
      %v950 = vunpack.c.l.b16 %v602
      %v951 = vunpack.c.h.b16 %v602
      %v952 = vunpack.c.l.b16 %v603
      %v953 = vunpack.c.h.b16 %v603
      %v954 = vunpack.c.l.b16 %v604
      %v955 = vunpack.c.h.b16 %v604
      %v956 = vunpack.c.l.b16 %v605
      %v957 = vunpack.c.h.b16 %v605
      %v958 = vunpack.c.l.b16 %v606
      %v959 = vunpack.c.h.b16 %v606
      %v960 = vunpack.c.l.b16 %v607
      %v961 = vunpack.c.h.b16 %v607
      %v962 = vunpack.c.l.b16 %v608
      %v963 = vunpack.c.h.b16 %v608
      %v964 = vunpack.c.l.b16 %v609
      %v965 = vunpack.c.h.b16 %v609
      %v966 = vunpack.c.l.b16 %v610
      %v967 = vunpack.c.h.b16 %v610
      %v968 = vunpack.c.l.b16 %v611
      %v969 = vunpack.c.h.b16 %v611
      %v970 = vunpack.c.l.b16 %v612
      %v971 = vunpack.c.h.b16 %v612
      %v972 = vunpack.c.l.b16 %v613
      %v973 = vunpack.c.h.b16 %v613
      %v974 = vunpack.c.l.b16 %v614
      %v975 = vunpack.c.h.b16 %v614
      %v976 = vunpack.c.l.b16 %v615
      %v977 = vunpack.c.h.b16 %v615
      %v978 = vunpack.c.l.b16 %v616
      %v979 = vunpack.c.h.b16 %v616
      %v980 = vunpack.c.l.b16 %v617
      %v981 = vunpack.c.h.b16 %v617
      %v982 = vunpack.c.l.b16 %v618
      %v983 = vunpack.c.h.b16 %v618
      %v984 = vunpack.c.l.b16 %v619
      %v985 = vunpack.c.h.b16 %v619
      %v986 = vunpack.c.l.b16 %v620
      %v987 = vunpack.c.h.b16 %v620
      %v988 = vunpack.c.l.b16 %v621
      %v989 = vunpack.c.h.b16 %v621
      %v990 = vunpack.c.l.b16 %v622
      %v991 = vunpack.c.h.b16 %v622
      %v992 = vunpack.c.l.b16 %v623
      %v993 = vunpack.c.h.b16 %v623
      %v994 = vunpack.c.l.b16 %v624
      %v995 = vunpack.c.h.b16 %v624
      %v996 = vunpack.c.l.b16 %v625
      %v997 = vunpack.c.h.b16 %v625
      %v998 = vunpack.c.l.b16 %v626
      %v999 = vunpack.c.h.b16 %v626
      %v1000 = vunpack.c.l.b16 %v627
      %v1001 = vunpack.c.h.b16 %v627
      %v1002 = vunpack.c.l.b16 %v628
      %v1003 = vunpack.c.h.b16 %v628
      %v1004 = vunpack.c.l.b16 %v629
      %v1005 = vunpack.c.h.b16 %v629
      %v1006 = vunpack.c.l.b16 %v630
      %v1007 = vunpack.c.h.b16 %v630
      %v1008 = vunpack.c.l.b16 %v631
      %v1009 = vunpack.c.h.b16 %v631
      %v1010 = vunpack.c.l.b16 %v632
      %v1011 = vunpack.c.h.b16 %v632
      %v1012 = vunpack.c.l.b16 %v633
      %v1013 = vunpack.c.h.b16 %v633
      %v1014 = vunpack.c.l.b16 %v634
      %v1015 = vunpack.c.h.b16 %v634
      %v1016 = vunpack.c.l.b16 %v635
      %v1017 = vunpack.c.h.b16 %v635
      %v1018 = vunpack.c.l.b16 %v636
      %v1019 = vunpack.c.h.b16 %v636
      %v1020 = vunpack.c.l.b16 %v637
      %v1021 = vunpack.c.h.b16 %v637
      %v1022 = vunpack.c.l.b16 %v638
      %v1023 = vunpack.c.h.b16 %v638
      %v1024 = vunpack.c.l.b16 %v639
      %v1025 = vunpack.c.h.b16 %v639
      %v1026 = vunpack.c.l.b16 %v640
      %v1027 = vunpack.c.h.b16 %v640
      %v1028 = vunpack.c.l.b16 %v641
      %v1029 = vunpack.c.h.b16 %v641
      %v1030 = vunpack.c.l.b16 %v642
      %v1031 = vunpack.c.h.b16 %v642
      %v1032 = vunpack.c.l.b16 %v643
      %v1033 = vunpack.c.h.b16 %v643
      %v1034 = vunpack.c.l.b16 %v644
      %v1035 = vunpack.c.h.b16 %v644
      %v1036 = vunpack.c.l.b16 %v645
      %v1037 = vunpack.c.h.b16 %v645
      %v1038 = vunpack.c.l.b16 %v646
      %v1039 = vunpack.c.h.b16 %v646
      %v1040 = vunpack.c.l.b16 %v647
      %v1041 = vunpack.c.h.b16 %v647
      %v1042 = vunpack.c.l.b16 %v648
      %v1043 = vunpack.c.h.b16 %v648
      %v1044 = vunpack.c.l.b16 %v649
      %v1045 = vunpack.c.h.b16 %v649
      %v1046 = vunpack.c.l.b16 %v650
      %v1047 = vunpack.c.h.b16 %v650
      %v1048 = vunpack.c.l.b16 %v651
      %v1049 = vunpack.c.h.b16 %v651
      %v1050 = vunpack.c.l.b16 %v652
      %v1051 = vunpack.c.h.b16 %v652
      %v1052 = vunpack.c.l.b16 %v653
      %v1053 = vunpack.c.h.b16 %v653
      %v1054 = vunpack.c.l.b16 %v654
      %v1055 = vunpack.c.h.b16 %v654
      %v1056 = vunpack.c.l.b16 %v655
      %v1057 = vunpack.c.h.b16 %v655
      %v1058 = vunpack.c.l.b16 %v656
      %v1059 = vunpack.c.h.b16 %v656
      %v1060 = vpack.c.b16 %v806, %v804
      %v1061 = vpack.c.b16 %v807, %v805
      %v1062 = vpack.c.b16 %v810, %v808
      %v1063 = vpack.c.b16 %v811, %v809
      %v1064 = vpack.c.b16 %v814, %v812
      %v1065 = vpack.c.b16 %v815, %v813
      %v1066 = vpack.c.b16 %v818, %v816
      %v1067 = vpack.c.b16 %v819, %v817
      %v1068 = vpack.c.b16 %v822, %v820
      %v1069 = vpack.c.b16 %v823, %v821
      %v1070 = vpack.c.b16 %v826, %v824
      %v1071 = vpack.c.b16 %v827, %v825
      %v1072 = vpack.c.b16 %v830, %v828
      %v1073 = vpack.c.b16 %v831, %v829
      %v1074 = vpack.c.b16 %v834, %v832
      %v1075 = vpack.c.b16 %v835, %v833
      %v1076 = vpack.c.b16 %v838, %v836
      %v1077 = vpack.c.b16 %v839, %v837
      %v1078 = vpack.c.b16 %v842, %v840
      %v1079 = vpack.c.b16 %v843, %v841
      %v1080 = vpack.c.b16 %v846, %v844
      %v1081 = vpack.c.b16 %v847, %v845
      %v1082 = vpack.c.b16 %v850, %v848
      %v1083 = vpack.c.b16 %v851, %v849
      %v1084 = vpack.c.b16 %v854, %v852
      %v1085 = vpack.c.b16 %v855, %v853
      %v1086 = vpack.c.b16 %v858, %v856
      %v1087 = vpack.c.b16 %v859, %v857
      %v1088 = vpack.c.b16 %v862, %v860
      %v1089 = vpack.c.b16 %v863, %v861
      %v1090 = vpack.c.b16 %v866, %v864
      %v1091 = vpack.c.b16 %v867, %v865
      %v1092 = vpack.c.b16 %v870, %v868
      %v1093 = vpack.c.b16 %v871, %v869
      %v1094 = vpack.c.b16 %v874, %v872
      %v1095 = vpack.c.b16 %v875, %v873
      %v1096 = vpack.c.b16 %v878, %v876
      %v1097 = vpack.c.b16 %v879, %v877
      %v1098 = vpack.c.b16 %v882, %v880
      %v1099 = vpack.c.b16 %v883, %v881
      %v1100 = vpack.c.b16 %v886, %v884
      %v1101 = vpack.c.b16 %v887, %v885
      %v1102 = vpack.c.b16 %v890, %v888
      %v1103 = vpack.c.b16 %v891, %v889
      %v1104 = vpack.c.b16 %v894, %v892
      %v1105 = vpack.c.b16 %v895, %v893
      %v1106 = vpack.c.b16 %v898, %v896
      %v1107 = vpack.c.b16 %v899, %v897
      %v1108 = vpack.c.b16 %v902, %v900
      %v1109 = vpack.c.b16 %v903, %v901
      %v1110 = vpack.c.b16 %v906, %v904
      %v1111 = vpack.c.b16 %v907, %v905
      %v1112 = vpack.c.b16 %v910, %v908
      %v1113 = vpack.c.b16 %v911, %v909
      %v1114 = vpack.c.b16 %v914, %v912
      %v1115 = vpack.c.b16 %v915, %v913
      %v1116 = vpack.c.b16 %v918, %v916
      %v1117 = vpack.c.b16 %v919, %v917
      %v1118 = vpack.c.b16 %v922, %v920
      %v1119 = vpack.c.b16 %v923, %v921
      %v1120 = vpack.c.b16 %v926, %v924
      %v1121 = vpack.c.b16 %v927, %v925
      %v1122 = vpack.c.b16 %v930, %v928
      %v1123 = vpack.c.b16 %v931, %v929
      %v1124 = vpack.c.b16 %v934, %v932
      %v1125 = vpack.c.b16 %v935, %v933
      %v1126 = vpack.c.b16 %v938, %v936
      %v1127 = vpack.c.b16 %v939, %v937
      %v1128 = vpack.c.b16 %v942, %v940
      %v1129 = vpack.c.b16 %v943, %v941
      %v1130 = vpack.c.b16 %v946, %v944
      %v1131 = vpack.c.b16 %v947, %v945
      %v1132 = vpack.c.b16 %v950, %v948
      %v1133 = vpack.c.b16 %v951, %v949
      %v1134 = vpack.c.b16 %v954, %v952
      %v1135 = vpack.c.b16 %v955, %v953
      %v1136 = vpack.c.b16 %v958, %v956
      %v1137 = vpack.c.b16 %v959, %v957
      %v1138 = vpack.c.b16 %v962, %v960
      %v1139 = vpack.c.b16 %v963, %v961
      %v1140 = vpack.c.b16 %v966, %v964
      %v1141 = vpack.c.b16 %v967, %v965
      %v1142 = vpack.c.b16 %v970, %v968
      %v1143 = vpack.c.b16 %v971, %v969
      %v1144 = vpack.c.b16 %v974, %v972
      %v1145 = vpack.c.b16 %v975, %v973
      %v1146 = vpack.c.b16 %v978, %v976
      %v1147 = vpack.c.b16 %v979, %v977
      %v1148 = vpack.c.b16 %v982, %v980
      %v1149 = vpack.c.b16 %v983, %v981
      %v1150 = vpack.c.b16 %v986, %v984
      %v1151 = vpack.c.b16 %v987, %v985
      %v1152 = vpack.c.b16 %v990, %v988
      %v1153 = vpack.c.b16 %v991, %v989
      %v1154 = vpack.c.b16 %v994, %v992
      %v1155 = vpack.c.b16 %v995, %v993
      %v1156 = vpack.c.b16 %v998, %v996
      %v1157 = vpack.c.b16 %v999, %v997
      %v1158 = vpack.c.b16 %v1002, %v1000
      %v1159 = vpack.c.b16 %v1003, %v1001
      %v1160 = vpack.c.b16 %v1006, %v1004
      %v1161 = vpack.c.b16 %v1007, %v1005
      %v1162 = vpack.c.b16 %v1010, %v1008
      %v1163 = vpack.c.b16 %v1011, %v1009
      %v1164 = vpack.c.b16 %v1014, %v1012
      %v1165 = vpack.c.b16 %v1015, %v1013
      %v1166 = vpack.c.b16 %v1018, %v1016
      %v1167 = vpack.c.b16 %v1019, %v1017
      %v1168 = vpack.c.b16 %v1022, %v1020
      %v1169 = vpack.c.b16 %v1023, %v1021
      %v1170 = vpack.c.b16 %v1026, %v1024
      %v1171 = vpack.c.b16 %v1027, %v1025
      %v1172 = vpack.c.b16 %v1030, %v1028
      %v1173 = vpack.c.b16 %v1031, %v1029
      %v1174 = vpack.c.b16 %v1034, %v1032
      %v1175 = vpack.c.b16 %v1035, %v1033
      %v1176 = vpack.c.b16 %v1038, %v1036
      %v1177 = vpack.c.b16 %v1039, %v1037
      %v1178 = vpack.c.b16 %v1042, %v1040
      %v1179 = vpack.c.b16 %v1043, %v1041
      %v1180 = vpack.c.b16 %v1046, %v1044
      %v1181 = vpack.c.b16 %v1047, %v1045
      %v1182 = vpack.c.b16 %v1050, %v1048
      %v1183 = vpack.c.b16 %v1051, %v1049
      %v1184 = vpack.c.b16 %v1054, %v1052
      %v1185 = vpack.c.b16 %v1055, %v1053
      %v1186 = vpack.c.b16 %v1058, %v1056
      %v1187 = vpack.c.b16 %v1059, %v1057
      %v1271 = vunpack.c.l.b16 %v657
      %v1272 = vunpack.c.l.b16 %v658
      %v1273 = vunpack.c.l.b16 %v659
      %v1274 = vunpack.c.l.b16 %v660
      %v1275 = vunpack.c.l.b16 %v661
      %v1276 = vunpack.c.l.b16 %v662
      %v1277 = vunpack.c.l.b16 %v663
      %v1278 = vunpack.c.l.b16 %v664
      %v1279 = vunpack.c.l.b16 %v665
      %v1280 = vunpack.c.l.b16 %v666
      %v1281 = vunpack.c.l.b16 %v667
      %v1282 = vunpack.c.l.b16 %v668
      %v1283 = vunpack.c.l.b16 %v669
      %v1284 = vunpack.c.l.b16 %v670
      %v1285 = vunpack.c.l.b16 %v671
      %v1286 = vunpack.c.l.b16 %v672
      %v1287 = vunpack.c.l.b16 %v673
      %v1288 = vunpack.c.l.b16 %v674
      %v1289 = vunpack.c.l.b16 %v675
      %v1290 = vpack.c.b16 %v1272, %v1271
      %v1291 = vpack.c.b16 %v1274, %v1273
      %v1292 = vpack.c.b16 %v1276, %v1275
      %v1293 = vpack.c.b16 %v1278, %v1277
      %v1294 = vpack.c.b16 %v1280, %v1279
      %v1295 = vpack.c.b16 %v1282, %v1281
      %v1296 = vpack.c.b16 %v1284, %v1283
      %v1297 = vpack.c.b16 %v1286, %v1285
      %v1298 = vpack.c.b16 %v1288, %v1287
      %v1299 = vpack.c.b16 %v1289, %v1289
      %vm1309 = vcmask 154624
      %v1311 = vsel %vm1309, %v1061, 0
      %v1314 = vsel %vm1309, %v1063, 0
      %v1317 = vsel %vm1309, %v1065, 0
      %v1320 = vsel %vm1309, %v1067, 0
      %v1323 = vsel %vm1309, %v1069, 0
      %v1326 = vsel %vm1309, %v1071, 0
      %v1329 = vsel %vm1309, %v1073, 0
      %v1332 = vsel %vm1309, %v1075, 0
      %v1335 = vsel %vm1309, %v1077, 0
      %v1338 = vsel %vm1309, %v1079, 0
      %v1341 = vsel %vm1309, %v1081, 0
      %v1344 = vsel %vm1309, %v1083, 0
      %v1347 = vsel %vm1309, %v1085, 0
      %v1350 = vsel %vm1309, %v1087, 0
      %v1353 = vsel %vm1309, %v1089, 0
      %v1356 = vsel %vm1309, %v1091, 0
      %v1359 = vsel %vm1309, %v1093, 0
      %v1362 = vsel %vm1309, %v1095, 0
      %v1365 = vsel %vm1309, %v1097, 0
      %v1368 = vsel %vm1309, %v1099, 0
      %v1371 = vsel %vm1309, %v1101, 0
      %v1374 = vsel %vm1309, %v1103, 0
      %v1377 = vsel %vm1309, %v1105, 0
      %v1380 = vsel %vm1309, %v1107, 0
      %v1383 = vsel %vm1309, %v1109, 0
      %v1386 = vsel %vm1309, %v1111, 0
      %v1389 = vsel %vm1309, %v1113, 0
      %v1392 = vsel %vm1309, %v1115, 0
      %v1395 = vsel %vm1309, %v1117, 0
      %v1398 = vsel %vm1309, %v1119, 0
      %v1401 = vsel %vm1309, %v1121, 0
      %v1404 = vsel %vm1309, %v1123, 0
      %v1407 = vsel %vm1309, %v1125, 0
      %v1410 = vsel %vm1309, %v1127, 0
      %v1413 = vsel %vm1309, %v1129, 0
      %v1416 = vsel %vm1309, %v1131, 0
      %v1419 = vsel %vm1309, %v1133, 0
      %v1422 = vsel %vm1309, %v1135, 0
      %v1425 = vsel %vm1309, %v1137, 0
      %v1428 = vsel %vm1309, %v1139, 0
      %v1431 = vsel %vm1309, %v1141, 0
      %v1434 = vsel %vm1309, %v1143, 0
      %v1437 = vsel %vm1309, %v1145, 0
      %v1440 = vsel %vm1309, %v1147, 0
      %v1443 = vsel %vm1309, %v1149, 0
      %v1446 = vsel %vm1309, %v1151, 0
      %v1449 = vsel %vm1309, %v1153, 0
      %v1452 = vsel %vm1309, %v1155, 0
      %v1455 = vsel %vm1309, %v1157, 0
      %v1458 = vsel %vm1309, %v1159, 0
      %v1461 = vsel %vm1309, %v1161, 0
      %v1464 = vsel %vm1309, %v1163, 0
      %v1467 = vsel %vm1309, %v1165, 0
      %v1470 = vsel %vm1309, %v1167, 0
      %v1473 = vsel %vm1309, %v1169, 0
      %v1476 = vsel %vm1309, %v1171, 0
      %v1479 = vsel %vm1309, %v1173, 0
      %v1482 = vsel %vm1309, %v1175, 0
      %v1485 = vsel %vm1309, %v1177, 0
      %v1488 = vsel %vm1309, %v1179, 0
      %v1491 = vsel %vm1309, %v1181, 0
      %v1494 = vsel %vm1309, %v1183, 0
      %v1497 = vsel %vm1309, %v1185, 0
      %v1500 = vsel %vm1309, %v1187, 0
      %vm1502 = vcmask 1040384
      %vm1503 = vcmask 1041408
      %v1504 = vsel %vm1502, 4294967295, 65535
      %v1505 = vsel %vm1503, %v1504, 0
      %v1507 = vand.u32 %v1299, %v1505
      %1509 = vmatprep.subr.bf16.mxu0 0
      %1510 = vmatpush1.bf16.msra.mxu0 %v1290
      %1511 = vmatprep.subr.bf16.mxu0 0
      %1512 = vmatpush1.bf16.msra.mxu0 %v1291
      %1513 = vmatprep.subr.bf16.mxu0 0
      %1514 = vmatpush1.bf16.msra.mxu0 %v1292
      %1515 = vmatprep.subr.bf16.mxu0 0
      %1516 = vmatpush1.bf16.msra.mxu0 %v1293
      %1517 = vmatprep.subr.bf16.mxu0 0
      %1518 = vmatpush1.bf16.msra.mxu0 %v1294
      %1519 = vmatprep.subr.bf16.mxu0 0
      %1520 = vmatpush1.bf16.msra.mxu0 %v1295
      %1521 = vmatprep.subr.bf16.mxu0 0
      %1522 = vmatpush1.bf16.msra.mxu0 %v1296
      %1523 = vmatprep.subr.bf16.mxu0 0
      %1524 = vmatpush1.bf16.msra.mxu0 %v1297
      %1525 = vmatprep.subr.bf16.mxu0 0
      %1526 = vmatpush1.bf16.msra.mxu0 %v1298
      %1527 = vmatprep.subr.bf16.mxu0 0
      %1528 = vmatpush1.bf16.msra.mxu0 %v1507
      %1529 = vmatprep.subr.bf16.mxu0 0
      %1530 = vmatpush1.bf16.msra.mxu0 0
      %1531 = vmatprep.subr.bf16.mxu0 0
      %1532 = vmatpush1.bf16.msra.mxu0 0
      %1533 = vmatprep.subr.bf16.mxu0 0
      %1534 = vmatpush1.bf16.msra.mxu0 0
      %1535 = vmatprep.subr.bf16.mxu0 0
      %1536 = vmatpush1.bf16.msra.mxu0 0
      %1537 = vmatprep.subr.bf16.mxu0 0
      %1538 = vmatpush1.bf16.msra.mxu0 0
      %1539 = vmatprep.subr.bf16.mxu0 0
      %1540 = vmatpush1.bf16.msra.mxu0 0
      %1541 = vmatprep.mubr.bf16.mxu0 %v1311
      %1542 = vmatmul.mubr.bf16.gmra.mrb[0].mxu0 %v1060
      %v1543 = vpop.f32.mrb[0].mxu0
      %v1544 = vadd.f32 0.0, %v1543
      %v1545 = vpop.f32.mrb[0].mxu0
      %v1546 = vpop.f32.mrb[0].mxu0
      %v1547 = vadd.f32 0.0, %v1546
      %v1548 = vpop.f32.mrb[0].mxu0
      %1549 = vmatprep.mubr.bf16.mxu0 %v1314
      %1550 = vmatmul.mubr.bf16.gmra.mrb[0].mxu0 %v1062
      %v1551 = vpop.f32.mrb[0].mxu0
      %v1552 = vadd.f32 0.0, %v1551
      %v1553 = vpop.f32.mrb[0].mxu0
      %v1554 = vpop.f32.mrb[0].mxu0
      %v1555 = vadd.f32 0.0, %v1554
      %v1556 = vpop.f32.mrb[0].mxu0
      %1557 = vmatprep.mubr.bf16.mxu0 %v1317
      %1558 = vmatmul.mubr.bf16.gmra.mrb[0].mxu0 %v1064
      %v1559 = vpop.f32.mrb[0].mxu0
      %v1560 = vadd.f32 0.0, %v1559
      %v1561 = vpop.f32.mrb[0].mxu0
      %v1562 = vpop.f32.mrb[0].mxu0
      %v1563 = vadd.f32 0.0, %v1562
      %v1564 = vpop.f32.mrb[0].mxu0
      %1565 = vmatprep.mubr.bf16.mxu0 %v1320
      %1566 = vmatmul.mubr.bf16.gmra.mrb[0].mxu0 %v1066
      %v1567 = vpop.f32.mrb[0].mxu0
      %v1568 = vadd.f32 0.0, %v1567
      %v1569 = vpop.f32.mrb[0].mxu0
      %v1570 = vpop.f32.mrb[0].mxu0
      %v1571 = vadd.f32 0.0, %v1570
      %v1572 = vpop.f32.mrb[0].mxu0
      %1573 = vmatprep.mubr.bf16.mxu0 %v1323
      %1574 = vmatmul.mubr.bf16.gmra.mrb[0].mxu0 %v1068
      %v1575 = vpop.f32.mrb[0].mxu0
      %v1576 = vadd.f32 0.0, %v1575
      %v1577 = vpop.f32.mrb[0].mxu0
      %v1578 = vpop.f32.mrb[0].mxu0
      %v1579 = vadd.f32 0.0, %v1578
      %v1580 = vpop.f32.mrb[0].mxu0
      %1581 = vmatprep.mubr.bf16.mxu0 %v1326
      %1582 = vmatmul.mubr.bf16.gmra.mrb[0].mxu0 %v1070
      %v1583 = vpop.f32.mrb[0].mxu0
      %v1584 = vadd.f32 0.0, %v1583
      %v1585 = vpop.f32.mrb[0].mxu0
      %v1586 = vpop.f32.mrb[0].mxu0
      %v1587 = vadd.f32 0.0, %v1586
      %v1588 = vpop.f32.mrb[0].mxu0
      %1589 = vmatprep.mubr.bf16.mxu0 %v1329
      %1590 = vmatmul.mubr.bf16.gmra.mrb[0].mxu0 %v1072
      %v1591 = vpop.f32.mrb[0].mxu0
      %v1592 = vadd.f32 0.0, %v1591
      %v1593 = vpop.f32.mrb[0].mxu0
      %v1594 = vpop.f32.mrb[0].mxu0
      %v1595 = vadd.f32 0.0, %v1594
      %v1596 = vpop.f32.mrb[0].mxu0
      %1597 = vmatprep.mubr.bf16.mxu0 %v1332
      %1598 = vmatmul.mubr.bf16.gmra.mrb[0].mxu0 %v1074
      %v1599 = vpop.f32.mrb[0].mxu0
      %v1600 = vadd.f32 0.0, %v1599
      %v1601 = vpop.f32.mrb[0].mxu0
      %v1602 = vpop.f32.mrb[0].mxu0
      %v1603 = vadd.f32 0.0, %v1602
      %v1604 = vpop.f32.mrb[0].mxu0
      %1605 = vmatprep.mubr.bf16.mxu0 %v1335
      %1606 = vmatmul.mubr.bf16.gmra.mrb[0].mxu0 %v1076
      %v1607 = vpop.f32.mrb[0].mxu0
      %v1608 = vadd.f32 0.0, %v1607
      %v1609 = vpop.f32.mrb[0].mxu0
      %v1610 = vpop.f32.mrb[0].mxu0
      %v1611 = vadd.f32 0.0, %v1610
      %v1612 = vpop.f32.mrb[0].mxu0
      %1613 = vmatprep.mubr.bf16.mxu0 %v1338
      %1614 = vmatmul.mubr.bf16.gmra.mrb[0].mxu0 %v1078
      %v1615 = vpop.f32.mrb[0].mxu0
      %v1616 = vadd.f32 0.0, %v1615
      %v1617 = vpop.f32.mrb[0].mxu0
      %v1618 = vpop.f32.mrb[0].mxu0
      %v1619 = vadd.f32 0.0, %v1618
      %v1620 = vpop.f32.mrb[0].mxu0
      %1621 = vmatprep.mubr.bf16.mxu0 %v1341
      %1622 = vmatmul.mubr.bf16.gmra.mrb[0].mxu0 %v1080
      %v1623 = vpop.f32.mrb[0].mxu0
      %v1624 = vadd.f32 0.0, %v1623
      %v1625 = vpop.f32.mrb[0].mxu0
      %v1626 = vpop.f32.mrb[0].mxu0
      %v1627 = vadd.f32 0.0, %v1626
      %v1628 = vpop.f32.mrb[0].mxu0
      %1629 = vmatprep.mubr.bf16.mxu0 %v1344
      %1630 = vmatmul.mubr.bf16.gmra.mrb[0].mxu0 %v1082
      %v1631 = vpop.f32.mrb[0].mxu0
      %v1632 = vadd.f32 0.0, %v1631
      %v1633 = vpop.f32.mrb[0].mxu0
      %v1634 = vpop.f32.mrb[0].mxu0
      %v1635 = vadd.f32 0.0, %v1634
      %v1636 = vpop.f32.mrb[0].mxu0
      %1637 = vmatprep.mubr.bf16.mxu0 %v1347
      %1638 = vmatmul.mubr.bf16.gmra.mrb[0].mxu0 %v1084
      %v1639 = vpop.f32.mrb[0].mxu0
      %v1640 = vadd.f32 0.0, %v1639
      %v1641 = vpop.f32.mrb[0].mxu0
      %v1642 = vpop.f32.mrb[0].mxu0
      %v1643 = vadd.f32 0.0, %v1642
      %v1644 = vpop.f32.mrb[0].mxu0
      %1645 = vmatprep.mubr.bf16.mxu0 %v1350
      %1646 = vmatmul.mubr.bf16.gmra.mrb[0].mxu0 %v1086
      %v1647 = vpop.f32.mrb[0].mxu0
      %v1648 = vadd.f32 0.0, %v1647
      %v1649 = vpop.f32.mrb[0].mxu0
      %v1650 = vpop.f32.mrb[0].mxu0
      %v1651 = vadd.f32 0.0, %v1650
      %v1652 = vpop.f32.mrb[0].mxu0
      %1653 = vmatprep.mubr.bf16.mxu0 %v1353
      %1654 = vmatmul.mubr.bf16.gmra.mrb[0].mxu0 %v1088
      %v1655 = vpop.f32.mrb[0].mxu0
      %v1656 = vadd.f32 0.0, %v1655
      %v1657 = vpop.f32.mrb[0].mxu0
      %v1658 = vpop.f32.mrb[0].mxu0
      %v1659 = vadd.f32 0.0, %v1658
      %v1660 = vpop.f32.mrb[0].mxu0
      %1661 = vmatprep.mubr.bf16.mxu0 %v1356
      %1662 = vmatmul.mubr.bf16.gmra.mrb[0].mxu0 %v1090
      %v1663 = vpop.f32.mrb[0].mxu0
      %v1664 = vadd.f32 0.0, %v1663
      %v1665 = vpop.f32.mrb[0].mxu0
      %v1666 = vpop.f32.mrb[0].mxu0
      %v1667 = vadd.f32 0.0, %v1666
      %v1668 = vpop.f32.mrb[0].mxu0
      %1669 = vmatprep.mubr.bf16.mxu0 %v1359
      %1670 = vmatmul.mubr.bf16.gmra.mrb[0].mxu0 %v1092
      %v1671 = vpop.f32.mrb[0].mxu0
      %v1672 = vadd.f32 0.0, %v1671
      %v1673 = vpop.f32.mrb[0].mxu0
      %v1674 = vpop.f32.mrb[0].mxu0
      %v1675 = vadd.f32 0.0, %v1674
      %v1676 = vpop.f32.mrb[0].mxu0
      %1677 = vmatprep.mubr.bf16.mxu0 %v1362
      %1678 = vmatmul.mubr.bf16.gmra.mrb[0].mxu0 %v1094
      %v1679 = vpop.f32.mrb[0].mxu0
      %v1680 = vadd.f32 0.0, %v1679
      %v1681 = vpop.f32.mrb[0].mxu0
      %v1682 = vpop.f32.mrb[0].mxu0
      %v1683 = vadd.f32 0.0, %v1682
      %v1684 = vpop.f32.mrb[0].mxu0
      %1685 = vmatprep.mubr.bf16.mxu0 %v1365
      %1686 = vmatmul.mubr.bf16.gmra.mrb[0].mxu0 %v1096
      %v1687 = vpop.f32.mrb[0].mxu0
      %v1688 = vadd.f32 0.0, %v1687
      %v1689 = vpop.f32.mrb[0].mxu0
      %v1690 = vpop.f32.mrb[0].mxu0
      %v1691 = vadd.f32 0.0, %v1690
      %v1692 = vpop.f32.mrb[0].mxu0
      %1693 = vmatprep.mubr.bf16.mxu0 %v1368
      %1694 = vmatmul.mubr.bf16.gmra.mrb[0].mxu0 %v1098
      %v1695 = vpop.f32.mrb[0].mxu0
      %v1696 = vadd.f32 0.0, %v1695
      %v1697 = vpop.f32.mrb[0].mxu0
      %v1698 = vpop.f32.mrb[0].mxu0
      %v1699 = vadd.f32 0.0, %v1698
      %v1700 = vpop.f32.mrb[0].mxu0
      %1701 = vmatprep.mubr.bf16.mxu0 %v1371
      %1702 = vmatmul.mubr.bf16.gmra.mrb[0].mxu0 %v1100
      %v1703 = vpop.f32.mrb[0].mxu0
      %v1704 = vadd.f32 0.0, %v1703
      %v1705 = vpop.f32.mrb[0].mxu0
      %v1706 = vpop.f32.mrb[0].mxu0
      %v1707 = vadd.f32 0.0, %v1706
      %v1708 = vpop.f32.mrb[0].mxu0
      %1709 = vmatprep.mubr.bf16.mxu0 %v1374
      %1710 = vmatmul.mubr.bf16.gmra.mrb[0].mxu0 %v1102
      %v1711 = vpop.f32.mrb[0].mxu0
      %v1712 = vadd.f32 0.0, %v1711
      %v1713 = vpop.f32.mrb[0].mxu0
      %v1714 = vpop.f32.mrb[0].mxu0
      %v1715 = vadd.f32 0.0, %v1714
      %v1716 = vpop.f32.mrb[0].mxu0
      %1717 = vmatprep.mubr.bf16.mxu0 %v1377
      %1718 = vmatmul.mubr.bf16.gmra.mrb[0].mxu0 %v1104
      %v1719 = vpop.f32.mrb[0].mxu0
      %v1720 = vadd.f32 0.0, %v1719
      %v1721 = vpop.f32.mrb[0].mxu0
      %v1722 = vpop.f32.mrb[0].mxu0
      %v1723 = vadd.f32 0.0, %v1722
      %v1724 = vpop.f32.mrb[0].mxu0
      %1725 = vmatprep.mubr.bf16.mxu0 %v1380
      %1726 = vmatmul.mubr.bf16.gmra.mrb[0].mxu0 %v1106
      %v1727 = vpop.f32.mrb[0].mxu0
      %v1728 = vadd.f32 0.0, %v1727
      %v1729 = vpop.f32.mrb[0].mxu0
      %v1730 = vpop.f32.mrb[0].mxu0
      %v1731 = vadd.f32 0.0, %v1730
      %v1732 = vpop.f32.mrb[0].mxu0
      %1733 = vmatprep.mubr.bf16.mxu0 %v1383
      %1734 = vmatmul.mubr.bf16.gmra.mrb[0].mxu0 %v1108
      %v1735 = vpop.f32.mrb[0].mxu0
      %v1736 = vadd.f32 0.0, %v1735
      %v1737 = vpop.f32.mrb[0].mxu0
      %v1738 = vpop.f32.mrb[0].mxu0
      %v1739 = vadd.f32 0.0, %v1738
      %v1740 = vpop.f32.mrb[0].mxu0
      %1741 = vmatprep.mubr.bf16.mxu0 %v1386
      %1742 = vmatmul.mubr.bf16.gmra.mrb[0].mxu0 %v1110
      %v1743 = vpop.f32.mrb[0].mxu0
      %v1744 = vadd.f32 0.0, %v1743
      %v1745 = vpop.f32.mrb[0].mxu0
      %v1746 = vpop.f32.mrb[0].mxu0
      %v1747 = vadd.f32 0.0, %v1746
      %v1748 = vpop.f32.mrb[0].mxu0
      %1749 = vmatprep.mubr.bf16.mxu0 %v1389
      %1750 = vmatmul.mubr.bf16.gmra.mrb[0].mxu0 %v1112
      %v1751 = vpop.f32.mrb[0].mxu0
      %v1752 = vadd.f32 0.0, %v1751
      %v1753 = vpop.f32.mrb[0].mxu0
      %v1754 = vpop.f32.mrb[0].mxu0
      %v1755 = vadd.f32 0.0, %v1754
      %v1756 = vpop.f32.mrb[0].mxu0
      %1757 = vmatprep.mubr.bf16.mxu0 %v1392
      %1758 = vmatmul.mubr.bf16.gmra.mrb[0].mxu0 %v1114
      %v1759 = vpop.f32.mrb[0].mxu0
      %v1760 = vadd.f32 0.0, %v1759
      %v1761 = vpop.f32.mrb[0].mxu0
      %v1762 = vpop.f32.mrb[0].mxu0
      %v1763 = vadd.f32 0.0, %v1762
      %v1764 = vpop.f32.mrb[0].mxu0
      %1765 = vmatprep.mubr.bf16.mxu0 %v1395
      %1766 = vmatmul.mubr.bf16.gmra.mrb[0].mxu0 %v1116
      %v1767 = vpop.f32.mrb[0].mxu0
      %v1768 = vadd.f32 0.0, %v1767
      %v1769 = vpop.f32.mrb[0].mxu0
      %v1770 = vpop.f32.mrb[0].mxu0
      %v1771 = vadd.f32 0.0, %v1770
      %v1772 = vpop.f32.mrb[0].mxu0
      %1773 = vmatprep.mubr.bf16.mxu0 %v1398
      %1774 = vmatmul.mubr.bf16.gmra.mrb[0].mxu0 %v1118
      %v1775 = vpop.f32.mrb[0].mxu0
      %v1776 = vadd.f32 0.0, %v1775
      %v1777 = vpop.f32.mrb[0].mxu0
      %v1778 = vpop.f32.mrb[0].mxu0
      %v1779 = vadd.f32 0.0, %v1778
      %v1780 = vpop.f32.mrb[0].mxu0
      %1781 = vmatprep.mubr.bf16.mxu0 %v1401
      %1782 = vmatmul.mubr.bf16.gmra.mrb[0].mxu0 %v1120
      %v1783 = vpop.f32.mrb[0].mxu0
      %v1784 = vadd.f32 0.0, %v1783
      %v1785 = vpop.f32.mrb[0].mxu0
      %v1786 = vpop.f32.mrb[0].mxu0
      %v1787 = vadd.f32 0.0, %v1786
      %v1788 = vpop.f32.mrb[0].mxu0
      %1789 = vmatprep.mubr.bf16.mxu0 %v1404
      %1790 = vmatmul.mubr.bf16.gmra.mrb[0].mxu0 %v1122
      %v1791 = vpop.f32.mrb[0].mxu0
      %v1792 = vadd.f32 0.0, %v1791
      %v1793 = vpop.f32.mrb[0].mxu0
      %v1794 = vpop.f32.mrb[0].mxu0
      %v1795 = vadd.f32 0.0, %v1794
      %v1796 = vpop.f32.mrb[0].mxu0
      %1797 = vmatprep.mubr.bf16.mxu0 %v1407
      %1798 = vmatmul.mubr.bf16.gmra.mrb[0].mxu0 %v1124
      %v1799 = vpop.f32.mrb[0].mxu0
      %v1800 = vadd.f32 0.0, %v1799
      %v1801 = vpop.f32.mrb[0].mxu0
      %v1802 = vpop.f32.mrb[0].mxu0
      %v1803 = vadd.f32 0.0, %v1802
      %v1804 = vpop.f32.mrb[0].mxu0
      %1805 = vmatprep.mubr.bf16.mxu0 %v1410
      %1806 = vmatmul.mubr.bf16.gmra.mrb[0].mxu0 %v1126
      %v1807 = vpop.f32.mrb[0].mxu0
      %v1808 = vadd.f32 0.0, %v1807
      %v1809 = vpop.f32.mrb[0].mxu0
      %v1810 = vpop.f32.mrb[0].mxu0
      %v1811 = vadd.f32 0.0, %v1810
      %v1812 = vpop.f32.mrb[0].mxu0
      %1813 = vmatprep.mubr.bf16.mxu0 %v1413
      %1814 = vmatmul.mubr.bf16.gmra.mrb[0].mxu0 %v1128
      %v1815 = vpop.f32.mrb[0].mxu0
      %v1816 = vadd.f32 0.0, %v1815
      %v1817 = vpop.f32.mrb[0].mxu0
      %v1818 = vpop.f32.mrb[0].mxu0
      %v1819 = vadd.f32 0.0, %v1818
      %v1820 = vpop.f32.mrb[0].mxu0
      %1821 = vmatprep.mubr.bf16.mxu0 %v1416
      %1822 = vmatmul.mubr.bf16.gmra.mrb[0].mxu0 %v1130
      %v1823 = vpop.f32.mrb[0].mxu0
      %v1824 = vadd.f32 0.0, %v1823
      %v1825 = vpop.f32.mrb[0].mxu0
      %v1826 = vpop.f32.mrb[0].mxu0
      %v1827 = vadd.f32 0.0, %v1826
      %v1828 = vpop.f32.mrb[0].mxu0
      %1829 = vmatprep.mubr.bf16.mxu0 %v1419
      %1830 = vmatmul.mubr.bf16.gmra.mrb[0].mxu0 %v1132
      %v1831 = vpop.f32.mrb[0].mxu0
      %v1832 = vadd.f32 0.0, %v1831
      %v1833 = vpop.f32.mrb[0].mxu0
      %v1834 = vpop.f32.mrb[0].mxu0
      %v1835 = vadd.f32 0.0, %v1834
      %v1836 = vpop.f32.mrb[0].mxu0
      %1837 = vmatprep.mubr.bf16.mxu0 %v1422
      %1838 = vmatmul.mubr.bf16.gmra.mrb[0].mxu0 %v1134
      %v1839 = vpop.f32.mrb[0].mxu0
      %v1840 = vadd.f32 0.0, %v1839
      %v1841 = vpop.f32.mrb[0].mxu0
      %v1842 = vpop.f32.mrb[0].mxu0
      %v1843 = vadd.f32 0.0, %v1842
      %v1844 = vpop.f32.mrb[0].mxu0
      %1845 = vmatprep.mubr.bf16.mxu0 %v1425
      %1846 = vmatmul.mubr.bf16.gmra.mrb[0].mxu0 %v1136
      %v1847 = vpop.f32.mrb[0].mxu0
      %v1848 = vadd.f32 0.0, %v1847
      %v1849 = vpop.f32.mrb[0].mxu0
      %v1850 = vpop.f32.mrb[0].mxu0
      %v1851 = vadd.f32 0.0, %v1850
      %v1852 = vpop.f32.mrb[0].mxu0
      %1853 = vmatprep.mubr.bf16.mxu0 %v1428
      %1854 = vmatmul.mubr.bf16.gmra.mrb[0].mxu0 %v1138
      %v1855 = vpop.f32.mrb[0].mxu0
      %v1856 = vadd.f32 0.0, %v1855
      %v1857 = vpop.f32.mrb[0].mxu0
      %v1858 = vpop.f32.mrb[0].mxu0
      %v1859 = vadd.f32 0.0, %v1858
      %v1860 = vpop.f32.mrb[0].mxu0
      %1861 = vmatprep.mubr.bf16.mxu0 %v1431
      %1862 = vmatmul.mubr.bf16.gmra.mrb[0].mxu0 %v1140
      %v1863 = vpop.f32.mrb[0].mxu0
      %v1864 = vadd.f32 0.0, %v1863
      %v1865 = vpop.f32.mrb[0].mxu0
      %v1866 = vpop.f32.mrb[0].mxu0
      %v1867 = vadd.f32 0.0, %v1866
      %v1868 = vpop.f32.mrb[0].mxu0
      %1869 = vmatprep.mubr.bf16.mxu0 %v1434
      %1870 = vmatmul.mubr.bf16.gmra.mrb[0].mxu0 %v1142
      %v1871 = vpop.f32.mrb[0].mxu0
      %v1872 = vadd.f32 0.0, %v1871
      %v1873 = vpop.f32.mrb[0].mxu0
      %v1874 = vpop.f32.mrb[0].mxu0
      %v1875 = vadd.f32 0.0, %v1874
      %v1876 = vpop.f32.mrb[0].mxu0
      %1877 = vmatprep.mubr.bf16.mxu0 %v1437
      %1878 = vmatmul.mubr.bf16.gmra.mrb[0].mxu0 %v1144
      %v1879 = vpop.f32.mrb[0].mxu0
      %v1880 = vadd.f32 0.0, %v1879
      %v1881 = vpop.f32.mrb[0].mxu0
      %v1882 = vpop.f32.mrb[0].mxu0
      %v1883 = vadd.f32 0.0, %v1882
      %v1884 = vpop.f32.mrb[0].mxu0
      %1885 = vmatprep.mubr.bf16.mxu0 %v1440
      %1886 = vmatmul.mubr.bf16.gmra.mrb[0].mxu0 %v1146
      %v1887 = vpop.f32.mrb[0].mxu0
      %v1888 = vadd.f32 0.0, %v1887
      %v1889 = vpop.f32.mrb[0].mxu0
      %v1890 = vpop.f32.mrb[0].mxu0
      %v1891 = vadd.f32 0.0, %v1890
      %v1892 = vpop.f32.mrb[0].mxu0
      %1893 = vmatprep.mubr.bf16.mxu0 %v1443
      %1894 = vmatmul.mubr.bf16.gmra.mrb[0].mxu0 %v1148
      %v1895 = vpop.f32.mrb[0].mxu0
      %v1896 = vadd.f32 0.0, %v1895
      %v1897 = vpop.f32.mrb[0].mxu0
      %v1898 = vpop.f32.mrb[0].mxu0
      %v1899 = vadd.f32 0.0, %v1898
      %v1900 = vpop.f32.mrb[0].mxu0
      %1901 = vmatprep.mubr.bf16.mxu0 %v1446
      %1902 = vmatmul.mubr.bf16.gmra.mrb[0].mxu0 %v1150
      %v1903 = vpop.f32.mrb[0].mxu0
      %v1904 = vadd.f32 0.0, %v1903
      %v1905 = vpop.f32.mrb[0].mxu0
      %v1906 = vpop.f32.mrb[0].mxu0
      %v1907 = vadd.f32 0.0, %v1906
      %v1908 = vpop.f32.mrb[0].mxu0
      %1909 = vmatprep.mubr.bf16.mxu0 %v1449
      %1910 = vmatmul.mubr.bf16.gmra.mrb[0].mxu0 %v1152
      %v1911 = vpop.f32.mrb[0].mxu0
      %v1912 = vadd.f32 0.0, %v1911
      %v1913 = vpop.f32.mrb[0].mxu0
      %v1914 = vpop.f32.mrb[0].mxu0
      %v1915 = vadd.f32 0.0, %v1914
      %v1916 = vpop.f32.mrb[0].mxu0
      %1917 = vmatprep.mubr.bf16.mxu0 %v1452
      %1918 = vmatmul.mubr.bf16.gmra.mrb[0].mxu0 %v1154
      %v1919 = vpop.f32.mrb[0].mxu0
      %v1920 = vadd.f32 0.0, %v1919
      %v1921 = vpop.f32.mrb[0].mxu0
      %v1922 = vpop.f32.mrb[0].mxu0
      %v1923 = vadd.f32 0.0, %v1922
      %v1924 = vpop.f32.mrb[0].mxu0
      %1925 = vmatprep.mubr.bf16.mxu0 %v1455
      %1926 = vmatmul.mubr.bf16.gmra.mrb[0].mxu0 %v1156
      %v1927 = vpop.f32.mrb[0].mxu0
      %v1928 = vadd.f32 0.0, %v1927
      %v1929 = vpop.f32.mrb[0].mxu0
      %v1930 = vpop.f32.mrb[0].mxu0
      %v1931 = vadd.f32 0.0, %v1930
      %v1932 = vpop.f32.mrb[0].mxu0
      %1933 = vmatprep.mubr.bf16.mxu0 %v1458
      %1934 = vmatmul.mubr.bf16.gmra.mrb[0].mxu0 %v1158
      %v1935 = vpop.f32.mrb[0].mxu0
      %v1936 = vadd.f32 0.0, %v1935
      %v1937 = vpop.f32.mrb[0].mxu0
      %v1938 = vpop.f32.mrb[0].mxu0
      %v1939 = vadd.f32 0.0, %v1938
      %v1940 = vpop.f32.mrb[0].mxu0
      %1941 = vmatprep.mubr.bf16.mxu0 %v1461
      %1942 = vmatmul.mubr.bf16.gmra.mrb[0].mxu0 %v1160
      %v1943 = vpop.f32.mrb[0].mxu0
      %v1944 = vadd.f32 0.0, %v1943
      %v1945 = vpop.f32.mrb[0].mxu0
      %v1946 = vpop.f32.mrb[0].mxu0
      %v1947 = vadd.f32 0.0, %v1946
      %v1948 = vpop.f32.mrb[0].mxu0
      %1949 = vmatprep.mubr.bf16.mxu0 %v1464
      %1950 = vmatmul.mubr.bf16.gmra.mrb[0].mxu0 %v1162
      %v1951 = vpop.f32.mrb[0].mxu0
      %v1952 = vadd.f32 0.0, %v1951
      %v1953 = vpop.f32.mrb[0].mxu0
      %v1954 = vpop.f32.mrb[0].mxu0
      %v1955 = vadd.f32 0.0, %v1954
      %v1956 = vpop.f32.mrb[0].mxu0
      %1957 = vmatprep.mubr.bf16.mxu0 %v1467
      %1958 = vmatmul.mubr.bf16.gmra.mrb[0].mxu0 %v1164
      %v1959 = vpop.f32.mrb[0].mxu0
      %v1960 = vadd.f32 0.0, %v1959
      %v1961 = vpop.f32.mrb[0].mxu0
      %v1962 = vpop.f32.mrb[0].mxu0
      %v1963 = vadd.f32 0.0, %v1962
      %v1964 = vpop.f32.mrb[0].mxu0
      %1965 = vmatprep.mubr.bf16.mxu0 %v1470
      %1966 = vmatmul.mubr.bf16.gmra.mrb[0].mxu0 %v1166
      %v1967 = vpop.f32.mrb[0].mxu0
      %v1968 = vadd.f32 0.0, %v1967
      %v1969 = vpop.f32.mrb[0].mxu0
      %v1970 = vpop.f32.mrb[0].mxu0
      %v1971 = vadd.f32 0.0, %v1970
      %v1972 = vpop.f32.mrb[0].mxu0
      %1973 = vmatprep.mubr.bf16.mxu0 %v1473
      %1974 = vmatmul.mubr.bf16.gmra.mrb[0].mxu0 %v1168
      %v1975 = vpop.f32.mrb[0].mxu0
      %v1976 = vadd.f32 0.0, %v1975
      %v1977 = vpop.f32.mrb[0].mxu0
      %v1978 = vpop.f32.mrb[0].mxu0
      %v1979 = vadd.f32 0.0, %v1978
      %v1980 = vpop.f32.mrb[0].mxu0
      %1981 = vmatprep.mubr.bf16.mxu0 %v1476
      %1982 = vmatmul.mubr.bf16.gmra.mrb[0].mxu0 %v1170
      %v1983 = vpop.f32.mrb[0].mxu0
      %v1984 = vadd.f32 0.0, %v1983
      %v1985 = vpop.f32.mrb[0].mxu0
      %v1986 = vpop.f32.mrb[0].mxu0
      %v1987 = vadd.f32 0.0, %v1986
      %v1988 = vpop.f32.mrb[0].mxu0
      %1989 = vmatprep.mubr.bf16.mxu0 %v1479
      %1990 = vmatmul.mubr.bf16.gmra.mrb[0].mxu0 %v1172
      %v1991 = vpop.f32.mrb[0].mxu0
      %v1992 = vadd.f32 0.0, %v1991
      %v1993 = vpop.f32.mrb[0].mxu0
      %v1994 = vpop.f32.mrb[0].mxu0
      %v1995 = vadd.f32 0.0, %v1994
      %v1996 = vpop.f32.mrb[0].mxu0
      %1997 = vmatprep.mubr.bf16.mxu0 %v1482
      %1998 = vmatmul.mubr.bf16.gmra.mrb[0].mxu0 %v1174
      %v1999 = vpop.f32.mrb[0].mxu0
      %v2000 = vadd.f32 0.0, %v1999
      %v2001 = vpop.f32.mrb[0].mxu0
      %v2002 = vpop.f32.mrb[0].mxu0
      %v2003 = vadd.f32 0.0, %v2002
      %v2004 = vpop.f32.mrb[0].mxu0
      %2005 = vmatprep.mubr.bf16.mxu0 %v1485
      %2006 = vmatmul.mubr.bf16.gmra.mrb[0].mxu0 %v1176
      %v2007 = vpop.f32.mrb[0].mxu0
      %v2008 = vadd.f32 0.0, %v2007
      %v2009 = vpop.f32.mrb[0].mxu0
      %v2010 = vpop.f32.mrb[0].mxu0
      %v2011 = vadd.f32 0.0, %v2010
      %v2012 = vpop.f32.mrb[0].mxu0
      %2013 = vmatprep.mubr.bf16.mxu0 %v1488
      %2014 = vmatmul.mubr.bf16.gmra.mrb[0].mxu0 %v1178
      %v2015 = vpop.f32.mrb[0].mxu0
      %v2016 = vadd.f32 0.0, %v2015
      %v2017 = vpop.f32.mrb[0].mxu0
      %v2018 = vpop.f32.mrb[0].mxu0
      %v2019 = vadd.f32 0.0, %v2018
      %v2020 = vpop.f32.mrb[0].mxu0
      %2021 = vmatprep.mubr.bf16.mxu0 %v1491
      %2022 = vmatmul.mubr.bf16.gmra.mrb[0].mxu0 %v1180
      %v2023 = vpop.f32.mrb[0].mxu0
      %v2024 = vadd.f32 0.0, %v2023
      %v2025 = vpop.f32.mrb[0].mxu0
      %v2026 = vpop.f32.mrb[0].mxu0
      %v2027 = vadd.f32 0.0, %v2026
      %v2028 = vpop.f32.mrb[0].mxu0
      %2029 = vmatprep.mubr.bf16.mxu0 %v1494
      %2030 = vmatmul.mubr.bf16.gmra.mrb[0].mxu0 %v1182
      %v2031 = vpop.f32.mrb[0].mxu0
      %v2032 = vadd.f32 0.0, %v2031
      %v2033 = vpop.f32.mrb[0].mxu0
      %v2034 = vpop.f32.mrb[0].mxu0
      %v2035 = vadd.f32 0.0, %v2034
      %v2036 = vpop.f32.mrb[0].mxu0
      %2037 = vmatprep.mubr.bf16.mxu0 %v1497
      %2038 = vmatmul.mubr.bf16.gmra.mrb[0].mxu0 %v1184
      %v2039 = vpop.f32.mrb[0].mxu0
      %v2040 = vadd.f32 0.0, %v2039
      %v2041 = vpop.f32.mrb[0].mxu0
      %v2042 = vpop.f32.mrb[0].mxu0
      %v2043 = vadd.f32 0.0, %v2042
      %v2044 = vpop.f32.mrb[0].mxu0
      %2045 = vmatprep.mubr.bf16.mxu0 %v1500
      %2046 = vmatmul.mubr.bf16.gmra.mrb[0].mxu0 %v1186
      %v2047 = vpop.f32.mrb[0].mxu0
      %v2048 = vadd.f32 0.0, %v2047
      %v2049 = vpop.f32.mrb[0].mxu0
      %v2050 = vpop.f32.mrb[0].mxu0
      %v2051 = vadd.f32 0.0, %v2050
      %v2052 = vpop.f32.mrb[0].mxu0
      %2053 = vdwg.mxu0
      %v2054 = vadd.f32 %v401, %v1544
      %v2055 = vadd.f32 %v402, %v1547
      %v2056 = vadd.f32 %v403, %v1552
      %v2057 = vadd.f32 %v404, %v1555
      %v2058 = vadd.f32 %v405, %v1560
      %v2059 = vadd.f32 %v406, %v1563
      %v2060 = vadd.f32 %v407, %v1568
      %v2061 = vadd.f32 %v408, %v1571
      %v2062 = vadd.f32 %v409, %v1576
      %v2063 = vadd.f32 %v410, %v1579
      %v2064 = vadd.f32 %v411, %v1584
      %v2065 = vadd.f32 %v412, %v1587
      %v2066 = vadd.f32 %v413, %v1592
      %v2067 = vadd.f32 %v414, %v1595
      %v2068 = vadd.f32 %v415, %v1600
      %v2069 = vadd.f32 %v416, %v1603
      %v2070 = vadd.f32 %v417, %v1608
      %v2071 = vadd.f32 %v418, %v1611
      %v2072 = vadd.f32 %v419, %v1616
      %v2073 = vadd.f32 %v420, %v1619
      %v2074 = vadd.f32 %v421, %v1624
      %v2075 = vadd.f32 %v422, %v1627
      %v2076 = vadd.f32 %v423, %v1632
      %v2077 = vadd.f32 %v424, %v1635
      %v2078 = vadd.f32 %v425, %v1640
      %v2079 = vadd.f32 %v426, %v1643
      %v2080 = vadd.f32 %v427, %v1648
      %v2081 = vadd.f32 %v428, %v1651
      %v2082 = vadd.f32 %v429, %v1656
      %v2083 = vadd.f32 %v430, %v1659
      %v2084 = vadd.f32 %v431, %v1664
      %v2085 = vadd.f32 %v432, %v1667
      %v2086 = vadd.f32 %v433, %v1672
      %v2087 = vadd.f32 %v434, %v1675
      %v2088 = vadd.f32 %v435, %v1680
      %v2089 = vadd.f32 %v436, %v1683
      %v2090 = vadd.f32 %v437, %v1688
      %v2091 = vadd.f32 %v438, %v1691
      %v2092 = vadd.f32 %v439, %v1696
      %v2093 = vadd.f32 %v440, %v1699
      %v2094 = vadd.f32 %v441, %v1704
      %v2095 = vadd.f32 %v442, %v1707
      %v2096 = vadd.f32 %v443, %v1712
      %v2097 = vadd.f32 %v444, %v1715
      %v2098 = vadd.f32 %v445, %v1720
      %v2099 = vadd.f32 %v446, %v1723
      %v2100 = vadd.f32 %v447, %v1728
      %v2101 = vadd.f32 %v448, %v1731
      %v2102 = vadd.f32 %v449, %v1736
      %v2103 = vadd.f32 %v450, %v1739
      %v2104 = vadd.f32 %v451, %v1744
      %v2105 = vadd.f32 %v452, %v1747
      %v2106 = vadd.f32 %v453, %v1752
      %v2107 = vadd.f32 %v454, %v1755
      %v2108 = vadd.f32 %v455, %v1760
      %v2109 = vadd.f32 %v456, %v1763
      %v2110 = vadd.f32 %v457, %v1768
      %v2111 = vadd.f32 %v458, %v1771
      %v2112 = vadd.f32 %v459, %v1776
      %v2113 = vadd.f32 %v460, %v1779
      %v2114 = vadd.f32 %v461, %v1784
      %v2115 = vadd.f32 %v462, %v1787
      %v2116 = vadd.f32 %v463, %v1792
      %v2117 = vadd.f32 %v464, %v1795
      %v2118 = vadd.f32 %v465, %v1800
      %v2119 = vadd.f32 %v466, %v1803
      %v2120 = vadd.f32 %v467, %v1808
      %v2121 = vadd.f32 %v468, %v1811
      %v2122 = vadd.f32 %v469, %v1816
      %v2123 = vadd.f32 %v470, %v1819
      %v2124 = vadd.f32 %v471, %v1824
      %v2125 = vadd.f32 %v472, %v1827
      %v2126 = vadd.f32 %v473, %v1832
      %v2127 = vadd.f32 %v474, %v1835
      %v2128 = vadd.f32 %v475, %v1840
      %v2129 = vadd.f32 %v476, %v1843
      %v2130 = vadd.f32 %v477, %v1848
      %v2131 = vadd.f32 %v478, %v1851
      %v2132 = vadd.f32 %v479, %v1856
      %v2133 = vadd.f32 %v480, %v1859
      %v2134 = vadd.f32 %v481, %v1864
      %v2135 = vadd.f32 %v482, %v1867
      %v2136 = vadd.f32 %v483, %v1872
      %v2137 = vadd.f32 %v484, %v1875
      %v2138 = vadd.f32 %v485, %v1880
      %v2139 = vadd.f32 %v486, %v1883
      %v2140 = vadd.f32 %v487, %v1888
      %v2141 = vadd.f32 %v488, %v1891
      %v2142 = vadd.f32 %v489, %v1896
      %v2143 = vadd.f32 %v490, %v1899
      %v2144 = vadd.f32 %v491, %v1904
      %v2145 = vadd.f32 %v492, %v1907
      %v2146 = vadd.f32 %v493, %v1912
      %v2147 = vadd.f32 %v494, %v1915
      %v2148 = vadd.f32 %v495, %v1920
      %v2149 = vadd.f32 %v496, %v1923
      %v2150 = vadd.f32 %v497, %v1928
      %v2151 = vadd.f32 %v498, %v1931
      %v2152 = vadd.f32 %v499, %v1936
      %v2153 = vadd.f32 %v500, %v1939
      %v2154 = vadd.f32 %v501, %v1944
      %v2155 = vadd.f32 %v502, %v1947
      %v2156 = vadd.f32 %v503, %v1952
      %v2157 = vadd.f32 %v504, %v1955
      %v2158 = vadd.f32 %v505, %v1960
      %v2159 = vadd.f32 %v506, %v1963
      %v2160 = vadd.f32 %v507, %v1968
      %v2161 = vadd.f32 %v508, %v1971
      %v2162 = vadd.f32 %v509, %v1976
      %v2163 = vadd.f32 %v510, %v1979
      %v2164 = vadd.f32 %v511, %v1984
      %v2165 = vadd.f32 %v512, %v1987
      %v2166 = vadd.f32 %v513, %v1992
      %v2167 = vadd.f32 %v514, %v1995
      %v2168 = vadd.f32 %v515, %v2000
      %v2169 = vadd.f32 %v516, %v2003
      %v2170 = vadd.f32 %v517, %v2008
      %v2171 = vadd.f32 %v518, %v2011
      %v2172 = vadd.f32 %v519, %v2016
      %v2173 = vadd.f32 %v520, %v2019
      %v2174 = vadd.f32 %v521, %v2024
      %v2175 = vadd.f32 %v522, %v2027
      %v2176 = vadd.f32 %v523, %v2032
      %v2177 = vadd.f32 %v524, %v2035
      %v2178 = vadd.f32 %v525, %v2040
      %v2179 = vadd.f32 %v526, %v2043
      %v2180 = vadd.f32 %v527, %v2048
      %v2181 = vadd.f32 %v528, %v2051
      %vm2182 = vcmask 523264
      %2183 = vst.msk [vmem:[%s265] sm:$0xff] %vm2182, %v2054
      %2184 = vst.msk [vmem:[%s265 + $0x8] sm:$0xff] %vm2182, %v2055
      %2185 = vst.msk [vmem:[%s265 + $0x10] sm:$0xff] %vm2182, %v2056
      %2186 = vst.msk [vmem:[%s265 + $0x18] sm:$0xff] %vm2182, %v2057
      %2187 = vst.msk [vmem:[%s265 + $0x20] sm:$0xff] %vm2182, %v2058
      %2188 = vst.msk [vmem:[%s265 + $0x28] sm:$0xff] %vm2182, %v2059
      %2189 = vst.msk [vmem:[%s265 + $0x30] sm:$0xff] %vm2182, %v2060
      %2190 = vst.msk [vmem:[%s265 + $0x38] sm:$0xff] %vm2182, %v2061
      %2191 = vst.msk [vmem:[%s265 + $0x40] sm:$0xff] %vm2182, %v2062
      %2192 = vst.msk [vmem:[%s265 + $0x48] sm:$0xff] %vm2182, %v2063
      %2193 = vst.msk [vmem:[%s265 + $0x50] sm:$0xff] %vm2182, %v2064
      %2194 = vst.msk [vmem:[%s265 + $0x58] sm:$0xff] %vm2182, %v2065
      %2195 = vst.msk [vmem:[%s265 + $0x60] sm:$0xff] %vm2182, %v2066
      %2196 = vst.msk [vmem:[%s265 + $0x68] sm:$0xff] %vm2182, %v2067
      %2197 = vst.msk [vmem:[%s265 + $0x70] sm:$0xff] %vm2182, %v2068
      %2198 = vst.msk [vmem:[%s265 + $0x78] sm:$0xff] %vm2182, %v2069
      %2199 = vst.msk [vmem:[%s265 + $0x80] sm:$0xff] %vm2182, %v2070
      %2200 = vst.msk [vmem:[%s265 + $0x88] sm:$0xff] %vm2182, %v2071
      %2201 = vst.msk [vmem:[%s265 + $0x90] sm:$0xff] %vm2182, %v2072
      %2202 = vst.msk [vmem:[%s265 + $0x98] sm:$0xff] %vm2182, %v2073
      %2203 = vst.msk [vmem:[%s265 + $0xa0] sm:$0xff] %vm2182, %v2074
      %2204 = vst.msk [vmem:[%s265 + $0xa8] sm:$0xff] %vm2182, %v2075
      %2205 = vst.msk [vmem:[%s265 + $0xb0] sm:$0xff] %vm2182, %v2076
      %2206 = vst.msk [vmem:[%s265 + $0xb8] sm:$0xff] %vm2182, %v2077
      %2207 = vst.msk [vmem:[%s265 + $0xc0] sm:$0xff] %vm2182, %v2078
      %2208 = vst.msk [vmem:[%s265 + $0xc8] sm:$0xff] %vm2182, %v2079
      %2209 = vst.msk [vmem:[%s265 + $0xd0] sm:$0xff] %vm2182, %v2080
      %2210 = vst.msk [vmem:[%s265 + $0xd8] sm:$0xff] %vm2182, %v2081
      %2211 = vst.msk [vmem:[%s265 + $0xe0] sm:$0xff] %vm2182, %v2082
      %2212 = vst.msk [vmem:[%s265 + $0xe8] sm:$0xff] %vm2182, %v2083
      %2213 = vst.msk [vmem:[%s265 + $0xf0] sm:$0xff] %vm2182, %v2084
      %2214 = vst.msk [vmem:[%s265 + $0xf8] sm:$0xff] %vm2182, %v2085
      %2215 = vst.msk [vmem:[%s265 + $0x100] sm:$0xff] %vm2182, %v2086
      %2216 = vst.msk [vmem:[%s265 + $0x108] sm:$0xff] %vm2182, %v2087
      %2217 = vst.msk [vmem:[%s265 + $0x110] sm:$0xff] %vm2182, %v2088
      %2218 = vst.msk [vmem:[%s265 + $0x118] sm:$0xff] %vm2182, %v2089
      %2219 = vst.msk [vmem:[%s265 + $0x120] sm:$0xff] %vm2182, %v2090
      %2220 = vst.msk [vmem:[%s265 + $0x128] sm:$0xff] %vm2182, %v2091
      %2221 = vst.msk [vmem:[%s265 + $0x130] sm:$0xff] %vm2182, %v2092
      %2222 = vst.msk [vmem:[%s265 + $0x138] sm:$0xff] %vm2182, %v2093
      %2223 = vst.msk [vmem:[%s265 + $0x140] sm:$0xff] %vm2182, %v2094
      %2224 = vst.msk [vmem:[%s265 + $0x148] sm:$0xff] %vm2182, %v2095
      %2225 = vst.msk [vmem:[%s265 + $0x150] sm:$0xff] %vm2182, %v2096
      %2226 = vst.msk [vmem:[%s265 + $0x158] sm:$0xff] %vm2182, %v2097
      %2227 = vst.msk [vmem:[%s265 + $0x160] sm:$0xff] %vm2182, %v2098
      %2228 = vst.msk [vmem:[%s265 + $0x168] sm:$0xff] %vm2182, %v2099
      %2229 = vst.msk [vmem:[%s265 + $0x170] sm:$0xff] %vm2182, %v2100
      %2230 = vst.msk [vmem:[%s265 + $0x178] sm:$0xff] %vm2182, %v2101
      %2231 = vst.msk [vmem:[%s265 + $0x180] sm:$0xff] %vm2182, %v2102
      %2232 = vst.msk [vmem:[%s265 + $0x188] sm:$0xff] %vm2182, %v2103
      %2233 = vst.msk [vmem:[%s265 + $0x190] sm:$0xff] %vm2182, %v2104
      %2234 = vst.msk [vmem:[%s265 + $0x198] sm:$0xff] %vm2182, %v2105
      %2235 = vst.msk [vmem:[%s265 + $0x1a0] sm:$0xff] %vm2182, %v2106
      %2236 = vst.msk [vmem:[%s265 + $0x1a8] sm:$0xff] %vm2182, %v2107
      %2237 = vst.msk [vmem:[%s265 + $0x1b0] sm:$0xff] %vm2182, %v2108
      %2238 = vst.msk [vmem:[%s265 + $0x1b8] sm:$0xff] %vm2182, %v2109
      %2239 = vst.msk [vmem:[%s265 + $0x1c0] sm:$0xff] %vm2182, %v2110
      %2240 = vst.msk [vmem:[%s265 + $0x1c8] sm:$0xff] %vm2182, %v2111
      %2241 = vst.msk [vmem:[%s265 + $0x1d0] sm:$0xff] %vm2182, %v2112
      %2242 = vst.msk [vmem:[%s265 + $0x1d8] sm:$0xff] %vm2182, %v2113
      %2243 = vst.msk [vmem:[%s265 + $0x1e0] sm:$0xff] %vm2182, %v2114
      %2244 = vst.msk [vmem:[%s265 + $0x1e8] sm:$0xff] %vm2182, %v2115
      %2245 = vst.msk [vmem:[%s265 + $0x1f0] sm:$0xff] %vm2182, %v2116
      %2246 = vst.msk [vmem:[%s265 + $0x1f8] sm:$0xff] %vm2182, %v2117
      %2247 = vst.msk [vmem:[%s265 + $0x200] sm:$0xff] %vm2182, %v2118
      %2248 = vst.msk [vmem:[%s265 + $0x208] sm:$0xff] %vm2182, %v2119
      %2249 = vst.msk [vmem:[%s265 + $0x210] sm:$0xff] %vm2182, %v2120
      %2250 = vst.msk [vmem:[%s265 + $0x218] sm:$0xff] %vm2182, %v2121
      %2251 = vst.msk [vmem:[%s265 + $0x220] sm:$0xff] %vm2182, %v2122
      %2252 = vst.msk [vmem:[%s265 + $0x228] sm:$0xff] %vm2182, %v2123
      %2253 = vst.msk [vmem:[%s265 + $0x230] sm:$0xff] %vm2182, %v2124
      %2254 = vst.msk [vmem:[%s265 + $0x238] sm:$0xff] %vm2182, %v2125
      %2255 = vst.msk [vmem:[%s265 + $0x240] sm:$0xff] %vm2182, %v2126
      %2256 = vst.msk [vmem:[%s265 + $0x248] sm:$0xff] %vm2182, %v2127
      %2257 = vst.msk [vmem:[%s265 + $0x250] sm:$0xff] %vm2182, %v2128
      %2258 = vst.msk [vmem:[%s265 + $0x258] sm:$0xff] %vm2182, %v2129
      %2259 = vst.msk [vmem:[%s265 + $0x260] sm:$0xff] %vm2182, %v2130
      %2260 = vst.msk [vmem:[%s265 + $0x268] sm:$0xff] %vm2182, %v2131
      %2261 = vst.msk [vmem:[%s265 + $0x270] sm:$0xff] %vm2182, %v2132
      %2262 = vst.msk [vmem:[%s265 + $0x278] sm:$0xff] %vm2182, %v2133
      %2263 = vst.msk [vmem:[%s265 + $0x280] sm:$0xff] %vm2182, %v2134
      %2264 = vst.msk [vmem:[%s265 + $0x288] sm:$0xff] %vm2182, %v2135
      %2265 = vst.msk [vmem:[%s265 + $0x290] sm:$0xff] %vm2182, %v2136
      %2266 = vst.msk [vmem:[%s265 + $0x298] sm:$0xff] %vm2182, %v2137
      %2267 = vst.msk [vmem:[%s265 + $0x2a0] sm:$0xff] %vm2182, %v2138
      %2268 = vst.msk [vmem:[%s265 + $0x2a8] sm:$0xff] %vm2182, %v2139
      %2269 = vst.msk [vmem:[%s265 + $0x2b0] sm:$0xff] %vm2182, %v2140
      %2270 = vst.msk [vmem:[%s265 + $0x2b8] sm:$0xff] %vm2182, %v2141
      %2271 = vst.msk [vmem:[%s265 + $0x2c0] sm:$0xff] %vm2182, %v2142
      %2272 = vst.msk [vmem:[%s265 + $0x2c8] sm:$0xff] %vm2182, %v2143
      %2273 = vst.msk [vmem:[%s265 + $0x2d0] sm:$0xff] %vm2182, %v2144
      %2274 = vst.msk [vmem:[%s265 + $0x2d8] sm:$0xff] %vm2182, %v2145
      %2275 = vst.msk [vmem:[%s265 + $0x2e0] sm:$0xff] %vm2182, %v2146
      %2276 = vst.msk [vmem:[%s265 + $0x2e8] sm:$0xff] %vm2182, %v2147
      %2277 = vst.msk [vmem:[%s265 + $0x2f0] sm:$0xff] %vm2182, %v2148
      %2278 = vst.msk [vmem:[%s265 + $0x2f8] sm:$0xff] %vm2182, %v2149
      %2279 = vst.msk [vmem:[%s265 + $0x300] sm:$0xff] %vm2182, %v2150
      %2280 = vst.msk [vmem:[%s265 + $0x308] sm:$0xff] %vm2182, %v2151
      %2281 = vst.msk [vmem:[%s265 + $0x310] sm:$0xff] %vm2182, %v2152
      %2282 = vst.msk [vmem:[%s265 + $0x318] sm:$0xff] %vm2182, %v2153
      %2283 = vst.msk [vmem:[%s265 + $0x320] sm:$0xff] %vm2182, %v2154
      %2284 = vst.msk [vmem:[%s265 + $0x328] sm:$0xff] %vm2182, %v2155
      %2285 = vst.msk [vmem:[%s265 + $0x330] sm:$0xff] %vm2182, %v2156
      %2286 = vst.msk [vmem:[%s265 + $0x338] sm:$0xff] %vm2182, %v2157
      %2287 = vst.msk [vmem:[%s265 + $0x340] sm:$0xff] %vm2182, %v2158
      %2288 = vst.msk [vmem:[%s265 + $0x348] sm:$0xff] %vm2182, %v2159
      %2289 = vst.msk [vmem:[%s265 + $0x350] sm:$0xff] %vm2182, %v2160
      %2290 = vst.msk [vmem:[%s265 + $0x358] sm:$0xff] %vm2182, %v2161
      %2291 = vst.msk [vmem:[%s265 + $0x360] sm:$0xff] %vm2182, %v2162
      %2292 = vst.msk [vmem:[%s265 + $0x368] sm:$0xff] %vm2182, %v2163
      %2293 = vst.msk [vmem:[%s265 + $0x370] sm:$0xff] %vm2182, %v2164
      %2294 = vst.msk [vmem:[%s265 + $0x378] sm:$0xff] %vm2182, %v2165
      %2295 = vst.msk [vmem:[%s265 + $0x380] sm:$0xff] %vm2182, %v2166
      %2296 = vst.msk [vmem:[%s265 + $0x388] sm:$0xff] %vm2182, %v2167
      %2297 = vst.msk [vmem:[%s265 + $0x390] sm:$0xff] %vm2182, %v2168
      %2298 = vst.msk [vmem:[%s265 + $0x398] sm:$0xff] %vm2182, %v2169
      %2299 = vst.msk [vmem:[%s265 + $0x3a0] sm:$0xff] %vm2182, %v2170
      %2300 = vst.msk [vmem:[%s265 + $0x3a8] sm:$0xff] %vm2182, %v2171
      %2301 = vst.msk [vmem:[%s265 + $0x3b0] sm:$0xff] %vm2182, %v2172
      %2302 = vst.msk [vmem:[%s265 + $0x3b8] sm:$0xff] %vm2182, %v2173
      %2303 = vst.msk [vmem:[%s265 + $0x3c0] sm:$0xff] %vm2182, %v2174
      %2304 = vst.msk [vmem:[%s265 + $0x3c8] sm:$0xff] %vm2182, %v2175
      %2305 = vst.msk [vmem:[%s265 + $0x3d0] sm:$0xff] %vm2182, %v2176
      %2306 = vst.msk [vmem:[%s265 + $0x3d8] sm:$0xff] %vm2182, %v2177
      %2307 = vst.msk [vmem:[%s265 + $0x3e0] sm:$0xff] %vm2182, %v2178
      %2308 = vst.msk [vmem:[%s265 + $0x3e8] sm:$0xff] %vm2182, %v2179
      %2309 = vst.msk [vmem:[%s265 + $0x3f0] sm:$0xff] %vm2182, %v2180
      %2310 = vst.msk [vmem:[%s265 + $0x3f8] sm:$0xff] %vm2182, %v2181
      // Predicated region
      $region37: #{tpu_custom_call.1} parent=31 // pred_check
        %p2311 = pneg %p268
      $region38: #{tpu_custom_call.1} parent=31 // pred_check_branch
        %2313 = sbr.rel (%p2311) target = $region40
      $region39: #{tpu_custom_call.1} parent=31 // pred_region
        %v2314 = vld [vmem:[%s265] sm:$0xff]
        %v2315 = vld [vmem:[%s265 + $0x8] sm:$0xff]
        %v2316 = vld [vmem:[%s265 + $0x10] sm:$0xff]
        %v2317 = vld [vmem:[%s265 + $0x18] sm:$0xff]
        %v2318 = vld [vmem:[%s265 + $0x20] sm:$0xff]
        %v2319 = vld [vmem:[%s265 + $0x28] sm:$0xff]
        %v2320 = vld [vmem:[%s265 + $0x30] sm:$0xff]
        %v2321 = vld [vmem:[%s265 + $0x38] sm:$0xff]
        %v2322 = vld [vmem:[%s265 + $0x40] sm:$0xff]
        %v2323 = vld [vmem:[%s265 + $0x48] sm:$0xff]
        %v2324 = vld [vmem:[%s265 + $0x50] sm:$0xff]
        %v2325 = vld [vmem:[%s265 + $0x58] sm:$0xff]
        %v2326 = vld [vmem:[%s265 + $0x60] sm:$0xff]
        %v2327 = vld [vmem:[%s265 + $0x68] sm:$0xff]
        %v2328 = vld [vmem:[%s265 + $0x70] sm:$0xff]
        %v2329 = vld [vmem:[%s265 + $0x78] sm:$0xff]
        %v2330 = vld [vmem:[%s265 + $0x80] sm:$0xff]
        %v2331 = vld [vmem:[%s265 + $0x88] sm:$0xff]
        %v2332 = vld [vmem:[%s265 + $0x90] sm:$0xff]
        %v2333 = vld [vmem:[%s265 + $0x98] sm:$0xff]
        %v2334 = vld [vmem:[%s265 + $0xa0] sm:$0xff]
        %v2335 = vld [vmem:[%s265 + $0xa8] sm:$0xff]
        %v2336 = vld [vmem:[%s265 + $0xb0] sm:$0xff]
        %v2337 = vld [vmem:[%s265 + $0xb8] sm:$0xff]
        %v2338 = vld [vmem:[%s265 + $0xc0] sm:$0xff]
        %v2339 = vld [vmem:[%s265 + $0xc8] sm:$0xff]
        %v2340 = vld [vmem:[%s265 + $0xd0] sm:$0xff]
        %v2341 = vld [vmem:[%s265 + $0xd8] sm:$0xff]
        %v2342 = vld [vmem:[%s265 + $0xe0] sm:$0xff]
        %v2343 = vld [vmem:[%s265 + $0xe8] sm:$0xff]
        %v2344 = vld [vmem:[%s265 + $0xf0] sm:$0xff]
        %v2345 = vld [vmem:[%s265 + $0xf8] sm:$0xff]
        %v2346 = vld [vmem:[%s265 + $0x100] sm:$0xff]
        %v2347 = vld [vmem:[%s265 + $0x108] sm:$0xff]
        %v2348 = vld [vmem:[%s265 + $0x110] sm:$0xff]
        %v2349 = vld [vmem:[%s265 + $0x118] sm:$0xff]
        %v2350 = vld [vmem:[%s265 + $0x120] sm:$0xff]
        %v2351 = vld [vmem:[%s265 + $0x128] sm:$0xff]
        %v2352 = vld [vmem:[%s265 + $0x130] sm:$0xff]
        %v2353 = vld [vmem:[%s265 + $0x138] sm:$0xff]
        %v2354 = vld [vmem:[%s265 + $0x140] sm:$0xff]
        %v2355 = vld [vmem:[%s265 + $0x148] sm:$0xff]
        %v2356 = vld [vmem:[%s265 + $0x150] sm:$0xff]
        %v2357 = vld [vmem:[%s265 + $0x158] sm:$0xff]
        %v2358 = vld [vmem:[%s265 + $0x160] sm:$0xff]
        %v2359 = vld [vmem:[%s265 + $0x168] sm:$0xff]
        %v2360 = vld [vmem:[%s265 + $0x170] sm:$0xff]
        %v2361 = vld [vmem:[%s265 + $0x178] sm:$0xff]
        %v2362 = vld [vmem:[%s265 + $0x180] sm:$0xff]
        %v2363 = vld [vmem:[%s265 + $0x188] sm:$0xff]
        %v2364 = vld [vmem:[%s265 + $0x190] sm:$0xff]
        %v2365 = vld [vmem:[%s265 + $0x198] sm:$0xff]
        %v2366 = vld [vmem:[%s265 + $0x1a0] sm:$0xff]
        %v2367 = vld [vmem:[%s265 + $0x1a8] sm:$0xff]
        %v2368 = vld [vmem:[%s265 + $0x1b0] sm:$0xff]
        %v2369 = vld [vmem:[%s265 + $0x1b8] sm:$0xff]
        %v2370 = vld [vmem:[%s265 + $0x1c0] sm:$0xff]
        %v2371 = vld [vmem:[%s265 + $0x1c8] sm:$0xff]
        %v2372 = vld [vmem:[%s265 + $0x1d0] sm:$0xff]
        %v2373 = vld [vmem:[%s265 + $0x1d8] sm:$0xff]
        %v2374 = vld [vmem:[%s265 + $0x1e0] sm:$0xff]
        %v2375 = vld [vmem:[%s265 + $0x1e8] sm:$0xff]
        %v2376 = vld [vmem:[%s265 + $0x1f0] sm:$0xff]
        %v2377 = vld [vmem:[%s265 + $0x1f8] sm:$0xff]
        %v2378 = vld [vmem:[%s265 + $0x200] sm:$0xff]
        %v2379 = vld [vmem:[%s265 + $0x208] sm:$0xff]
        %v2380 = vld [vmem:[%s265 + $0x210] sm:$0xff]
        %v2381 = vld [vmem:[%s265 + $0x218] sm:$0xff]
        %v2382 = vld [vmem:[%s265 + $0x220] sm:$0xff]
        %v2383 = vld [vmem:[%s265 + $0x228] sm:$0xff]
        %v2384 = vld [vmem:[%s265 + $0x230] sm:$0xff]
        %v2385 = vld [vmem:[%s265 + $0x238] sm:$0xff]
        %v2386 = vld [vmem:[%s265 + $0x240] sm:$0xff]
        %v2387 = vld [vmem:[%s265 + $0x248] sm:$0xff]
        %v2388 = vld [vmem:[%s265 + $0x250] sm:$0xff]
        %v2389 = vld [vmem:[%s265 + $0x258] sm:$0xff]
        %v2390 = vld [vmem:[%s265 + $0x260] sm:$0xff]
        %v2391 = vld [vmem:[%s265 + $0x268] sm:$0xff]
        %v2392 = vld [vmem:[%s265 + $0x270] sm:$0xff]
        %v2393 = vld [vmem:[%s265 + $0x278] sm:$0xff]
        %v2394 = vld [vmem:[%s265 + $0x280] sm:$0xff]
        %v2395 = vld [vmem:[%s265 + $0x288] sm:$0xff]
        %v2396 = vld [vmem:[%s265 + $0x290] sm:$0xff]
        %v2397 = vld [vmem:[%s265 + $0x298] sm:$0xff]
        %v2398 = vld [vmem:[%s265 + $0x2a0] sm:$0xff]
        %v2399 = vld [vmem:[%s265 + $0x2a8] sm:$0xff]
        %v2400 = vld [vmem:[%s265 + $0x2b0] sm:$0xff]
        %v2401 = vld [vmem:[%s265 + $0x2b8] sm:$0xff]
        %v2402 = vld [vmem:[%s265 + $0x2c0] sm:$0xff]
        %v2403 = vld [vmem:[%s265 + $0x2c8] sm:$0xff]
        %v2404 = vld [vmem:[%s265 + $0x2d0] sm:$0xff]
        %v2405 = vld [vmem:[%s265 + $0x2d8] sm:$0xff]
        %v2406 = vld [vmem:[%s265 + $0x2e0] sm:$0xff]
        %v2407 = vld [vmem:[%s265 + $0x2e8] sm:$0xff]
        %v2408 = vld [vmem:[%s265 + $0x2f0] sm:$0xff]
        %v2409 = vld [vmem:[%s265 + $0x2f8] sm:$0xff]
        %v2410 = vld [vmem:[%s265 + $0x300] sm:$0xff]
        %v2411 = vld [vmem:[%s265 + $0x308] sm:$0xff]
        %v2412 = vld [vmem:[%s265 + $0x310] sm:$0xff]
        %v2413 = vld [vmem:[%s265 + $0x318] sm:$0xff]
        %v2414 = vld [vmem:[%s265 + $0x320] sm:$0xff]
        %v2415 = vld [vmem:[%s265 + $0x328] sm:$0xff]
        %v2416 = vld [vmem:[%s265 + $0x330] sm:$0xff]
        %v2417 = vld [vmem:[%s265 + $0x338] sm:$0xff]
        %v2418 = vld [vmem:[%s265 + $0x340] sm:$0xff]
        %v2419 = vld [vmem:[%s265 + $0x348] sm:$0xff]
        %v2420 = vld [vmem:[%s265 + $0x350] sm:$0xff]
        %v2421 = vld [vmem:[%s265 + $0x358] sm:$0xff]
        %v2422 = vld [vmem:[%s265 + $0x360] sm:$0xff]
        %v2423 = vld [vmem:[%s265 + $0x368] sm:$0xff]
        %v2424 = vld [vmem:[%s265 + $0x370] sm:$0xff]
        %v2425 = vld [vmem:[%s265 + $0x378] sm:$0xff]
        %v2426 = vld [vmem:[%s265 + $0x380] sm:$0xff]
        %v2427 = vld [vmem:[%s265 + $0x388] sm:$0xff]
        %v2428 = vld [vmem:[%s265 + $0x390] sm:$0xff]
        %v2429 = vld [vmem:[%s265 + $0x398] sm:$0xff]
        %v2430 = vld [vmem:[%s265 + $0x3a0] sm:$0xff]
        %v2431 = vld [vmem:[%s265 + $0x3a8] sm:$0xff]
        %v2432 = vld [vmem:[%s265 + $0x3b0] sm:$0xff]
        %v2433 = vld [vmem:[%s265 + $0x3b8] sm:$0xff]
        %v2434 = vld [vmem:[%s265 + $0x3c0] sm:$0xff]
        %v2435 = vld [vmem:[%s265 + $0x3c8] sm:$0xff]
        %v2436 = vld [vmem:[%s265 + $0x3d0] sm:$0xff]
        %v2437 = vld [vmem:[%s265 + $0x3d8] sm:$0xff]
        %v2438 = vld [vmem:[%s265 + $0x3e0] sm:$0xff]
        %v2439 = vld [vmem:[%s265 + $0x3e8] sm:$0xff]
        %v2440 = vld [vmem:[%s265 + $0x3f0] sm:$0xff]
        %v2441 = vld [vmem:[%s265 + $0x3f8] sm:$0xff]
        %v2442 = vld [vmem:[%s257] sm:$0x1]
        %v2444 = vlaneseq
        %v2445 = vshrl.u32 %v2444, 7
        %v2446 = vsub.s32 0, %v2445
        %v2447 = vrot.slane %v2442, %v2446
        %v2449 = vadd.f32 %v2314, %v2447
        %v2450 = vadd.f32 %v2315, %v2447
        %v2451 = vadd.f32 %v2316, %v2447
        %v2452 = vadd.f32 %v2317, %v2447
        %v2453 = vadd.f32 %v2318, %v2447
        %v2454 = vadd.f32 %v2319, %v2447
        %v2455 = vadd.f32 %v2320, %v2447
        %v2456 = vadd.f32 %v2321, %v2447
        %v2457 = vadd.f32 %v2322, %v2447
        %v2458 = vadd.f32 %v2323, %v2447
        %v2459 = vadd.f32 %v2324, %v2447
        %v2460 = vadd.f32 %v2325, %v2447
        %v2461 = vadd.f32 %v2326, %v2447
        %v2462 = vadd.f32 %v2327, %v2447
        %v2463 = vadd.f32 %v2328, %v2447
        %v2464 = vadd.f32 %v2329, %v2447
        %v2465 = vadd.f32 %v2330, %v2447
        %v2466 = vadd.f32 %v2331, %v2447
        %v2467 = vadd.f32 %v2332, %v2447
        %v2468 = vadd.f32 %v2333, %v2447
        %v2469 = vadd.f32 %v2334, %v2447
        %v2470 = vadd.f32 %v2335, %v2447
        %v2471 = vadd.f32 %v2336, %v2447
        %v2472 = vadd.f32 %v2337, %v2447
        %v2473 = vadd.f32 %v2338, %v2447
        %v2474 = vadd.f32 %v2339, %v2447
        %v2475 = vadd.f32 %v2340, %v2447
        %v2476 = vadd.f32 %v2341, %v2447
        %v2477 = vadd.f32 %v2342, %v2447
        %v2478 = vadd.f32 %v2343, %v2447
        %v2479 = vadd.f32 %v2344, %v2447
        %v2480 = vadd.f32 %v2345, %v2447
        %v2481 = vadd.f32 %v2346, %v2447
        %v2482 = vadd.f32 %v2347, %v2447
        %v2483 = vadd.f32 %v2348, %v2447
        %v2484 = vadd.f32 %v2349, %v2447
        %v2485 = vadd.f32 %v2350, %v2447
        %v2486 = vadd.f32 %v2351, %v2447
        %v2487 = vadd.f32 %v2352, %v2447
        %v2488 = vadd.f32 %v2353, %v2447
        %v2489 = vadd.f32 %v2354, %v2447
        %v2490 = vadd.f32 %v2355, %v2447
        %v2491 = vadd.f32 %v2356, %v2447
        %v2492 = vadd.f32 %v2357, %v2447
        %v2493 = vadd.f32 %v2358, %v2447
        %v2494 = vadd.f32 %v2359, %v2447
        %v2495 = vadd.f32 %v2360, %v2447
        %v2496 = vadd.f32 %v2361, %v2447
        %v2497 = vadd.f32 %v2362, %v2447
        %v2498 = vadd.f32 %v2363, %v2447
        %v2499 = vadd.f32 %v2364, %v2447
        %v2500 = vadd.f32 %v2365, %v2447
        %v2501 = vadd.f32 %v2366, %v2447
        %v2502 = vadd.f32 %v2367, %v2447
        %v2503 = vadd.f32 %v2368, %v2447
        %v2504 = vadd.f32 %v2369, %v2447
        %v2505 = vadd.f32 %v2370, %v2447
        %v2506 = vadd.f32 %v2371, %v2447
        %v2507 = vadd.f32 %v2372, %v2447
        %v2508 = vadd.f32 %v2373, %v2447
        %v2509 = vadd.f32 %v2374, %v2447
        %v2510 = vadd.f32 %v2375, %v2447
        %v2511 = vadd.f32 %v2376, %v2447
        %v2512 = vadd.f32 %v2377, %v2447
        %v2513 = vadd.f32 %v2378, %v2447
        %v2514 = vadd.f32 %v2379, %v2447
        %v2515 = vadd.f32 %v2380, %v2447
        %v2516 = vadd.f32 %v2381, %v2447
        %v2517 = vadd.f32 %v2382, %v2447
        %v2518 = vadd.f32 %v2383, %v2447
        %v2519 = vadd.f32 %v2384, %v2447
        %v2520 = vadd.f32 %v2385, %v2447
        %v2521 = vadd.f32 %v2386, %v2447
        %v2522 = vadd.f32 %v2387, %v2447
        %v2523 = vadd.f32 %v2388, %v2447
        %v2524 = vadd.f32 %v2389, %v2447
        %v2525 = vadd.f32 %v2390, %v2447
        %v2526 = vadd.f32 %v2391, %v2447
        %v2527 = vadd.f32 %v2392, %v2447
        %v2528 = vadd.f32 %v2393, %v2447
        %v2529 = vadd.f32 %v2394, %v2447
        %v2530 = vadd.f32 %v2395, %v2447
        %v2531 = vadd.f32 %v2396, %v2447
        %v2532 = vadd.f32 %v2397, %v2447
        %v2533 = vadd.f32 %v2398, %v2447
        %v2534 = vadd.f32 %v2399, %v2447
        %v2535 = vadd.f32 %v2400, %v2447
        %v2536 = vadd.f32 %v2401, %v2447
        %v2537 = vadd.f32 %v2402, %v2447
        %v2538 = vadd.f32 %v2403, %v2447
        %v2539 = vadd.f32 %v2404, %v2447
        %v2540 = vadd.f32 %v2405, %v2447
        %v2541 = vadd.f32 %v2406, %v2447
        %v2542 = vadd.f32 %v2407, %v2447
        %v2543 = vadd.f32 %v2408, %v2447
        %v2544 = vadd.f32 %v2409, %v2447
        %v2545 = vadd.f32 %v2410, %v2447
        %v2546 = vadd.f32 %v2411, %v2447
        %v2547 = vadd.f32 %v2412, %v2447
        %v2548 = vadd.f32 %v2413, %v2447
        %v2549 = vadd.f32 %v2414, %v2447
        %v2550 = vadd.f32 %v2415, %v2447
        %v2551 = vadd.f32 %v2416, %v2447
        %v2552 = vadd.f32 %v2417, %v2447
        %v2553 = vadd.f32 %v2418, %v2447
        %v2554 = vadd.f32 %v2419, %v2447
        %v2555 = vadd.f32 %v2420, %v2447
        %v2556 = vadd.f32 %v2421, %v2447
        %v2557 = vadd.f32 %v2422, %v2447
        %v2558 = vadd.f32 %v2423, %v2447
        %v2559 = vadd.f32 %v2424, %v2447
        %v2560 = vadd.f32 %v2425, %v2447
        %v2561 = vadd.f32 %v2426, %v2447
        %v2562 = vadd.f32 %v2427, %v2447
        %v2563 = vadd.f32 %v2428, %v2447
        %v2564 = vadd.f32 %v2429, %v2447
        %v2565 = vadd.f32 %v2430, %v2447
        %v2566 = vadd.f32 %v2431, %v2447
        %v2567 = vadd.f32 %v2432, %v2447
        %v2568 = vadd.f32 %v2433, %v2447
        %v2569 = vadd.f32 %v2434, %v2447
        %v2570 = vadd.f32 %v2435, %v2447
        %v2571 = vadd.f32 %v2436, %v2447
        %v2572 = vadd.f32 %v2437, %v2447
        %v2573 = vadd.f32 %v2438, %v2447
        %v2574 = vadd.f32 %v2439, %v2447
        %v2575 = vadd.f32 %v2440, %v2447
        %v2576 = vadd.f32 %v2441, %v2447
        %vm2577 = vcmp.ge.f32.partialorder %v2449, 0.0
        %vm2578 = vcmp.ge.f32.partialorder %v2450, 0.0
        %vm2579 = vcmp.ge.f32.partialorder %v2451, 0.0
        %vm2580 = vcmp.ge.f32.partialorder %v2452, 0.0
        %vm2581 = vcmp.ge.f32.partialorder %v2453, 0.0
        %vm2582 = vcmp.ge.f32.partialorder %v2454, 0.0
        %vm2583 = vcmp.ge.f32.partialorder %v2455, 0.0
        %vm2584 = vcmp.ge.f32.partialorder %v2456, 0.0
        %vm2585 = vcmp.ge.f32.partialorder %v2457, 0.0
        %vm2586 = vcmp.ge.f32.partialorder %v2458, 0.0
        %vm2587 = vcmp.ge.f32.partialorder %v2459, 0.0
        %vm2588 = vcmp.ge.f32.partialorder %v2460, 0.0
        %vm2589 = vcmp.ge.f32.partialorder %v2461, 0.0
        %vm2590 = vcmp.ge.f32.partialorder %v2462, 0.0
        %vm2591 = vcmp.ge.f32.partialorder %v2463, 0.0
        %vm2592 = vcmp.ge.f32.partialorder %v2464, 0.0
        %vm2593 = vcmp.ge.f32.partialorder %v2465, 0.0
        %vm2594 = vcmp.ge.f32.partialorder %v2466, 0.0
        %vm2595 = vcmp.ge.f32.partialorder %v2467, 0.0
        %vm2596 = vcmp.ge.f32.partialorder %v2468, 0.0
        %vm2597 = vcmp.ge.f32.partialorder %v2469, 0.0
        %vm2598 = vcmp.ge.f32.partialorder %v2470, 0.0
        %vm2599 = vcmp.ge.f32.partialorder %v2471, 0.0
        %vm2600 = vcmp.ge.f32.partialorder %v2472, 0.0
        %vm2601 = vcmp.ge.f32.partialorder %v2473, 0.0
        %vm2602 = vcmp.ge.f32.partialorder %v2474, 0.0
        %vm2603 = vcmp.ge.f32.partialorder %v2475, 0.0
        %vm2604 = vcmp.ge.f32.partialorder %v2476, 0.0
        %vm2605 = vcmp.ge.f32.partialorder %v2477, 0.0
        %vm2606 = vcmp.ge.f32.partialorder %v2478, 0.0
        %vm2607 = vcmp.ge.f32.partialorder %v2479, 0.0
        %vm2608 = vcmp.ge.f32.partialorder %v2480, 0.0
        %vm2609 = vcmp.ge.f32.partialorder %v2481, 0.0
        %vm2610 = vcmp.ge.f32.partialorder %v2482, 0.0
        %vm2611 = vcmp.ge.f32.partialorder %v2483, 0.0
        %vm2612 = vcmp.ge.f32.partialorder %v2484, 0.0
        %vm2613 = vcmp.ge.f32.partialorder %v2485, 0.0
        %vm2614 = vcmp.ge.f32.partialorder %v2486, 0.0
        %vm2615 = vcmp.ge.f32.partialorder %v2487, 0.0
        %vm2616 = vcmp.ge.f32.partialorder %v2488, 0.0
        %vm2617 = vcmp.ge.f32.partialorder %v2489, 0.0
        %vm2618 = vcmp.ge.f32.partialorder %v2490, 0.0
        %vm2619 = vcmp.ge.f32.partialorder %v2491, 0.0
        %vm2620 = vcmp.ge.f32.partialorder %v2492, 0.0
        %vm2621 = vcmp.ge.f32.partialorder %v2493, 0.0
        %vm2622 = vcmp.ge.f32.partialorder %v2494, 0.0
        %vm2623 = vcmp.ge.f32.partialorder %v2495, 0.0
        %vm2624 = vcmp.ge.f32.partialorder %v2496, 0.0
        %vm2625 = vcmp.ge.f32.partialorder %v2497, 0.0
        %vm2626 = vcmp.ge.f32.partialorder %v2498, 0.0
        %vm2627 = vcmp.ge.f32.partialorder %v2499, 0.0
        %vm2628 = vcmp.ge.f32.partialorder %v2500, 0.0
        %vm2629 = vcmp.ge.f32.partialorder %v2501, 0.0
        %vm2630 = vcmp.ge.f32.partialorder %v2502, 0.0
        %vm2631 = vcmp.ge.f32.partialorder %v2503, 0.0
        %vm2632 = vcmp.ge.f32.partialorder %v2504, 0.0
        %vm2633 = vcmp.ge.f32.partialorder %v2505, 0.0
        %vm2634 = vcmp.ge.f32.partialorder %v2506, 0.0
        %vm2635 = vcmp.ge.f32.partialorder %v2507, 0.0
        %vm2636 = vcmp.ge.f32.partialorder %v2508, 0.0
        %vm2637 = vcmp.ge.f32.partialorder %v2509, 0.0
        %vm2638 = vcmp.ge.f32.partialorder %v2510, 0.0
        %vm2639 = vcmp.ge.f32.partialorder %v2511, 0.0
        %vm2640 = vcmp.ge.f32.partialorder %v2512, 0.0
        %vm2641 = vcmp.ge.f32.partialorder %v2513, 0.0
        %vm2642 = vcmp.ge.f32.partialorder %v2514, 0.0
        %vm2643 = vcmp.ge.f32.partialorder %v2515, 0.0
        %vm2644 = vcmp.ge.f32.partialorder %v2516, 0.0
        %vm2645 = vcmp.ge.f32.partialorder %v2517, 0.0
        %vm2646 = vcmp.ge.f32.partialorder %v2518, 0.0
        %vm2647 = vcmp.ge.f32.partialorder %v2519, 0.0
        %vm2648 = vcmp.ge.f32.partialorder %v2520, 0.0
        %vm2649 = vcmp.ge.f32.partialorder %v2521, 0.0
        %vm2650 = vcmp.ge.f32.partialorder %v2522, 0.0
        %vm2651 = vcmp.ge.f32.partialorder %v2523, 0.0
        %vm2652 = vcmp.ge.f32.partialorder %v2524, 0.0
        %vm2653 = vcmp.ge.f32.partialorder %v2525, 0.0
        %vm2654 = vcmp.ge.f32.partialorder %v2526, 0.0
        %vm2655 = vcmp.ge.f32.partialorder %v2527, 0.0
        %vm2656 = vcmp.ge.f32.partialorder %v2528, 0.0
        %vm2657 = vcmp.ge.f32.partialorder %v2529, 0.0
        %vm2658 = vcmp.ge.f32.partialorder %v2530, 0.0
        %vm2659 = vcmp.ge.f32.partialorder %v2531, 0.0
        %vm2660 = vcmp.ge.f32.partialorder %v2532, 0.0
        %vm2661 = vcmp.ge.f32.partialorder %v2533, 0.0
        %vm2662 = vcmp.ge.f32.partialorder %v2534, 0.0
        %vm2663 = vcmp.ge.f32.partialorder %v2535, 0.0
        %vm2664 = vcmp.ge.f32.partialorder %v2536, 0.0
        %vm2665 = vcmp.ge.f32.partialorder %v2537, 0.0
        %vm2666 = vcmp.ge.f32.partialorder %v2538, 0.0
        %vm2667 = vcmp.ge.f32.partialorder %v2539, 0.0
        %vm2668 = vcmp.ge.f32.partialorder %v2540, 0.0
        %vm2669 = vcmp.ge.f32.partialorder %v2541, 0.0
        %vm2670 = vcmp.ge.f32.partialorder %v2542, 0.0
        %vm2671 = vcmp.ge.f32.partialorder %v2543, 0.0
        %vm2672 = vcmp.ge.f32.partialorder %v2544, 0.0
        %vm2673 = vcmp.ge.f32.partialorder %v2545, 0.0
        %vm2674 = vcmp.ge.f32.partialorder %v2546, 0.0
        %vm2675 = vcmp.ge.f32.partialorder %v2547, 0.0
        %vm2676 = vcmp.ge.f32.partialorder %v2548, 0.0
        %vm2677 = vcmp.ge.f32.partialorder %v2549, 0.0
        %vm2678 = vcmp.ge.f32.partialorder %v2550, 0.0
        %vm2679 = vcmp.ge.f32.partialorder %v2551, 0.0
        %vm2680 = vcmp.ge.f32.partialorder %v2552, 0.0
        %vm2681 = vcmp.ge.f32.partialorder %v2553, 0.0
        %vm2682 = vcmp.ge.f32.partialorder %v2554, 0.0
        %vm2683 = vcmp.ge.f32.partialorder %v2555, 0.0
        %vm2684 = vcmp.ge.f32.partialorder %v2556, 0.0
        %vm2685 = vcmp.ge.f32.partialorder %v2557, 0.0
        %vm2686 = vcmp.ge.f32.partialorder %v2558, 0.0
        %vm2687 = vcmp.ge.f32.partialorder %v2559, 0.0
        %vm2688 = vcmp.ge.f32.partialorder %v2560, 0.0
        %vm2689 = vcmp.ge.f32.partialorder %v2561, 0.0
        %vm2690 = vcmp.ge.f32.partialorder %v2562, 0.0
        %vm2691 = vcmp.ge.f32.partialorder %v2563, 0.0
        %vm2692 = vcmp.ge.f32.partialorder %v2564, 0.0
        %vm2693 = vcmp.ge.f32.partialorder %v2565, 0.0
        %vm2694 = vcmp.ge.f32.partialorder %v2566, 0.0
        %vm2695 = vcmp.ge.f32.partialorder %v2567, 0.0
        %vm2696 = vcmp.ge.f32.partialorder %v2568, 0.0
        %vm2697 = vcmp.ge.f32.partialorder %v2569, 0.0
        %vm2698 = vcmp.ge.f32.partialorder %v2570, 0.0
        %vm2699 = vcmp.ge.f32.partialorder %v2571, 0.0
        %vm2700 = vcmp.ge.f32.partialorder %v2572, 0.0
        %vm2701 = vcmp.ge.f32.partialorder %v2573, 0.0
        %vm2702 = vcmp.ge.f32.partialorder %v2574, 0.0
        %vm2703 = vcmp.ge.f32.partialorder %v2575, 0.0
        %vm2704 = vcmp.ge.f32.partialorder %v2576, 0.0
        %v2705 = vmul.f32 %v2449, 0.1
        %v2706 = vmul.f32 %v2450, 0.1
        %v2707 = vmul.f32 %v2451, 0.1
        %v2708 = vmul.f32 %v2452, 0.1
        %v2709 = vmul.f32 %v2453, 0.1
        %v2710 = vmul.f32 %v2454, 0.1
        %v2711 = vmul.f32 %v2455, 0.1
        %v2712 = vmul.f32 %v2456, 0.1
        %v2713 = vmul.f32 %v2457, 0.1
        %v2714 = vmul.f32 %v2458, 0.1
        %v2715 = vmul.f32 %v2459, 0.1
        %v2716 = vmul.f32 %v2460, 0.1
        %v2717 = vmul.f32 %v2461, 0.1
        %v2718 = vmul.f32 %v2462, 0.1
        %v2719 = vmul.f32 %v2463, 0.1
        %v2720 = vmul.f32 %v2464, 0.1
        %v2721 = vmul.f32 %v2465, 0.1
        %v2722 = vmul.f32 %v2466, 0.1
        %v2723 = vmul.f32 %v2467, 0.1
        %v2724 = vmul.f32 %v2468, 0.1
        %v2725 = vmul.f32 %v2469, 0.1
        %v2726 = vmul.f32 %v2470, 0.1
        %v2727 = vmul.f32 %v2471, 0.1
        %v2728 = vmul.f32 %v2472, 0.1
        %v2729 = vmul.f32 %v2473, 0.1
        %v2730 = vmul.f32 %v2474, 0.1
        %v2731 = vmul.f32 %v2475, 0.1
        %v2732 = vmul.f32 %v2476, 0.1
        %v2733 = vmul.f32 %v2477, 0.1
        %v2734 = vmul.f32 %v2478, 0.1
        %v2735 = vmul.f32 %v2479, 0.1
        %v2736 = vmul.f32 %v2480, 0.1
        %v2737 = vmul.f32 %v2481, 0.1
        %v2738 = vmul.f32 %v2482, 0.1
        %v2739 = vmul.f32 %v2483, 0.1
        %v2740 = vmul.f32 %v2484, 0.1
        %v2741 = vmul.f32 %v2485, 0.1
        %v2742 = vmul.f32 %v2486, 0.1
        %v2743 = vmul.f32 %v2487, 0.1
        %v2744 = vmul.f32 %v2488, 0.1
        %v2745 = vmul.f32 %v2489, 0.1
        %v2746 = vmul.f32 %v2490, 0.1
        %v2747 = vmul.f32 %v2491, 0.1
        %v2748 = vmul.f32 %v2492, 0.1
        %v2749 = vmul.f32 %v2493, 0.1
        %v2750 = vmul.f32 %v2494, 0.1
        %v2751 = vmul.f32 %v2495, 0.1
        %v2752 = vmul.f32 %v2496, 0.1
        %v2753 = vmul.f32 %v2497, 0.1
        %v2754 = vmul.f32 %v2498, 0.1
        %v2755 = vmul.f32 %v2499, 0.1
        %v2756 = vmul.f32 %v2500, 0.1
        %v2757 = vmul.f32 %v2501, 0.1
        %v2758 = vmul.f32 %v2502, 0.1
        %v2759 = vmul.f32 %v2503, 0.1
        %v2760 = vmul.f32 %v2504, 0.1
        %v2761 = vmul.f32 %v2505, 0.1
        %v2762 = vmul.f32 %v2506, 0.1
        %v2763 = vmul.f32 %v2507, 0.1
        %v2764 = vmul.f32 %v2508, 0.1
        %v2765 = vmul.f32 %v2509, 0.1
        %v2766 = vmul.f32 %v2510, 0.1
        %v2767 = vmul.f32 %v2511, 0.1
        %v2768 = vmul.f32 %v2512, 0.1
        %v2769 = vmul.f32 %v2513, 0.1
        %v2770 = vmul.f32 %v2514, 0.1
        %v2771 = vmul.f32 %v2515, 0.1
        %v2772 = vmul.f32 %v2516, 0.1
        %v2773 = vmul.f32 %v2517, 0.1
        %v2774 = vmul.f32 %v2518, 0.1
        %v2775 = vmul.f32 %v2519, 0.1
        %v2776 = vmul.f32 %v2520, 0.1
        %v2777 = vmul.f32 %v2521, 0.1
        %v2778 = vmul.f32 %v2522, 0.1
        %v2779 = vmul.f32 %v2523, 0.1
        %v2780 = vmul.f32 %v2524, 0.1
        %v2781 = vmul.f32 %v2525, 0.1
        %v2782 = vmul.f32 %v2526, 0.1
        %v2783 = vmul.f32 %v2527, 0.1
        %v2784 = vmul.f32 %v2528, 0.1
        %v2785 = vmul.f32 %v2529, 0.1
        %v2786 = vmul.f32 %v2530, 0.1
        %v2787 = vmul.f32 %v2531, 0.1
        %v2788 = vmul.f32 %v2532, 0.1
        %v2789 = vmul.f32 %v2533, 0.1
        %v2790 = vmul.f32 %v2534, 0.1
        %v2791 = vmul.f32 %v2535, 0.1
        %v2792 = vmul.f32 %v2536, 0.1
        %v2793 = vmul.f32 %v2537, 0.1
        %v2794 = vmul.f32 %v2538, 0.1
        %v2795 = vmul.f32 %v2539, 0.1
        %v2796 = vmul.f32 %v2540, 0.1
        %v2797 = vmul.f32 %v2541, 0.1
        %v2798 = vmul.f32 %v2542, 0.1
        %v2799 = vmul.f32 %v2543, 0.1
        %v2800 = vmul.f32 %v2544, 0.1
        %v2801 = vmul.f32 %v2545, 0.1
        %v2802 = vmul.f32 %v2546, 0.1
        %v2803 = vmul.f32 %v2547, 0.1
        %v2804 = vmul.f32 %v2548, 0.1
        %v2805 = vmul.f32 %v2549, 0.1
        %v2806 = vmul.f32 %v2550, 0.1
        %v2807 = vmul.f32 %v2551, 0.1
        %v2808 = vmul.f32 %v2552, 0.1
        %v2809 = vmul.f32 %v2553, 0.1
        %v2810 = vmul.f32 %v2554, 0.1
        %v2811 = vmul.f32 %v2555, 0.1
        %v2812 = vmul.f32 %v2556, 0.1
        %v2813 = vmul.f32 %v2557, 0.1
        %v2814 = vmul.f32 %v2558, 0.1
        %v2815 = vmul.f32 %v2559, 0.1
        %v2816 = vmul.f32 %v2560, 0.1
        %v2817 = vmul.f32 %v2561, 0.1
        %v2818 = vmul.f32 %v2562, 0.1
        %v2819 = vmul.f32 %v2563, 0.1
        %v2820 = vmul.f32 %v2564, 0.1
        %v2821 = vmul.f32 %v2565, 0.1
        %v2822 = vmul.f32 %v2566, 0.1
        %v2823 = vmul.f32 %v2567, 0.1
        %v2824 = vmul.f32 %v2568, 0.1
        %v2825 = vmul.f32 %v2569, 0.1
        %v2826 = vmul.f32 %v2570, 0.1
        %v2827 = vmul.f32 %v2571, 0.1
        %v2828 = vmul.f32 %v2572, 0.1
        %v2829 = vmul.f32 %v2573, 0.1
        %v2830 = vmul.f32 %v2574, 0.1
        %v2831 = vmul.f32 %v2575, 0.1
        %v2832 = vmul.f32 %v2576, 0.1
        %v2833 = vsel %vm2577, %v2449, %v2705
        %v2834 = vsel %vm2578, %v2450, %v2706
        %v2835 = vsel %vm2579, %v2451, %v2707
        %v2836 = vsel %vm2580, %v2452, %v2708
        %v2837 = vsel %vm2581, %v2453, %v2709
        %v2838 = vsel %vm2582, %v2454, %v2710
        %v2839 = vsel %vm2583, %v2455, %v2711
        %v2840 = vsel %vm2584, %v2456, %v2712
        %v2841 = vsel %vm2585, %v2457, %v2713
        %v2842 = vsel %vm2586, %v2458, %v2714
        %v2843 = vsel %vm2587, %v2459, %v2715
        %v2844 = vsel %vm2588, %v2460, %v2716
        %v2845 = vsel %vm2589, %v2461, %v2717
        %v2846 = vsel %vm2590, %v2462, %v2718
        %v2847 = vsel %vm2591, %v2463, %v2719
        %v2848 = vsel %vm2592, %v2464, %v2720
        %v2849 = vsel %vm2593, %v2465, %v2721
        %v2850 = vsel %vm2594, %v2466, %v2722
        %v2851 = vsel %vm2595, %v2467, %v2723
        %v2852 = vsel %vm2596, %v2468, %v2724
        %v2853 = vsel %vm2597, %v2469, %v2725
        %v2854 = vsel %vm2598, %v2470, %v2726
        %v2855 = vsel %vm2599, %v2471, %v2727
        %v2856 = vsel %vm2600, %v2472, %v2728
        %v2857 = vsel %vm2601, %v2473, %v2729
        %v2858 = vsel %vm2602, %v2474, %v2730
        %v2859 = vsel %vm2603, %v2475, %v2731
        %v2860 = vsel %vm2604, %v2476, %v2732
        %v2861 = vsel %vm2605, %v2477, %v2733
        %v2862 = vsel %vm2606, %v2478, %v2734
        %v2863 = vsel %vm2607, %v2479, %v2735
        %v2864 = vsel %vm2608, %v2480, %v2736
        %v2865 = vsel %vm2609, %v2481, %v2737
        %v2866 = vsel %vm2610, %v2482, %v2738
        %v2867 = vsel %vm2611, %v2483, %v2739
        %v2868 = vsel %vm2612, %v2484, %v2740
        %v2869 = vsel %vm2613, %v2485, %v2741
        %v2870 = vsel %vm2614, %v2486, %v2742
        %v2871 = vsel %vm2615, %v2487, %v2743
        %v2872 = vsel %vm2616, %v2488, %v2744
        %v2873 = vsel %vm2617, %v2489, %v2745
        %v2874 = vsel %vm2618, %v2490, %v2746
        %v2875 = vsel %vm2619, %v2491, %v2747
        %v2876 = vsel %vm2620, %v2492, %v2748
        %v2877 = vsel %vm2621, %v2493, %v2749
        %v2878 = vsel %vm2622, %v2494, %v2750
        %v2879 = vsel %vm2623, %v2495, %v2751
        %v2880 = vsel %vm2624, %v2496, %v2752
        %v2881 = vsel %vm2625, %v2497, %v2753
        %v2882 = vsel %vm2626, %v2498, %v2754
        %v2883 = vsel %vm2627, %v2499, %v2755
        %v2884 = vsel %vm2628, %v2500, %v2756
        %v2885 = vsel %vm2629, %v2501, %v2757
        %v2886 = vsel %vm2630, %v2502, %v2758
        %v2887 = vsel %vm2631, %v2503, %v2759
        %v2888 = vsel %vm2632, %v2504, %v2760
        %v2889 = vsel %vm2633, %v2505, %v2761
        %v2890 = vsel %vm2634, %v2506, %v2762
        %v2891 = vsel %vm2635, %v2507, %v2763
        %v2892 = vsel %vm2636, %v2508, %v2764
        %v2893 = vsel %vm2637, %v2509, %v2765
        %v2894 = vsel %vm2638, %v2510, %v2766
        %v2895 = vsel %vm2639, %v2511, %v2767
        %v2896 = vsel %vm2640, %v2512, %v2768
        %v2897 = vsel %vm2641, %v2513, %v2769
        %v2898 = vsel %vm2642, %v2514, %v2770
        %v2899 = vsel %vm2643, %v2515, %v2771
        %v2900 = vsel %vm2644, %v2516, %v2772
        %v2901 = vsel %vm2645, %v2517, %v2773
        %v2902 = vsel %vm2646, %v2518, %v2774
        %v2903 = vsel %vm2647, %v2519, %v2775
        %v2904 = vsel %vm2648, %v2520, %v2776
        %v2905 = vsel %vm2649, %v2521, %v2777
        %v2906 = vsel %vm2650, %v2522, %v2778
        %v2907 = vsel %vm2651, %v2523, %v2779
        %v2908 = vsel %vm2652, %v2524, %v2780
        %v2909 = vsel %vm2653, %v2525, %v2781
        %v2910 = vsel %vm2654, %v2526, %v2782
        %v2911 = vsel %vm2655, %v2527, %v2783
        %v2912 = vsel %vm2656, %v2528, %v2784
        %v2913 = vsel %vm2657, %v2529, %v2785
        %v2914 = vsel %vm2658, %v2530, %v2786
        %v2915 = vsel %vm2659, %v2531, %v2787
        %v2916 = vsel %vm2660, %v2532, %v2788
        %v2917 = vsel %vm2661, %v2533, %v2789
        %v2918 = vsel %vm2662, %v2534, %v2790
        %v2919 = vsel %vm2663, %v2535, %v2791
        %v2920 = vsel %vm2664, %v2536, %v2792
        %v2921 = vsel %vm2665, %v2537, %v2793
        %v2922 = vsel %vm2666, %v2538, %v2794
        %v2923 = vsel %vm2667, %v2539, %v2795
        %v2924 = vsel %vm2668, %v2540, %v2796
        %v2925 = vsel %vm2669, %v2541, %v2797
        %v2926 = vsel %vm2670, %v2542, %v2798
        %v2927 = vsel %vm2671, %v2543, %v2799
        %v2928 = vsel %vm2672, %v2544, %v2800
        %v2929 = vsel %vm2673, %v2545, %v2801
        %v2930 = vsel %vm2674, %v2546, %v2802
        %v2931 = vsel %vm2675, %v2547, %v2803
        %v2932 = vsel %vm2676, %v2548, %v2804
        %v2933 = vsel %vm2677, %v2549, %v2805
        %v2934 = vsel %vm2678, %v2550, %v2806
        %v2935 = vsel %vm2679, %v2551, %v2807
        %v2936 = vsel %vm2680, %v2552, %v2808
        %v2937 = vsel %vm2681, %v2553, %v2809
        %v2938 = vsel %vm2682, %v2554, %v2810
        %v2939 = vsel %vm2683, %v2555, %v2811
        %v2940 = vsel %vm2684, %v2556, %v2812
        %v2941 = vsel %vm2685, %v2557, %v2813
        %v2942 = vsel %vm2686, %v2558, %v2814
        %v2943 = vsel %vm2687, %v2559, %v2815
        %v2944 = vsel %vm2688, %v2560, %v2816
        %v2945 = vsel %vm2689, %v2561, %v2817
        %v2946 = vsel %vm2690, %v2562, %v2818
        %v2947 = vsel %vm2691, %v2563, %v2819
        %v2948 = vsel %vm2692, %v2564, %v2820
        %v2949 = vsel %vm2693, %v2565, %v2821
        %v2950 = vsel %vm2694, %v2566, %v2822
        %v2951 = vsel %vm2695, %v2567, %v2823
        %v2952 = vsel %vm2696, %v2568, %v2824
        %v2953 = vsel %vm2697, %v2569, %v2825
        %v2954 = vsel %vm2698, %v2570, %v2826
        %v2955 = vsel %vm2699, %v2571, %v2827
        %v2956 = vsel %vm2700, %v2572, %v2828
        %v2957 = vsel %vm2701, %v2573, %v2829
        %v2958 = vsel %vm2702, %v2574, %v2830
        %v2959 = vsel %vm2703, %v2575, %v2831
        %v2960 = vsel %vm2704, %v2576, %v2832
        %2961 = vst.msk [vmem:[%s265] sm:$0xff] %vm2182, %v2833
        %2962 = vst.msk [vmem:[%s265 + $0x8] sm:$0xff] %vm2182, %v2834
        %2963 = vst.msk [vmem:[%s265 + $0x10] sm:$0xff] %vm2182, %v2835
        %2964 = vst.msk [vmem:[%s265 + $0x18] sm:$0xff] %vm2182, %v2836
        %2965 = vst.msk [vmem:[%s265 + $0x20] sm:$0xff] %vm2182, %v2837
        %2966 = vst.msk [vmem:[%s265 + $0x28] sm:$0xff] %vm2182, %v2838
        %2967 = vst.msk [vmem:[%s265 + $0x30] sm:$0xff] %vm2182, %v2839
        %2968 = vst.msk [vmem:[%s265 + $0x38] sm:$0xff] %vm2182, %v2840
        %2969 = vst.msk [vmem:[%s265 + $0x40] sm:$0xff] %vm2182, %v2841
        %2970 = vst.msk [vmem:[%s265 + $0x48] sm:$0xff] %vm2182, %v2842
        %2971 = vst.msk [vmem:[%s265 + $0x50] sm:$0xff] %vm2182, %v2843
        %2972 = vst.msk [vmem:[%s265 + $0x58] sm:$0xff] %vm2182, %v2844
        %2973 = vst.msk [vmem:[%s265 + $0x60] sm:$0xff] %vm2182, %v2845
        %2974 = vst.msk [vmem:[%s265 + $0x68] sm:$0xff] %vm2182, %v2846
        %2975 = vst.msk [vmem:[%s265 + $0x70] sm:$0xff] %vm2182, %v2847
        %2976 = vst.msk [vmem:[%s265 + $0x78] sm:$0xff] %vm2182, %v2848
        %2977 = vst.msk [vmem:[%s265 + $0x80] sm:$0xff] %vm2182, %v2849
        %2978 = vst.msk [vmem:[%s265 + $0x88] sm:$0xff] %vm2182, %v2850
        %2979 = vst.msk [vmem:[%s265 + $0x90] sm:$0xff] %vm2182, %v2851
        %2980 = vst.msk [vmem:[%s265 + $0x98] sm:$0xff] %vm2182, %v2852
        %2981 = vst.msk [vmem:[%s265 + $0xa0] sm:$0xff] %vm2182, %v2853
        %2982 = vst.msk [vmem:[%s265 + $0xa8] sm:$0xff] %vm2182, %v2854
        %2983 = vst.msk [vmem:[%s265 + $0xb0] sm:$0xff] %vm2182, %v2855
        %2984 = vst.msk [vmem:[%s265 + $0xb8] sm:$0xff] %vm2182, %v2856
        %2985 = vst.msk [vmem:[%s265 + $0xc0] sm:$0xff] %vm2182, %v2857
        %2986 = vst.msk [vmem:[%s265 + $0xc8] sm:$0xff] %vm2182, %v2858
        %2987 = vst.msk [vmem:[%s265 + $0xd0] sm:$0xff] %vm2182, %v2859
        %2988 = vst.msk [vmem:[%s265 + $0xd8] sm:$0xff] %vm2182, %v2860
        %2989 = vst.msk [vmem:[%s265 + $0xe0] sm:$0xff] %vm2182, %v2861
        %2990 = vst.msk [vmem:[%s265 + $0xe8] sm:$0xff] %vm2182, %v2862
        %2991 = vst.msk [vmem:[%s265 + $0xf0] sm:$0xff] %vm2182, %v2863
        %2992 = vst.msk [vmem:[%s265 + $0xf8] sm:$0xff] %vm2182, %v2864
        %2993 = vst.msk [vmem:[%s265 + $0x100] sm:$0xff] %vm2182, %v2865
        %2994 = vst.msk [vmem:[%s265 + $0x108] sm:$0xff] %vm2182, %v2866
        %2995 = vst.msk [vmem:[%s265 + $0x110] sm:$0xff] %vm2182, %v2867
        %2996 = vst.msk [vmem:[%s265 + $0x118] sm:$0xff] %vm2182, %v2868
        %2997 = vst.msk [vmem:[%s265 + $0x120] sm:$0xff] %vm2182, %v2869
        %2998 = vst.msk [vmem:[%s265 + $0x128] sm:$0xff] %vm2182, %v2870
        %2999 = vst.msk [vmem:[%s265 + $0x130] sm:$0xff] %vm2182, %v2871
        %3000 = vst.msk [vmem:[%s265 + $0x138] sm:$0xff] %vm2182, %v2872
        %3001 = vst.msk [vmem:[%s265 + $0x140] sm:$0xff] %vm2182, %v2873
        %3002 = vst.msk [vmem:[%s265 + $0x148] sm:$0xff] %vm2182, %v2874
        %3003 = vst.msk [vmem:[%s265 + $0x150] sm:$0xff] %vm2182, %v2875
        %3004 = vst.msk [vmem:[%s265 + $0x158] sm:$0xff] %vm2182, %v2876
        %3005 = vst.msk [vmem:[%s265 + $0x160] sm:$0xff] %vm2182, %v2877
        %3006 = vst.msk [vmem:[%s265 + $0x168] sm:$0xff] %vm2182, %v2878
        %3007 = vst.msk [vmem:[%s265 + $0x170] sm:$0xff] %vm2182, %v2879
        %3008 = vst.msk [vmem:[%s265 + $0x178] sm:$0xff] %vm2182, %v2880
        %3009 = vst.msk [vmem:[%s265 + $0x180] sm:$0xff] %vm2182, %v2881
        %3010 = vst.msk [vmem:[%s265 + $0x188] sm:$0xff] %vm2182, %v2882
        %3011 = vst.msk [vmem:[%s265 + $0x190] sm:$0xff] %vm2182, %v2883
        %3012 = vst.msk [vmem:[%s265 + $0x198] sm:$0xff] %vm2182, %v2884
        %3013 = vst.msk [vmem:[%s265 + $0x1a0] sm:$0xff] %vm2182, %v2885
        %3014 = vst.msk [vmem:[%s265 + $0x1a8] sm:$0xff] %vm2182, %v2886
        %3015 = vst.msk [vmem:[%s265 + $0x1b0] sm:$0xff] %vm2182, %v2887
        %3016 = vst.msk [vmem:[%s265 + $0x1b8] sm:$0xff] %vm2182, %v2888
        %3017 = vst.msk [vmem:[%s265 + $0x1c0] sm:$0xff] %vm2182, %v2889
        %3018 = vst.msk [vmem:[%s265 + $0x1c8] sm:$0xff] %vm2182, %v2890
        %3019 = vst.msk [vmem:[%s265 + $0x1d0] sm:$0xff] %vm2182, %v2891
        %3020 = vst.msk [vmem:[%s265 + $0x1d8] sm:$0xff] %vm2182, %v2892
        %3021 = vst.msk [vmem:[%s265 + $0x1e0] sm:$0xff] %vm2182, %v2893
        %3022 = vst.msk [vmem:[%s265 + $0x1e8] sm:$0xff] %vm2182, %v2894
        %3023 = vst.msk [vmem:[%s265 + $0x1f0] sm:$0xff] %vm2182, %v2895
        %3024 = vst.msk [vmem:[%s265 + $0x1f8] sm:$0xff] %vm2182, %v2896
        %3025 = vst.msk [vmem:[%s265 + $0x200] sm:$0xff] %vm2182, %v2897
        %3026 = vst.msk [vmem:[%s265 + $0x208] sm:$0xff] %vm2182, %v2898
        %3027 = vst.msk [vmem:[%s265 + $0x210] sm:$0xff] %vm2182, %v2899
        %3028 = vst.msk [vmem:[%s265 + $0x218] sm:$0xff] %vm2182, %v2900
        %3029 = vst.msk [vmem:[%s265 + $0x220] sm:$0xff] %vm2182, %v2901
        %3030 = vst.msk [vmem:[%s265 + $0x228] sm:$0xff] %vm2182, %v2902
        %3031 = vst.msk [vmem:[%s265 + $0x230] sm:$0xff] %vm2182, %v2903
        %3032 = vst.msk [vmem:[%s265 + $0x238] sm:$0xff] %vm2182, %v2904
        %3033 = vst.msk [vmem:[%s265 + $0x240] sm:$0xff] %vm2182, %v2905
        %3034 = vst.msk [vmem:[%s265 + $0x248] sm:$0xff] %vm2182, %v2906
        %3035 = vst.msk [vmem:[%s265 + $0x250] sm:$0xff] %vm2182, %v2907
        %3036 = vst.msk [vmem:[%s265 + $0x258] sm:$0xff] %vm2182, %v2908
        %3037 = vst.msk [vmem:[%s265 + $0x260] sm:$0xff] %vm2182, %v2909
        %3038 = vst.msk [vmem:[%s265 + $0x268] sm:$0xff] %vm2182, %v2910
        %3039 = vst.msk [vmem:[%s265 + $0x270] sm:$0xff] %vm2182, %v2911
        %3040 = vst.msk [vmem:[%s265 + $0x278] sm:$0xff] %vm2182, %v2912
        %3041 = vst.msk [vmem:[%s265 + $0x280] sm:$0xff] %vm2182, %v2913
        %3042 = vst.msk [vmem:[%s265 + $0x288] sm:$0xff] %vm2182, %v2914
        %3043 = vst.msk [vmem:[%s265 + $0x290] sm:$0xff] %vm2182, %v2915
        %3044 = vst.msk [vmem:[%s265 + $0x298] sm:$0xff] %vm2182, %v2916
        %3045 = vst.msk [vmem:[%s265 + $0x2a0] sm:$0xff] %vm2182, %v2917
        %3046 = vst.msk [vmem:[%s265 + $0x2a8] sm:$0xff] %vm2182, %v2918
        %3047 = vst.msk [vmem:[%s265 + $0x2b0] sm:$0xff] %vm2182, %v2919
        %3048 = vst.msk [vmem:[%s265 + $0x2b8] sm:$0xff] %vm2182, %v2920
        %3049 = vst.msk [vmem:[%s265 + $0x2c0] sm:$0xff] %vm2182, %v2921
        %3050 = vst.msk [vmem:[%s265 + $0x2c8] sm:$0xff] %vm2182, %v2922
        %3051 = vst.msk [vmem:[%s265 + $0x2d0] sm:$0xff] %vm2182, %v2923
        %3052 = vst.msk [vmem:[%s265 + $0x2d8] sm:$0xff] %vm2182, %v2924
        %3053 = vst.msk [vmem:[%s265 + $0x2e0] sm:$0xff] %vm2182, %v2925
        %3054 = vst.msk [vmem:[%s265 + $0x2e8] sm:$0xff] %vm2182, %v2926
        %3055 = vst.msk [vmem:[%s265 + $0x2f0] sm:$0xff] %vm2182, %v2927
        %3056 = vst.msk [vmem:[%s265 + $0x2f8] sm:$0xff] %vm2182, %v2928
        %3057 = vst.msk [vmem:[%s265 + $0x300] sm:$0xff] %vm2182, %v2929
        %3058 = vst.msk [vmem:[%s265 + $0x308] sm:$0xff] %vm2182, %v2930
        %3059 = vst.msk [vmem:[%s265 + $0x310] sm:$0xff] %vm2182, %v2931
        %3060 = vst.msk [vmem:[%s265 + $0x318] sm:$0xff] %vm2182, %v2932
        %3061 = vst.msk [vmem:[%s265 + $0x320] sm:$0xff] %vm2182, %v2933
        %3062 = vst.msk [vmem:[%s265 + $0x328] sm:$0xff] %vm2182, %v2934
        %3063 = vst.msk [vmem:[%s265 + $0x330] sm:$0xff] %vm2182, %v2935
        %3064 = vst.msk [vmem:[%s265 + $0x338] sm:$0xff] %vm2182, %v2936
        %3065 = vst.msk [vmem:[%s265 + $0x340] sm:$0xff] %vm2182, %v2937
        %3066 = vst.msk [vmem:[%s265 + $0x348] sm:$0xff] %vm2182, %v2938
        %3067 = vst.msk [vmem:[%s265 + $0x350] sm:$0xff] %vm2182, %v2939
        %3068 = vst.msk [vmem:[%s265 + $0x358] sm:$0xff] %vm2182, %v2940
        %3069 = vst.msk [vmem:[%s265 + $0x360] sm:$0xff] %vm2182, %v2941
        %3070 = vst.msk [vmem:[%s265 + $0x368] sm:$0xff] %vm2182, %v2942
        %3071 = vst.msk [vmem:[%s265 + $0x370] sm:$0xff] %vm2182, %v2943
        %3072 = vst.msk [vmem:[%s265 + $0x378] sm:$0xff] %vm2182, %v2944
        %3073 = vst.msk [vmem:[%s265 + $0x380] sm:$0xff] %vm2182, %v2945
        %3074 = vst.msk [vmem:[%s265 + $0x388] sm:$0xff] %vm2182, %v2946
        %3075 = vst.msk [vmem:[%s265 + $0x390] sm:$0xff] %vm2182, %v2947
        %3076 = vst.msk [vmem:[%s265 + $0x398] sm:$0xff] %vm2182, %v2948
        %3077 = vst.msk [vmem:[%s265 + $0x3a0] sm:$0xff] %vm2182, %v2949
        %3078 = vst.msk [vmem:[%s265 + $0x3a8] sm:$0xff] %vm2182, %v2950
        %3079 = vst.msk [vmem:[%s265 + $0x3b0] sm:$0xff] %vm2182, %v2951
        %3080 = vst.msk [vmem:[%s265 + $0x3b8] sm:$0xff] %vm2182, %v2952
        %3081 = vst.msk [vmem:[%s265 + $0x3c0] sm:$0xff] %vm2182, %v2953
        %3082 = vst.msk [vmem:[%s265 + $0x3c8] sm:$0xff] %vm2182, %v2954
        %3083 = vst.msk [vmem:[%s265 + $0x3d0] sm:$0xff] %vm2182, %v2955
        %3084 = vst.msk [vmem:[%s265 + $0x3d8] sm:$0xff] %vm2182, %v2956
        %3085 = vst.msk [vmem:[%s265 + $0x3e0] sm:$0xff] %vm2182, %v2957
        %3086 = vst.msk [vmem:[%s265 + $0x3e8] sm:$0xff] %vm2182, %v2958
        %3087 = vst.msk [vmem:[%s265 + $0x3f0] sm:$0xff] %vm2182, %v2959
        %3088 = vst.msk [vmem:[%s265 + $0x3f8] sm:$0xff] %vm2182, %v2960
      $region40: #{tpu_custom_call.1} parent=31 // pred_fallthru
        _
      %s3089 = smul.u32 128, %s19
      %p3090 = scmp.lt.s32.totalorder %s3089, 255
      %s3091 = scalar_select %p3090, %s3089, 255
      %p3092 = scmp.lt.s32.totalorder %s20, 0
      %s3093 = scalar_select %p3092, %s20, 0
      %s3094 = sadd.s32 %s3093, %s3091
      %s3095 = smul.addr %s3094, 8
      %s3096 = scalar_lea.vmem %s3, %s3095
      // Predicated region
      $region41: #{tpu_custom_call.1} parent=31 // pred_check
        %p3097 = pneg %p135
      $region42: #{tpu_custom_call.1} parent=31 // pred_check_branch
        %3099 = sbr.rel (%p3097) target = $region44
      $region43: #{tpu_custom_call.1} parent=31 // pred_region
        %s3100 = smul.u32 128, %s19
      $region44: #{tpu_custom_call.1} parent=31 // pred_fallthru
        _
    $region32: #{tpu_custom_call.1} parent=5 // pred_fallthru
      _
    %p3101 = scmp.le.s32.totalorder 2, %s9
    // Predicated region
    $region45: #{tpu_custom_call.1} parent=5 // pred_check
      %p3102 = pneg %p3101
    $region46: #{tpu_custom_call.1} parent=5 // pred_check_branch
      %3104 = sbr.rel (%p3102) target = $region48
    $region47: #{tpu_custom_call.1} parent=5 // pred_region
      %s3105 = ssub.s32 %s9, 2
      // Predicated region
      $region49: #{tpu_custom_call.1} parent=47 // pred_check
        %p3106 = pneg %p141
      $region50: #{tpu_custom_call.1} parent=47 // pred_check_branch
        %3108 = sbr.rel (%p3106) target = $region52
      $region51: #{tpu_custom_call.1} parent=47 // pred_region
        %s3109 = smul.u32 128, %s22
        %p3110 = scmp.lt.s32.totalorder %s3109, 255
        %s3111 = scalar_select %p3110, %s3109, 255
        %p3112 = scmp.lt.s32.totalorder %s23, 0
        %s3113 = scalar_select %p3112, %s23, 0
        %s3114 = sadd.s32 %s3113, %s3111
        %s3115 = smul.addr %s3114, 8
        %s3116 = scalar_lea.vmem %s3, %s3115
      $region52: #{tpu_custom_call.1} parent=47 // pred_fallthru
        _
    $region48: #{tpu_custom_call.1} parent=5 // pred_fallthru
      _
  $region6: #{tpu_custom_call.1} parent=0 // loop_footer
    %s13 = sadd.s32 1, %s9
  $region7: #{tpu_custom_call.1} parent=0 // loop_footer_branch
    %8 = sbr.rel target = $region3
  $region8: #{tpu_custom_call.1} parent=0 // loop_exit
    _

</llo_original>
